<compile_context>
chip_gen: v7x
topology: tpu7x:2x2x1
jax: 0.10.0
libtpu: 0.0.40
codegen_flags: <defaults>
</compile_context>

<pallas_src>
import math
from collections import namedtuple
from functools import partial

import numpy as np
import jax
import jax.numpy as jnp
from jax.experimental import pallas as pl
from jax.experimental.pallas import tpu as pltpu

NEG_SLOPE = 0.01  # torch.nn.LeakyReLU default negative_slope

LayerCfg = namedtuple(
    "LayerCfg", "H W Cin Cout KH KW sh sw ph pw Hp Wp Hout Wout WoutC")


# ----------------------------------------------------------------------------
# Fused Pallas kernel: 4x (conv + bias + LeakyReLU) + positional-encoding add
# ----------------------------------------------------------------------------
def _fused_feature_embed_kernel(*refs, layers, b_offs):
    """refs = (x, wl_0..wl_{L-1}, bias_packed, pe, out)

      x    : [Nb, Hp0, W0*Cin0p]              lane-folded, H-prepadded input
      wl_i : [KH_i*W_i*Cin_i, Wout_i*Cout_i]  lowered conv weight (full block)
      bias : [1, sum_i round128(WoutC_i)]     all lane-folded biases packed
      pe   : [Nb, Hout_L, WoutC_L]            per-element positional encoding
      out  : [Nb, Hout_L, WoutC_L]            lane-dense output block
    """
    nl = len(layers)
    x_ref = refs[0]
    w_refs = refs[1:1 + nl]
    b_ref = refs[1 + nl]
    pe_ref = refs[2 + nl]
    o_ref = refs[3 + nl]
    Nb = x_ref.shape[0]

    a = x_ref[...].astype(jnp.float32)                       # [Nb, Hp0, W0*Cin0p]
    for li in range(nl):
        L = layers[li]
        WCin = L.W * L.Cin
        # H zero padding (layer 0 was already pre-padded in the wrapper).
        if L.ph > 0 and li > 0:
            z = jnp.zeros((Nb, L.ph, WCin), jnp.float32)
            a = jnp.concatenate([z, a, z], axis=1)            # [Nb, Hp, W*Cin]

        # KH accumulating MXU matmuls, batched over all Nb elements (M=Nb*Hout).
        acc = jnp.zeros((Nb * L.Hout, L.WoutC), jnp.float32)
        for ky in range(L.KH):
            if L.sh == 1:
                tap = a[:, ky:ky + L.Hout, :]
            else:
                # TODO(synk): stride>1 sublane-strided slicing is not exercised
                # by the demo config; validate on HW before relying on it.
                tap = a[:, ky:ky + (L.Hout - 1) * L.sh + 1:L.sh, :]
            tap2d = tap.reshape(Nb * L.Hout, WCin)
            wk = w_refs[li][pl.ds(ky * WCin, WCin), :]        # [W*Cin, WoutC]
            if wk.dtype != jnp.float32:
                tap2d = tap2d.astype(wk.dtype)
            acc = acc + jnp.dot(tap2d, wk, preferred_element_type=jnp.float32)

        acc = acc + b_ref[:, pl.ds(b_offs[li], L.WoutC)]      # bias
        acc = jnp.where(acc > 0, acc, NEG_SLOPE * acc)        # LeakyReLU
        a = acc.reshape(Nb, L.Hout, L.WoutC)

    a = a + pe_ref[...]                                       # timestep PE add
    o_ref[...] = a.astype(o_ref.dtype)


def _num_tensorcores_per_chip():
    """Best-effort detection of dual-TensorCore / megacore chips."""
    try:
        kind = jax.devices()[0].device_kind.lower()
    except Exception:
        return 1
    if any(tag in kind for tag in ("v4", "v5p", "v7", "7x")):
        return 2
    return 1


# ----------------------------------------------------------------------------
# Module wrapper (parameter setup, weight lowering, layout glue)
# ----------------------------------------------------------------------------
class FeatureEmbeddingPallas:
    def __init__(self, more_inputs, seq_len, channels_list, kernels_list,
                 stride_list, paddings_list, key, weight_dtype=jnp.float32):
        self.more_inputs = more_inputs
        self.seq_len = seq_len
        self.channels = list(channels_list)
        self.kernels = list(kernels_list)
        self.strides = list(stride_list)
        self.paddings = list(paddings_list)
        # f32 by default; jnp.bfloat16 halves the dominant weight DMA but must
        # be re-validated against the accuracy tolerance across 4 layers.
        self.weight_dtype = weight_dtype

        self.params = []  # (w_hwio [KH,KW,Cin,Cout], b [Cout]) per layer
        in_c0 = 5 if more_inputs else 1
        for i in range(4):
            cin = in_c0 if i == 0 else self.channels[i - 1]
            cout = self.channels[i]
            k = self.kernels[i]
            key, wk, bk = jax.random.split(key, 3)
            fan_in = cin * k * k
            bound = 1.0 / math.sqrt(fan_in)      # deterministic synthetic init
            w = jax.random.uniform(wk, (k, k, cin, cout), jnp.float32,
                                   minval=-bound, maxval=bound)
            b = jax.random.uniform(bk, (cout,), jnp.float32,
                                   minval=-bound, maxval=bound)
            self.params.append((w, b))

    # positional-encoding table: row t = per-channel constant added at step t
    def _pe_table_np(self):
        d_model = self.channels[3]
        tbl = np.zeros((self.seq_len, d_model), np.float32)
        for t in range(self.seq_len):
            for d in range(d_model):
                if d % 2 == 0:
                    tbl[t, d] = math.sin(t / 10000 ** (d / d_model))
                else:
                    tbl[t, d] = math.cos(t / 10000 ** ((d - 1) / d_model))
        return tbl

    @staticmethod
    def _choose_cin_pad(W, cin):
        """Smallest channel count >= cin that makes W*cin a multiple of 128."""
        if (W * cin) % 128 == 0:
            return cin
        for c in range(cin + 1, cin + 129):
            if (W * c) % 128 == 0:
                return c
        return cin

    def _layer_cfgs(self, H, W, cin0):
        cfgs = []
        h, w, cin = H, W, cin0
        for i, (wgt, _) in enumerate(self.params):
            KH, KW, _, cout = wgt.shape
            sh = sw = int(self.strides[i])
            ph = pw = int(self.paddings[i])
            hp, wp = h + 2 * ph, w + 2 * pw
            hout = (hp - KH) // sh + 1
            wout = (wp - KW) // sw + 1
            cfgs.append(LayerCfg(H=h, W=w, Cin=cin, Cout=cout, KH=KH, KW=KW,
                                 sh=sh, sw=sw, ph=ph, pw=pw, Hp=hp, Wp=wp,
                                 Hout=hout, Wout=wout, WoutC=wout * cout))
            h, w, cin = hout, wout, cout
        return cfgs

    def _lowered_params(self, cfgs):
        """Per layer: WL [KH*W*Cin, Wout*Cout] folding KW taps + W-padding into
        the contraction dim (zero rows for channel lane padding), plus one
        packed bias row [1, sum_i round128(WoutC_i)] with 128-aligned offsets.
        """
        lowered, b_offs, bias_segs = [], [], []
        off = 0
        for L, (wgt, bias) in zip(cfgs, self.params):
            wgt_np = np.asarray(wgt, np.float32)
            if L.Cin > wgt_np.shape[2]:            # layer-0 channel lane padding
                wgt_np = np.pad(
                    wgt_np, ((0, 0), (0, 0), (0, L.Cin - wgt_np.shape[2]), (0, 0)))
            wi = np.arange(L.W)[:, None, None]
            wo = np.arange(L.Wout)[None, :, None]
            kx = np.arange(L.KW)[None, None, :]
            sel = (wi + L.pw == wo * L.sw + kx).astype(np.float32)  # [W,Wout,KW]
            WL = np.einsum("xok,hkcd->hxcod", sel, wgt_np)
            WL = WL.reshape(L.KH * L.W * L.Cin, L.Wout * L.Cout)
            lowered.append(jnp.asarray(WL, dtype=self.weight_dtype))

            b_offs.append(off)
            seg_w = -(-L.WoutC // 128) * 128       # 128-aligned packed segment
            seg = np.zeros(seg_w, np.float32)
            seg[:L.WoutC] = np.tile(np.asarray(bias, np.float32), L.Wout)
            bias_segs.append(seg)
            off += seg_w
        bias_packed = jnp.asarray(np.concatenate(bias_segs)[None, :])
        return lowered, b_offs, bias_packed

    def __call__(self, x):
        # x: [B, T, Cin, H, W]  (PyTorch NCHW per timestep)
        B, T, Cin0, H, W = x.shape
        assert T == self.seq_len
        N = B * T

        cin0_pad = self._choose_cin_pad(W, Cin0)
        cfgs = self._layer_cfgs(H, W, cin0_pad)
        L0, L3 = cfgs[0], cfgs[-1]
        lowered, b_offs, bias_packed = self._lowered_params(cfgs)

        # generation-aware batch tile: grid=1 on single-TC chips (v5e/v6e),
        # 2 "parallel" grid steps on dual-TC chips (v4/v5p/v7x).
        if _num_tensorcores_per_chip() >= 2 and N >= 2 and N % 2 == 0:
            Nb = N // 2
        else:
            Nb = N
        max_nb = 32                                  # VMEM guard for big batches
        if Nb > max_nb:
            Nb = max(d for d in range(1, max_nb + 1) if N % d == 0)
        grid = (N // Nb,)

        # lane-folded, channel-padded, H-prepadded input: [N, Hp0, W*Cin0p]
        x_nhwc = jnp.transpose(x.reshape(N, Cin0, H, W), (0, 2, 3, 1))
        if cin0_pad > Cin0:
            x_nhwc = jnp.pad(x_nhwc,
                             ((0, 0), (0, 0), (0, 0), (0, cin0_pad - Cin0)))
        x_f = x_nhwc.reshape(N, H, W * cin0_pad)
        if L0.ph > 0:
            x_f = jnp.pad(x_f, ((0, 0), (L0.ph, L0.ph), (0, 0)))

        # per-element PE (element n -> timestep n % T), pre-broadcast over H, W
        pe_np = np.tile(self._pe_table_np(), (B, 1))                 # [N, Cout]
        pe_np = np.broadcast_to(pe_np[:, None, None, :],
                                (N, L3.Hout, L3.Wout, L3.Cout))
        pe = jnp.asarray(np.ascontiguousarray(pe_np)
                         .reshape(N, L3.Hout, L3.WoutC))

        in_specs = [pl.BlockSpec((Nb, L0.Hp, L0.W * L0.Cin),
                                 lambda i: (i, 0, 0))]
        args = [x_f]
        for WL in lowered:                        # constant index_map: DMA'd once
            in_specs.append(pl.BlockSpec(WL.shape, lambda i: (0, 0)))
            args.append(WL)
        in_specs.append(pl.BlockSpec(bias_packed.shape, lambda i: (0, 0)))
        args.append(bias_packed)
        in_specs.append(pl.BlockSpec((Nb, L3.Hout, L3.WoutC),
                                     lambda i: (i, 0, 0)))
        args.append(pe)

        kernel = partial(_fused_feature_embed_kernel,
                         layers=tuple(cfgs), b_offs=tuple(b_offs))
        out = pl.pallas_call(
            kernel,
            out_shape=jax.ShapeDtypeStruct((N, L3.Hout, L3.WoutC), x.dtype),
            grid_spec=pltpu.PrefetchScalarGridSpec(
                num_scalar_prefetch=0,
                grid=grid,
                in_specs=in_specs,
                out_specs=pl.BlockSpec((Nb, L3.Hout, L3.WoutC),
                                       lambda i: (i, 0, 0)),
            ),
            compiler_params=pltpu.CompilerParams(
                dimension_semantics=("parallel",)),
        )(*args)

        # unfold lanes and restore the PyTorch layout: [B, T, Cout, Hout, Wout]
        out = out.reshape(B, T, L3.Hout, L3.Wout, L3.Cout).transpose(0, 1, 4, 2, 3)
        return out


# ----------------------------------------------------------------------------
# Pure-JAX reference (mirrors the PyTorch forward) for correctness checking
# ----------------------------------------------------------------------------
def ref_forward(module, x):
    B, T, Cin, H, W = x.shape
    outs = []
    for t in range(T):
        cur = x[:, t]
        for i, (w, b) in enumerate(module.params):
            w_oihw = jnp.transpose(w, (3, 2, 0, 1))
            s = module.strides[i]
            p = module.paddings[i]
            cur = jax.lax.conv_general_dilated(
                cur, w_oihw, (s, s), ((p, p), (p, p)),
                dimension_numbers=("NCHW", "OIHW", "NCHW"))
            cur = cur + b[None, :, None, None]
            cur = jnp.where(cur > 0, cur, NEG_SLOPE * cur)
        d_model = cur.shape[1]
        pe_row = jnp.array(
            [math.sin(t / 10000 ** (d / d_model)) if d % 2 == 0
             else math.cos(t / 10000 ** ((d - 1) / d_model))
             for d in range(d_model)], jnp.float32)
        cur = cur + pe_row[None, :, None, None]
        outs.append(cur)
    return jnp.stack(outs, axis=1)


if __name__ == "__main__":
    key = jax.random.PRNGKey(0)
    k_params, k_x = jax.random.split(key)

    more_inputs = True
    seq_len = 4
    channels = [8, 16, 16, 8]
    kernels = [3, 3, 3, 3]
    strides = [1, 1, 1, 1]
    paddings = [1, 1, 1, 1]

    module = FeatureEmbeddingPallas(more_inputs, seq_len, channels, kernels,
                                    strides, paddings, k_params)

    B, Cin, H, W = 2, 5, 16, 16
    x = jax.random.normal(k_x, (B, seq_len, Cin, H, W), jnp.float32)

    out = jax.block_until_ready(module(x))

    assert out.shape == (B, seq_len, channels[3], H, W), out.shape
    ref = ref_forward(module, x)
    max_err = float(jnp.max(jnp.abs(out - ref)))
    assert max_err < 1e-3, f"max abs error {max_err}"

    print("KERNEL_OK")
</pallas_src>

<mosaic_0001>
module attributes {stable_mosaic.version = 11 : i64} {
  func.func @_fused_feature_embed_kernel(%arg0: i32, %arg1: memref<8x18x128xf32, #tpu.memory_space<vmem>>, %arg2: memref<384x128xf32, #tpu.memory_space<vmem>>, %arg3: memref<384x256xf32, #tpu.memory_space<vmem>>, %arg4: memref<768x256xf32, #tpu.memory_space<vmem>>, %arg5: memref<768x128xf32, #tpu.memory_space<vmem>>, %arg6: memref<1x768xf32, #tpu.memory_space<vmem>>, %arg7: memref<8x16x128xf32, #tpu.memory_space<vmem>>, %arg8: memref<8x16x128xf32, #tpu.memory_space<vmem>>) attributes {dimension_semantics = [#tpu.dimension_semantics<parallel>], iteration_bounds = array<i64: 1>, scalar_prefetch = 0 : i64, scratch_operands = 0 : i64, tpu.core_type = #tpu.core_type<tc>, window_params = [{transform_indices = @transform_0, window_bounds = array<i64: 8, 18, 128>}, {pipeline_mode = #tpu.pipeline_mode<synchronous>, transform_indices = @transform_1, window_bounds = array<i64: 384, 128>}, {pipeline_mode = #tpu.pipeline_mode<synchronous>, transform_indices = @transform_2, window_bounds = array<i64: 384, 256>}, {pipeline_mode = #tpu.pipeline_mode<synchronous>, transform_indices = @transform_3, window_bounds = array<i64: 768, 256>}, {pipeline_mode = #tpu.pipeline_mode<synchronous>, transform_indices = @transform_4, window_bounds = array<i64: 768, 128>}, {pipeline_mode = #tpu.pipeline_mode<synchronous>, transform_indices = @transform_5, window_bounds = array<i64: 1, 768>}, {transform_indices = @transform_6, window_bounds = array<i64: 8, 16, 128>}, {transform_indices = @transform_7, window_bounds = array<i64: 8, 16, 128>}]} {
    %c0 = arith.constant 0 : index
    %c0_0 = arith.constant 0 : index
    %c0_1 = arith.constant 0 : index
    %0 = vector.load %arg1[%c0, %c0_0, %c0_1] : memref<8x18x128xf32, #tpu.memory_space<vmem>>, vector<8x18x128xf32>
    %cst = arith.constant 0.000000e+00 : f32
    %1 = vector.broadcast %cst : f32 to vector<128x128xf32>
    %2 = vector.extract_strided_slice %0 {offsets = [0, 0, 0], sizes = [8, 16, 128], strides = [1, 1, 1]} : vector<8x18x128xf32> to vector<8x16x128xf32>
    %3 = vector.shape_cast %2 : vector<8x16x128xf32> to vector<128x128xf32>
    %c0_2 = arith.constant 0 : index
    %c0_3 = arith.constant 0 : index
    %4 = vector.load %arg2[%c0_2, %c0_3] : memref<384x128xf32, #tpu.memory_space<vmem>>, vector<128x128xf32>
    %cst_4 = arith.constant dense<0.000000e+00> : vector<128x128xf32>
    %5 = tpu.matmul %3, %4, %cst_4 {dimension_numbers = #tpu.dot_dimension_numbers<[1], [0], [0], [1], [0, 0, 1, 1], [], []>} : vector<128x128xf32>, vector<128x128xf32>, vector<128x128xf32> -> vector<128x128xf32>
    %6 = arith.addf %1, %5 : vector<128x128xf32>
    %7 = vector.extract_strided_slice %0 {offsets = [0, 1, 0], sizes = [8, 16, 128], strides = [1, 1, 1]} : vector<8x18x128xf32> to vector<8x16x128xf32>
    %8 = vector.shape_cast %7 : vector<8x16x128xf32> to vector<128x128xf32>
    %c128 = arith.constant 128 : index
    %c0_5 = arith.constant 0 : index
    %9 = vector.load %arg2[%c128, %c0_5] : memref<384x128xf32, #tpu.memory_space<vmem>>, vector<128x128xf32>
    %cst_6 = arith.constant dense<0.000000e+00> : vector<128x128xf32>
    %10 = tpu.matmul %8, %9, %cst_6 {dimension_numbers = #tpu.dot_dimension_numbers<[1], [0], [0], [1], [0, 0, 1, 1], [], []>} : vector<128x128xf32>, vector<128x128xf32>, vector<128x128xf32> -> vector<128x128xf32>
    %11 = arith.addf %6, %10 : vector<128x128xf32>
    %12 = vector.extract_strided_slice %0 {offsets = [0, 2, 0], sizes = [8, 16, 128], strides = [1, 1, 1]} : vector<8x18x128xf32> to vector<8x16x128xf32>
    %13 = vector.shape_cast %12 : vector<8x16x128xf32> to vector<128x128xf32>
    %c256 = arith.constant 256 : index
    %c0_7 = arith.constant 0 : index
    %14 = vector.load %arg2[%c256, %c0_7] : memref<384x128xf32, #tpu.memory_space<vmem>>, vector<128x128xf32>
    %cst_8 = arith.constant dense<0.000000e+00> : vector<128x128xf32>
    %15 = tpu.matmul %13, %14, %cst_8 {dimension_numbers = #tpu.dot_dimension_numbers<[1], [0], [0], [1], [0, 0, 1, 1], [], []>} : vector<128x128xf32>, vector<128x128xf32>, vector<128x128xf32> -> vector<128x128xf32>
    %16 = arith.addf %11, %15 : vector<128x128xf32>
    %c0_9 = arith.constant 0 : index
    %c0_10 = arith.constant 0 : index
    %17 = vector.load %arg6[%c0_9, %c0_10] : memref<1x768xf32, #tpu.memory_space<vmem>>, vector<1x128xf32>
    %18 = vector.broadcast %17 : vector<1x128xf32> to vector<128x128xf32>
    %19 = arith.addf %16, %18 : vector<128x128xf32>
    %cst_11 = arith.constant 0.000000e+00 : f32
    %20 = vector.broadcast %cst_11 : f32 to vector<128x128xf32>
    %21 = arith.cmpf ogt, %19, %20 : vector<128x128xf32>
    %cst_12 = arith.constant 0.00999999977 : f32
    %22 = vector.broadcast %cst_12 : f32 to vector<128x128xf32>
    %23 = arith.mulf %22, %19 : vector<128x128xf32>
    %24 = arith.select %21, %19, %23 : vector<128x128xi1>, vector<128x128xf32>
    %25 = vector.shape_cast %24 : vector<128x128xf32> to vector<8x16x128xf32>
    %cst_13 = arith.constant 0.000000e+00 : f32
    %26 = vector.broadcast %cst_13 : f32 to vector<8x1x128xf32>
    %27 = tpu.concatenate %26, %25, %26 in 1 : vector<8x1x128xf32>, vector<8x16x128xf32>, vector<8x1x128xf32> -> vector<8x18x128xf32>
    %cst_14 = arith.constant 0.000000e+00 : f32
    %28 = vector.broadcast %cst_14 : f32 to vector<128x256xf32>
    %29 = vector.extract_strided_slice %27 {offsets = [0, 0, 0], sizes = [8, 16, 128], strides = [1, 1, 1]} : vector<8x18x128xf32> to vector<8x16x128xf32>
    %30 = vector.shape_cast %29 : vector<8x16x128xf32> to vector<128x128xf32>
    %c0_15 = arith.constant 0 : index
    %c0_16 = arith.constant 0 : index
    %31 = vector.load %arg3[%c0_15, %c0_16] : memref<384x256xf32, #tpu.memory_space<vmem>>, vector<128x256xf32>
    %cst_17 = arith.constant dense<0.000000e+00> : vector<128x256xf32>
    %32 = tpu.matmul %30, %31, %cst_17 {dimension_numbers = #tpu.dot_dimension_numbers<[1], [0], [0], [1], [0, 0, 1, 1], [], []>} : vector<128x128xf32>, vector<128x256xf32>, vector<128x256xf32> -> vector<128x256xf32>
    %33 = arith.addf %28, %32 : vector<128x256xf32>
    %34 = vector.extract_strided_slice %27 {offsets = [0, 1, 0], sizes = [8, 16, 128], strides = [1, 1, 1]} : vector<8x18x128xf32> to vector<8x16x128xf32>
    %35 = vector.shape_cast %34 : vector<8x16x128xf32> to vector<128x128xf32>
    %c128_18 = arith.constant 128 : index
    %c0_19 = arith.constant 0 : index
    %36 = vector.load %arg3[%c128_18, %c0_19] : memref<384x256xf32, #tpu.memory_space<vmem>>, vector<128x256xf32>
    %cst_20 = arith.constant dense<0.000000e+00> : vector<128x256xf32>
    %37 = tpu.matmul %35, %36, %cst_20 {dimension_numbers = #tpu.dot_dimension_numbers<[1], [0], [0], [1], [0, 0, 1, 1], [], []>} : vector<128x128xf32>, vector<128x256xf32>, vector<128x256xf32> -> vector<128x256xf32>
    %38 = arith.addf %33, %37 : vector<128x256xf32>
    %39 = vector.extract_strided_slice %27 {offsets = [0, 2, 0], sizes = [8, 16, 128], strides = [1, 1, 1]} : vector<8x18x128xf32> to vector<8x16x128xf32>
    %40 = vector.shape_cast %39 : vector<8x16x128xf32> to vector<128x128xf32>
    %c256_21 = arith.constant 256 : index
    %c0_22 = arith.constant 0 : index
    %41 = vector.load %arg3[%c256_21, %c0_22] : memref<384x256xf32, #tpu.memory_space<vmem>>, vector<128x256xf32>
    %cst_23 = arith.constant dense<0.000000e+00> : vector<128x256xf32>
    %42 = tpu.matmul %40, %41, %cst_23 {dimension_numbers = #tpu.dot_dimension_numbers<[1], [0], [0], [1], [0, 0, 1, 1], [], []>} : vector<128x128xf32>, vector<128x256xf32>, vector<128x256xf32> -> vector<128x256xf32>
    %43 = arith.addf %38, %42 : vector<128x256xf32>
    %c0_24 = arith.constant 0 : index
    %c128_25 = arith.constant 128 : index
    %44 = vector.load %arg6[%c0_24, %c128_25] : memref<1x768xf32, #tpu.memory_space<vmem>>, vector<1x256xf32>
    %45 = vector.broadcast %44 : vector<1x256xf32> to vector<128x256xf32>
    %46 = arith.addf %43, %45 : vector<128x256xf32>
    %cst_26 = arith.constant 0.000000e+00 : f32
    %47 = vector.broadcast %cst_26 : f32 to vector<128x256xf32>
    %48 = arith.cmpf ogt, %46, %47 : vector<128x256xf32>
    %cst_27 = arith.constant 0.00999999977 : f32
    %49 = vector.broadcast %cst_27 : f32 to vector<128x256xf32>
    %50 = arith.mulf %49, %46 : vector<128x256xf32>
    %51 = arith.select %48, %46, %50 : vector<128x256xi1>, vector<128x256xf32>
    %52 = vector.shape_cast %51 : vector<128x256xf32> to vector<8x16x256xf32>
    %cst_28 = arith.constant 0.000000e+00 : f32
    %53 = vector.broadcast %cst_28 : f32 to vector<8x1x256xf32>
    %54 = tpu.concatenate %53, %52, %53 in 1 : vector<8x1x256xf32>, vector<8x16x256xf32>, vector<8x1x256xf32> -> vector<8x18x256xf32>
    %cst_29 = arith.constant 0.000000e+00 : f32
    %55 = vector.broadcast %cst_29 : f32 to vector<128x256xf32>
    %56 = vector.extract_strided_slice %54 {offsets = [0, 0, 0], sizes = [8, 16, 256], strides = [1, 1, 1]} : vector<8x18x256xf32> to vector<8x16x256xf32>
    %57 = vector.shape_cast %56 : vector<8x16x256xf32> to vector<128x256xf32>
    %c0_30 = arith.constant 0 : index
    %c0_31 = arith.constant 0 : index
    %58 = vector.load %arg4[%c0_30, %c0_31] : memref<768x256xf32, #tpu.memory_space<vmem>>, vector<256x256xf32>
    %cst_32 = arith.constant dense<0.000000e+00> : vector<128x256xf32>
    %59 = tpu.matmul %57, %58, %cst_32 {dimension_numbers = #tpu.dot_dimension_numbers<[1], [0], [0], [1], [0, 0, 1, 1], [], []>} : vector<128x256xf32>, vector<256x256xf32>, vector<128x256xf32> -> vector<128x256xf32>
    %60 = arith.addf %55, %59 : vector<128x256xf32>
    %61 = vector.extract_strided_slice %54 {offsets = [0, 1, 0], sizes = [8, 16, 256], strides = [1, 1, 1]} : vector<8x18x256xf32> to vector<8x16x256xf32>
    %62 = vector.shape_cast %61 : vector<8x16x256xf32> to vector<128x256xf32>
    %c256_33 = arith.constant 256 : index
    %c0_34 = arith.constant 0 : index
    %63 = vector.load %arg4[%c256_33, %c0_34] : memref<768x256xf32, #tpu.memory_space<vmem>>, vector<256x256xf32>
    %cst_35 = arith.constant dense<0.000000e+00> : vector<128x256xf32>
    %64 = tpu.matmul %62, %63, %cst_35 {dimension_numbers = #tpu.dot_dimension_numbers<[1], [0], [0], [1], [0, 0, 1, 1], [], []>} : vector<128x256xf32>, vector<256x256xf32>, vector<128x256xf32> -> vector<128x256xf32>
    %65 = arith.addf %60, %64 : vector<128x256xf32>
    %66 = vector.extract_strided_slice %54 {offsets = [0, 2, 0], sizes = [8, 16, 256], strides = [1, 1, 1]} : vector<8x18x256xf32> to vector<8x16x256xf32>
    %67 = vector.shape_cast %66 : vector<8x16x256xf32> to vector<128x256xf32>
    %c512 = arith.constant 512 : index
    %c0_36 = arith.constant 0 : index
    %68 = vector.load %arg4[%c512, %c0_36] : memref<768x256xf32, #tpu.memory_space<vmem>>, vector<256x256xf32>
    %cst_37 = arith.constant dense<0.000000e+00> : vector<128x256xf32>
    %69 = tpu.matmul %67, %68, %cst_37 {dimension_numbers = #tpu.dot_dimension_numbers<[1], [0], [0], [1], [0, 0, 1, 1], [], []>} : vector<128x256xf32>, vector<256x256xf32>, vector<128x256xf32> -> vector<128x256xf32>
    %70 = arith.addf %65, %69 : vector<128x256xf32>
    %c0_38 = arith.constant 0 : index
    %c384 = arith.constant 384 : index
    %71 = vector.load %arg6[%c0_38, %c384] : memref<1x768xf32, #tpu.memory_space<vmem>>, vector<1x256xf32>
    %72 = vector.broadcast %71 : vector<1x256xf32> to vector<128x256xf32>
    %73 = arith.addf %70, %72 : vector<128x256xf32>
    %cst_39 = arith.constant 0.000000e+00 : f32
    %74 = vector.broadcast %cst_39 : f32 to vector<128x256xf32>
    %75 = arith.cmpf ogt, %73, %74 : vector<128x256xf32>
    %cst_40 = arith.constant 0.00999999977 : f32
    %76 = vector.broadcast %cst_40 : f32 to vector<128x256xf32>
    %77 = arith.mulf %76, %73 : vector<128x256xf32>
    %78 = arith.select %75, %73, %77 : vector<128x256xi1>, vector<128x256xf32>
    %79 = vector.shape_cast %78 : vector<128x256xf32> to vector<8x16x256xf32>
    %cst_41 = arith.constant 0.000000e+00 : f32
    %80 = vector.broadcast %cst_41 : f32 to vector<8x1x256xf32>
    %81 = tpu.concatenate %80, %79, %80 in 1 : vector<8x1x256xf32>, vector<8x16x256xf32>, vector<8x1x256xf32> -> vector<8x18x256xf32>
    %cst_42 = arith.constant 0.000000e+00 : f32
    %82 = vector.broadcast %cst_42 : f32 to vector<128x128xf32>
    %83 = vector.extract_strided_slice %81 {offsets = [0, 0, 0], sizes = [8, 16, 256], strides = [1, 1, 1]} : vector<8x18x256xf32> to vector<8x16x256xf32>
    %84 = vector.shape_cast %83 : vector<8x16x256xf32> to vector<128x256xf32>
    %c0_43 = arith.constant 0 : index
    %c0_44 = arith.constant 0 : index
    %85 = vector.load %arg5[%c0_43, %c0_44] : memref<768x128xf32, #tpu.memory_space<vmem>>, vector<256x128xf32>
    %cst_45 = arith.constant dense<0.000000e+00> : vector<128x128xf32>
    %86 = tpu.matmul %84, %85, %cst_45 {dimension_numbers = #tpu.dot_dimension_numbers<[1], [0], [0], [1], [0, 0, 1, 1], [], []>} : vector<128x256xf32>, vector<256x128xf32>, vector<128x128xf32> -> vector<128x128xf32>
    %87 = arith.addf %82, %86 : vector<128x128xf32>
    %88 = vector.extract_strided_slice %81 {offsets = [0, 1, 0], sizes = [8, 16, 256], strides = [1, 1, 1]} : vector<8x18x256xf32> to vector<8x16x256xf32>
    %89 = vector.shape_cast %88 : vector<8x16x256xf32> to vector<128x256xf32>
    %c256_46 = arith.constant 256 : index
    %c0_47 = arith.constant 0 : index
    %90 = vector.load %arg5[%c256_46, %c0_47] : memref<768x128xf32, #tpu.memory_space<vmem>>, vector<256x128xf32>
    %cst_48 = arith.constant dense<0.000000e+00> : vector<128x128xf32>
    %91 = tpu.matmul %89, %90, %cst_48 {dimension_numbers = #tpu.dot_dimension_numbers<[1], [0], [0], [1], [0, 0, 1, 1], [], []>} : vector<128x256xf32>, vector<256x128xf32>, vector<128x128xf32> -> vector<128x128xf32>
    %92 = arith.addf %87, %91 : vector<128x128xf32>
    %93 = vector.extract_strided_slice %81 {offsets = [0, 2, 0], sizes = [8, 16, 256], strides = [1, 1, 1]} : vector<8x18x256xf32> to vector<8x16x256xf32>
    %94 = vector.shape_cast %93 : vector<8x16x256xf32> to vector<128x256xf32>
    %c512_49 = arith.constant 512 : index
    %c0_50 = arith.constant 0 : index
    %95 = vector.load %arg5[%c512_49, %c0_50] : memref<768x128xf32, #tpu.memory_space<vmem>>, vector<256x128xf32>
    %cst_51 = arith.constant dense<0.000000e+00> : vector<128x128xf32>
    %96 = tpu.matmul %94, %95, %cst_51 {dimension_numbers = #tpu.dot_dimension_numbers<[1], [0], [0], [1], [0, 0, 1, 1], [], []>} : vector<128x256xf32>, vector<256x128xf32>, vector<128x128xf32> -> vector<128x128xf32>
    %97 = arith.addf %92, %96 : vector<128x128xf32>
    %c0_52 = arith.constant 0 : index
    %c640 = arith.constant 640 : index
    %98 = vector.load %arg6[%c0_52, %c640] : memref<1x768xf32, #tpu.memory_space<vmem>>, vector<1x128xf32>
    %99 = vector.broadcast %98 : vector<1x128xf32> to vector<128x128xf32>
    %100 = arith.addf %97, %99 : vector<128x128xf32>
    %cst_53 = arith.constant 0.000000e+00 : f32
    %101 = vector.broadcast %cst_53 : f32 to vector<128x128xf32>
    %102 = arith.cmpf ogt, %100, %101 : vector<128x128xf32>
    %cst_54 = arith.constant 0.00999999977 : f32
    %103 = vector.broadcast %cst_54 : f32 to vector<128x128xf32>
    %104 = arith.mulf %103, %100 : vector<128x128xf32>
    %105 = arith.select %102, %100, %104 : vector<128x128xi1>, vector<128x128xf32>
    %106 = vector.shape_cast %105 : vector<128x128xf32> to vector<8x16x128xf32>
    %c0_55 = arith.constant 0 : index
    %c0_56 = arith.constant 0 : index
    %c0_57 = arith.constant 0 : index
    %107 = vector.load %arg7[%c0_55, %c0_56, %c0_57] : memref<8x16x128xf32, #tpu.memory_space<vmem>>, vector<8x16x128xf32>
    %108 = arith.addf %106, %107 : vector<8x16x128xf32>
    %c0_58 = arith.constant 0 : index
    %c0_59 = arith.constant 0 : index
    %c0_60 = arith.constant 0 : index
    %109 = vector.load %arg8[%c0_58, %c0_59, %c0_60] : memref<8x16x128xf32, #tpu.memory_space<vmem>>, vector<8x16x128xf32>
    tpu.vector_store %arg8[%c0_58, %c0_59, %c0_60], %108 {strides = array<i32>} : memref<8x16x128xf32, #tpu.memory_space<vmem>>, vector<8x16x128xf32>,
    return
  }
  func.func @transform_0(%arg0: i32) -> (i32, i32, i32) {
    %c0_i32 = arith.constant 0 : i32
    %c0_i32_0 = arith.constant 0 : i32
    %c0_i32_1 = arith.constant 0 : i32
    return %arg0, %c0_i32, %c0_i32_0 : i32, i32, i32
  }
  func.func @transform_1(%arg0: i32) -> (i32, i32) {
    %c0_i32 = arith.constant 0 : i32
    %c0_i32_0 = arith.constant 0 : i32
    %c0_i32_1 = arith.constant 0 : i32
    return %c0_i32, %c0_i32_0 : i32, i32
  }
  func.func @transform_2(%arg0: i32) -> (i32, i32) {
    %c0_i32 = arith.constant 0 : i32
    %c0_i32_0 = arith.constant 0 : i32
    %c0_i32_1 = arith.constant 0 : i32
    return %c0_i32, %c0_i32_0 : i32, i32
  }
  func.func @transform_3(%arg0: i32) -> (i32, i32) {
    %c0_i32 = arith.constant 0 : i32
    %c0_i32_0 = arith.constant 0 : i32
    %c0_i32_1 = arith.constant 0 : i32
    return %c0_i32, %c0_i32_0 : i32, i32
  }
  func.func @transform_4(%arg0: i32) -> (i32, i32) {
    %c0_i32 = arith.constant 0 : i32
    %c0_i32_0 = arith.constant 0 : i32
    %c0_i32_1 = arith.constant 0 : i32
    return %c0_i32, %c0_i32_0 : i32, i32
  }
  func.func @transform_5(%arg0: i32) -> (i32, i32) {
    %c0_i32 = arith.constant 0 : i32
    %c0_i32_0 = arith.constant 0 : i32
    %c0_i32_1 = arith.constant 0 : i32
    return %c0_i32, %c0_i32_0 : i32, i32
  }
  func.func @transform_6(%arg0: i32) -> (i32, i32, i32) {
    %c0_i32 = arith.constant 0 : i32
    %c0_i32_0 = arith.constant 0 : i32
    %c0_i32_1 = arith.constant 0 : i32
    return %arg0, %c0_i32, %c0_i32_0 : i32, i32, i32
  }
  func.func @transform_7(%arg0: i32) -> (i32, i32, i32) {
    %c0_i32 = arith.constant 0 : i32
    %c0_i32_0 = arith.constant 0 : i32
    %c0_i32_1 = arith.constant 0 : i32
    return %arg0, %c0_i32, %c0_i32_0 : i32, i32, i32
  }
}

</mosaic_0001>

<llo_original>
// kernel: tpu_custom_call.1
$region0: #{tpu_custom_call.1}
  #allocation0 [shape = 'u32[]', space=smem, size = 0x4, offset = 0x4, fixed_abs, tag = 'smem constant byte address 0x4 - core index']
  #allocation1 [shape = 'u32[144,128]{1,0:T(1,128)}', space=vmem, size = 0x12000, scoped, tag = 'internal scratch']
  %s0 = inlined_call_operand.vmem [shape: f32[8,18,128], index: 0, kind: input, shape index: {}]
  %s1 = inlined_call_operand.hbm [shape: f32[384,128], index: 1, kind: input, shape index: {}]
  %s2 = inlined_call_operand.hbm [shape: f32[384,256], index: 2, kind: input, shape index: {}]
  %s3 = inlined_call_operand.hbm [shape: f32[768,256], index: 3, kind: input, shape index: {}]
  %s4 = inlined_call_operand.hbm [shape: f32[768,128], index: 4, kind: input, shape index: {}]
  %s5 = inlined_call_operand.vmem [shape: f32[1,768], index: 5, kind: input, shape index: {}]
  %s6 = inlined_call_operand.vmem [shape: f32[8,16,128], index: 6, kind: input, shape index: {}]
  %s7 = inlined_call_operand.hbm [shape: f32[8,16,128], index: 7, kind: output, shape index: {}]
  %s8 = sld [smem:[#allocation0]]
  $region54: #{tpu_custom_call.1} parent=0
    _
  %s10 = ssub.s32 1, %s8
  %s11 = scalar_select 0, %s10, %s8
  $region1: #{tpu_custom_call.1} parent=0
    #allocation2 [shape = 'u8[196608]{0}', space=vmem, size = 0x30000, scoped, tag = 'input window, operand 1, single buffered']
    #allocation3 [shape = 's32[1]{0}', space=sflag, size = 0x4, scoped, tag = 'scoped memory for tpu_custom_call.1']
    #allocation4 [shape = 's32[1]{0}', space=sflag, size = 0x4, scoped, tag = 'scoped memory for tpu_custom_call.1']
    #allocation5 [shape = 'u8[393216]{0}', space=vmem, size = 0x60000, scoped, tag = 'input window, operand 2, single buffered']
    #allocation6 [shape = 's32[1]{0}', space=sflag, size = 0x4, scoped, tag = 'scoped memory for tpu_custom_call.1']
    #allocation7 [shape = 'u8[786432]{0}', space=vmem, size = 0xc0000, scoped, tag = 'input window, operand 3, single buffered']
    #allocation8 [shape = 'u8[393216]{0}', space=vmem, size = 0x60000, scoped, tag = 'input window, operand 4, single buffered']
    #allocation9 [shape = 's32[1]{0}', space=sflag, size = 0x4, scoped, tag = 'scoped memory for tpu_custom_call.1']
    #allocation10 [shape = 'u8[65536]{0}', space=vmem, size = 0x10000, scoped, tag = 'output window, operand 0, single buffered']
    %12 = vsyncpa [#allocation3], 0
    %13 = vsyncpa [#allocation6], 0
    %14 = vsyncpa [#allocation9], 0
    %15 = vsyncpa [#allocation4], 0
    // Predicated region
    $region2: #{tpu_custom_call.1} parent=1 // pred_check
      _
    $region3: #{tpu_custom_call.1} parent=1 // pred_check_branch
      %17 = sbr.rel (0) target = $region5
    $region4: #{tpu_custom_call.1} parent=1 // pred_region
      _
    $region5: #{tpu_custom_call.1} parent=1 // pred_fallthru
      _
    // Predicated region
    $region6: #{tpu_custom_call.1} parent=1 // pred_check
      _
    $region7: #{tpu_custom_call.1} parent=1 // pred_check_branch
      %19 = sbr.rel (0) target = $region9
    $region8: #{tpu_custom_call.1} parent=1 // pred_region
      %s21 = ssub.s32 6144, 6144
      %22 = vsyncadd [#allocation3], %s21
      %s23 = sshll.u32 [#allocation2], 4
      %s24 = int_to_ptr.vmem [resolvable:$true] %s23
      %29 = dma.hbm_to_vmem [thread:$0]  %s1, 6144, %s24, [#allocation3], 128, 128, 8
    $region9: #{tpu_custom_call.1} parent=1 // pred_fallthru
      _
    // Predicated region
    $region10: #{tpu_custom_call.1} parent=1 // pred_check
      _
    $region11: #{tpu_custom_call.1} parent=1 // pred_check_branch
      %31 = sbr.rel (0) target = $region13
    $region12: #{tpu_custom_call.1} parent=1 // pred_region
      %s33 = ssub.s32 12288, 12288
      %34 = vsyncadd [#allocation6], %s33
      %s35 = sshll.u32 [#allocation5], 4
      %s36 = int_to_ptr.vmem [resolvable:$true] %s35
      %41 = dma.hbm_to_vmem [thread:$0]  %s2, 12288, %s36, [#allocation6], 256, 256, 16
    $region13: #{tpu_custom_call.1} parent=1 // pred_fallthru
      _
    // Predicated region
    $region14: #{tpu_custom_call.1} parent=1 // pred_check
      _
    $region15: #{tpu_custom_call.1} parent=1 // pred_check_branch
      %43 = sbr.rel (0) target = $region17
    $region16: #{tpu_custom_call.1} parent=1 // pred_region
      %s45 = ssub.s32 24576, 24576
      %46 = vsyncadd [#allocation6], %s45
      %s47 = sshll.u32 [#allocation7], 4
      %s48 = int_to_ptr.vmem [resolvable:$true] %s47
      %53 = dma.hbm_to_vmem [thread:$0]  %s3, 24576, %s48, [#allocation6], 256, 256, 16
    $region17: #{tpu_custom_call.1} parent=1 // pred_fallthru
      _
    // Predicated region
    $region18: #{tpu_custom_call.1} parent=1 // pred_check
      _
    $region19: #{tpu_custom_call.1} parent=1 // pred_check_branch
      %55 = sbr.rel (0) target = $region21
    $region20: #{tpu_custom_call.1} parent=1 // pred_region
      %s57 = ssub.s32 12288, 12288
      %58 = vsyncadd [#allocation9], %s57
      %s59 = sshll.u32 [#allocation8], 4
      %s60 = int_to_ptr.vmem [resolvable:$true] %s59
      %65 = dma.hbm_to_vmem [thread:$0]  %s4, 12288, %s60, [#allocation9], 128, 128, 8
    $region21: #{tpu_custom_call.1} parent=1 // pred_fallthru
      _
    // Predicated region
    $region22: #{tpu_custom_call.1} parent=1 // pred_check
      _
    $region23: #{tpu_custom_call.1} parent=1 // pred_check_branch
      %67 = sbr.rel (0) target = $region25
    $region24: #{tpu_custom_call.1} parent=1 // pred_region
      _
    $region25: #{tpu_custom_call.1} parent=1 // pred_fallthru
      _
    // Predicated region
    $region26: #{tpu_custom_call.1} parent=1 // pred_check
      _
    $region27: #{tpu_custom_call.1} parent=1 // pred_check_branch
      %69 = sbr.rel (0) target = $region29
    $region28: #{tpu_custom_call.1} parent=1 // pred_region
      _
    $region29: #{tpu_custom_call.1} parent=1 // pred_fallthru
      _
    // Predicated region
    $region30: #{tpu_custom_call.1} parent=1 // pred_check
      _
    $region31: #{tpu_custom_call.1} parent=1 // pred_check_branch
      %71 = sbr.rel (0) target = $region33
    $region32: #{tpu_custom_call.1} parent=1 // pred_region
      %72 = dma.done [#allocation3], 6144
    $region33: #{tpu_custom_call.1} parent=1 // pred_fallthru
      _
    // Predicated region
    $region34: #{tpu_custom_call.1} parent=1 // pred_check
      _
    $region35: #{tpu_custom_call.1} parent=1 // pred_check_branch
      %74 = sbr.rel (0) target = $region37
    $region36: #{tpu_custom_call.1} parent=1 // pred_region
      %75 = dma.done [#allocation6], 12288
    $region37: #{tpu_custom_call.1} parent=1 // pred_fallthru
      _
    // Predicated region
    $region38: #{tpu_custom_call.1} parent=1 // pred_check
      _
    $region39: #{tpu_custom_call.1} parent=1 // pred_check_branch
      %77 = sbr.rel (0) target = $region41
    $region40: #{tpu_custom_call.1} parent=1 // pred_region
      %78 = dma.done [#allocation6], 24576
    $region41: #{tpu_custom_call.1} parent=1 // pred_fallthru
      _
    // Predicated region
    $region42: #{tpu_custom_call.1} parent=1 // pred_check
      _
    $region43: #{tpu_custom_call.1} parent=1 // pred_check_branch
      %80 = sbr.rel (0) target = $region45
    $region44: #{tpu_custom_call.1} parent=1 // pred_region
      %81 = dma.done [#allocation9], 12288
    $region45: #{tpu_custom_call.1} parent=1 // pred_fallthru
      _
    %v82 = vld [vmem:[%s0] sm:$0xff]
    %v83 = vld [vmem:[%s0 + $0x8] sm:$0xff]
    %v84 = vld [vmem:[%s0 + $0x10] sm:$0x3]
    %v85 = vld [vmem:[%s0 + $0x18] sm:$0xff]
    %v86 = vld [vmem:[%s0 + $0x20] sm:$0xff]
    %v87 = vld [vmem:[%s0 + $0x28] sm:$0x3]
    %v88 = vld [vmem:[%s0 + $0x30] sm:$0xff]
    %v89 = vld [vmem:[%s0 + $0x38] sm:$0xff]
    %v90 = vld [vmem:[%s0 + $0x40] sm:$0x3]
    %v91 = vld [vmem:[%s0 + $0x48] sm:$0xff]
    %v92 = vld [vmem:[%s0 + $0x50] sm:$0xff]
    %v93 = vld [vmem:[%s0 + $0x58] sm:$0x3]
    %v94 = vld [vmem:[%s0 + $0x60] sm:$0xff]
    %v95 = vld [vmem:[%s0 + $0x68] sm:$0xff]
    %v96 = vld [vmem:[%s0 + $0x70] sm:$0x3]
    %v97 = vld [vmem:[%s0 + $0x78] sm:$0xff]
    %v98 = vld [vmem:[%s0 + $0x80] sm:$0xff]
    %v99 = vld [vmem:[%s0 + $0x88] sm:$0x3]
    %v100 = vld [vmem:[%s0 + $0x90] sm:$0xff]
    %v101 = vld [vmem:[%s0 + $0x98] sm:$0xff]
    %v102 = vld [vmem:[%s0 + $0xa0] sm:$0x3]
    %v103 = vld [vmem:[%s0 + $0xa8] sm:$0xff]
    %v104 = vld [vmem:[%s0 + $0xb0] sm:$0xff]
    %v105 = vld [vmem:[%s0 + $0xb8] sm:$0x3]
    %v106 = vld [vmem:[#allocation2] sm:$0xff]
    %v107 = vld [vmem:[#allocation2 + $0x8] sm:$0xff]
    %v108 = vld [vmem:[#allocation2 + $0x10] sm:$0xff]
    %v109 = vld [vmem:[#allocation2 + $0x18] sm:$0xff]
    %v110 = vld [vmem:[#allocation2 + $0x20] sm:$0xff]
    %v111 = vld [vmem:[#allocation2 + $0x28] sm:$0xff]
    %v112 = vld [vmem:[#allocation2 + $0x30] sm:$0xff]
    %v113 = vld [vmem:[#allocation2 + $0x38] sm:$0xff]
    %v114 = vld [vmem:[#allocation2 + $0x40] sm:$0xff]
    %v115 = vld [vmem:[#allocation2 + $0x48] sm:$0xff]
    %v116 = vld [vmem:[#allocation2 + $0x50] sm:$0xff]
    %v117 = vld [vmem:[#allocation2 + $0x58] sm:$0xff]
    %v118 = vld [vmem:[#allocation2 + $0x60] sm:$0xff]
    %v119 = vld [vmem:[#allocation2 + $0x68] sm:$0xff]
    %v120 = vld [vmem:[#allocation2 + $0x70] sm:$0xff]
    %v121 = vld [vmem:[#allocation2 + $0x78] sm:$0xff]
    %vm146 = vcmask 1046528
    %v147 = vrot.slane %v82, 1
    %v148 = vrot.slane %v83, 1
    %v149 = vsel %vm146, %v147, %v148
    %v150 = vrot.slane %v84, 1
    %v151 = vsel %vm146, %v148, %v150
    %v152 = vrot.slane %v85, 1
    %v153 = vrot.slane %v86, 1
    %v154 = vsel %vm146, %v152, %v153
    %v155 = vrot.slane %v87, 1
    %v156 = vsel %vm146, %v153, %v155
    %v157 = vrot.slane %v88, 1
    %v158 = vrot.slane %v89, 1
    %v159 = vsel %vm146, %v157, %v158
    %v160 = vrot.slane %v90, 1
    %v161 = vsel %vm146, %v158, %v160
    %v162 = vrot.slane %v91, 1
    %v163 = vrot.slane %v92, 1
    %v164 = vsel %vm146, %v162, %v163
    %v165 = vrot.slane %v93, 1
    %v166 = vsel %vm146, %v163, %v165
    %v167 = vrot.slane %v94, 1
    %v168 = vrot.slane %v95, 1
    %v169 = vsel %vm146, %v167, %v168
    %v170 = vrot.slane %v96, 1
    %v171 = vsel %vm146, %v168, %v170
    %v172 = vrot.slane %v97, 1
    %v173 = vrot.slane %v98, 1
    %v174 = vsel %vm146, %v172, %v173
    %v175 = vrot.slane %v99, 1
    %v176 = vsel %vm146, %v173, %v175
    %v177 = vrot.slane %v100, 1
    %v178 = vrot.slane %v101, 1
    %v179 = vsel %vm146, %v177, %v178
    %v180 = vrot.slane %v102, 1
    %v181 = vsel %vm146, %v178, %v180
    %v182 = vrot.slane %v103, 1
    %v183 = vrot.slane %v104, 1
    %v184 = vsel %vm146, %v182, %v183
    %v185 = vrot.slane %v105, 1
    %v186 = vsel %vm146, %v183, %v185
    %v203 = vld [vmem:[#allocation2 + $0x80] sm:$0xff]
    %v204 = vld [vmem:[#allocation2 + $0x88] sm:$0xff]
    %v205 = vld [vmem:[#allocation2 + $0x90] sm:$0xff]
    %v206 = vld [vmem:[#allocation2 + $0x98] sm:$0xff]
    %v207 = vld [vmem:[#allocation2 + $0xa0] sm:$0xff]
    %v208 = vld [vmem:[#allocation2 + $0xa8] sm:$0xff]
    %v209 = vld [vmem:[#allocation2 + $0xb0] sm:$0xff]
    %v210 = vld [vmem:[#allocation2 + $0xb8] sm:$0xff]
    %v211 = vld [vmem:[#allocation2 + $0xc0] sm:$0xff]
    %v212 = vld [vmem:[#allocation2 + $0xc8] sm:$0xff]
    %v213 = vld [vmem:[#allocation2 + $0xd0] sm:$0xff]
    %v214 = vld [vmem:[#allocation2 + $0xd8] sm:$0xff]
    %v215 = vld [vmem:[#allocation2 + $0xe0] sm:$0xff]
    %v216 = vld [vmem:[#allocation2 + $0xe8] sm:$0xff]
    %v217 = vld [vmem:[#allocation2 + $0xf0] sm:$0xff]
    %v218 = vld [vmem:[#allocation2 + $0xf8] sm:$0xff]
    %219 = vmatprep.subr.mxu0 0.0
    %220 = vmatpush1.msra.mxu0 %v203
    %221 = vmatprep.subr.mxu0 0.0
    %222 = vmatpush1.msra.mxu0 %v204
    %223 = vmatprep.subr.mxu0 0.0
    %224 = vmatpush1.msra.mxu0 %v205
    %225 = vmatprep.subr.mxu0 0.0
    %226 = vmatpush1.msra.mxu0 %v206
    %227 = vmatprep.subr.mxu0 0.0
    %228 = vmatpush1.msra.mxu0 %v207
    %229 = vmatprep.subr.mxu0 0.0
    %230 = vmatpush1.msra.mxu0 %v208
    %231 = vmatprep.subr.mxu0 0.0
    %232 = vmatpush1.msra.mxu0 %v209
    %233 = vmatprep.subr.mxu0 0.0
    %234 = vmatpush1.msra.mxu0 %v210
    %235 = vmatprep.subr.mxu0 0.0
    %236 = vmatpush1.msra.mxu0 %v211
    %237 = vmatprep.subr.mxu0 0.0
    %238 = vmatpush1.msra.mxu0 %v212
    %239 = vmatprep.subr.mxu0 0.0
    %240 = vmatpush1.msra.mxu0 %v213
    %241 = vmatprep.subr.mxu0 0.0
    %242 = vmatpush1.msra.mxu0 %v214
    %243 = vmatprep.subr.mxu0 0.0
    %244 = vmatpush1.msra.mxu0 %v215
    %245 = vmatprep.subr.mxu0 0.0
    %246 = vmatpush1.msra.mxu0 %v216
    %247 = vmatprep.subr.mxu0 0.0
    %248 = vmatpush1.msra.mxu0 %v217
    %249 = vmatprep.subr.mxu0 0.0
    %250 = vmatpush1.msra.mxu0 %v218
    %251 = vmatprep.subr.mxu0 0.0
    %252 = vmatpush1.msra.mxu0 0.0
    %253 = vmatprep.subr.mxu0 0.0
    %254 = vmatpush1.msra.mxu0 0.0
    %255 = vmatprep.subr.mxu0 0.0
    %256 = vmatpush1.msra.mxu0 0.0
    %257 = vmatprep.subr.mxu0 0.0
    %258 = vmatpush1.msra.mxu0 0.0
    %259 = vmatprep.subr.mxu0 0.0
    %260 = vmatpush1.msra.mxu0 0.0
    %261 = vmatprep.subr.mxu0 0.0
    %262 = vmatpush1.msra.mxu0 0.0
    %263 = vmatprep.subr.mxu0 0.0
    %264 = vmatpush1.msra.mxu0 0.0
    %265 = vmatprep.subr.mxu0 0.0
    %266 = vmatpush1.msra.mxu0 0.0
    %267 = vmatprep.subr.mxu0 0.0
    %268 = vmatpush1.msra.mxu0 0.0
    %269 = vmatprep.subr.mxu0 0.0
    %270 = vmatpush1.msra.mxu0 0.0
    %271 = vmatprep.subr.mxu0 0.0
    %272 = vmatpush1.msra.mxu0 0.0
    %273 = vmatprep.subr.mxu0 0.0
    %274 = vmatpush1.msra.mxu0 0.0
    %275 = vmatprep.subr.mxu0 0.0
    %276 = vmatpush1.msra.mxu0 0.0
    %277 = vmatprep.subr.mxu0 0.0
    %278 = vmatpush1.msra.mxu0 0.0
    %279 = vmatprep.subr.mxu0 0.0
    %280 = vmatpush1.msra.mxu0 0.0
    %281 = vmatprep.subr.mxu0 0.0
    %282 = vmatpush1.msra.mxu0 0.0
    %283 = vmatprep.mubr.f32.mxu0 0.0
    %284 = vmatmul.mubr.f32.gmra.mrb[0].mxu0 %v149
    %v285 = vpop.f32.mrb[0].mxu0
    %v286 = vadd.f32 0.0, %v285
    %v287 = vpop.f32.mrb[0].mxu0
    %288 = vmatprep.mubr.f32.mxu0 0.0
    %289 = vmatmul.mubr.f32.gmra.mrb[0].mxu0 %v151
    %v290 = vpop.f32.mrb[0].mxu0
    %v291 = vadd.f32 0.0, %v290
    %v292 = vpop.f32.mrb[0].mxu0
    %293 = vmatprep.mubr.f32.mxu0 0.0
    %294 = vmatmul.mubr.f32.gmra.mrb[0].mxu0 %v154
    %v295 = vpop.f32.mrb[0].mxu0
    %v296 = vadd.f32 0.0, %v295
    %v297 = vpop.f32.mrb[0].mxu0
    %298 = vmatprep.mubr.f32.mxu0 0.0
    %299 = vmatmul.mubr.f32.gmra.mrb[0].mxu0 %v156
    %v300 = vpop.f32.mrb[0].mxu0
    %v301 = vadd.f32 0.0, %v300
    %v302 = vpop.f32.mrb[0].mxu0
    %303 = vmatprep.mubr.f32.mxu0 0.0
    %304 = vmatmul.mubr.f32.gmra.mrb[0].mxu0 %v159
    %v305 = vpop.f32.mrb[0].mxu0
    %v306 = vadd.f32 0.0, %v305
    %v307 = vpop.f32.mrb[0].mxu0
    %308 = vmatprep.mubr.f32.mxu0 0.0
    %309 = vmatmul.mubr.f32.gmra.mrb[0].mxu0 %v161
    %v310 = vpop.f32.mrb[0].mxu0
    %v311 = vadd.f32 0.0, %v310
    %v312 = vpop.f32.mrb[0].mxu0
    %313 = vmatprep.mubr.f32.mxu0 0.0
    %314 = vmatmul.mubr.f32.gmra.mrb[0].mxu0 %v164
    %v315 = vpop.f32.mrb[0].mxu0
    %v316 = vadd.f32 0.0, %v315
    %v317 = vpop.f32.mrb[0].mxu0
    %318 = vmatprep.mubr.f32.mxu0 0.0
    %319 = vmatmul.mubr.f32.gmra.mrb[0].mxu0 %v166
    %v320 = vpop.f32.mrb[0].mxu0
    %v321 = vadd.f32 0.0, %v320
    %v322 = vpop.f32.mrb[0].mxu0
    %323 = vmatprep.mubr.f32.mxu0 0.0
    %324 = vmatmul.mubr.f32.gmra.mrb[0].mxu0 %v169
    %v325 = vpop.f32.mrb[0].mxu0
    %v326 = vadd.f32 0.0, %v325
    %v327 = vpop.f32.mrb[0].mxu0
    %328 = vmatprep.mubr.f32.mxu0 0.0
    %329 = vmatmul.mubr.f32.gmra.mrb[0].mxu0 %v171
    %v330 = vpop.f32.mrb[0].mxu0
    %v331 = vadd.f32 0.0, %v330
    %v332 = vpop.f32.mrb[0].mxu0
    %333 = vmatprep.mubr.f32.mxu0 0.0
    %334 = vmatmul.mubr.f32.gmra.mrb[0].mxu0 %v174
    %v335 = vpop.f32.mrb[0].mxu0
    %v336 = vadd.f32 0.0, %v335
    %v337 = vpop.f32.mrb[0].mxu0
    %338 = vmatprep.mubr.f32.mxu0 0.0
    %339 = vmatmul.mubr.f32.gmra.mrb[0].mxu0 %v176
    %v340 = vpop.f32.mrb[0].mxu0
    %v341 = vadd.f32 0.0, %v340
    %v342 = vpop.f32.mrb[0].mxu0
    %343 = vmatprep.mubr.f32.mxu0 0.0
    %344 = vmatmul.mubr.f32.gmra.mrb[0].mxu0 %v179
    %v345 = vpop.f32.mrb[0].mxu0
    %v346 = vadd.f32 0.0, %v345
    %v347 = vpop.f32.mrb[0].mxu0
    %348 = vmatprep.mubr.f32.mxu0 0.0
    %349 = vmatmul.mubr.f32.gmra.mrb[0].mxu0 %v181
    %v350 = vpop.f32.mrb[0].mxu0
    %v351 = vadd.f32 0.0, %v350
    %v352 = vpop.f32.mrb[0].mxu0
    %353 = vmatprep.mubr.f32.mxu0 0.0
    %354 = vmatmul.mubr.f32.gmra.mrb[0].mxu0 %v184
    %v355 = vpop.f32.mrb[0].mxu0
    %v356 = vadd.f32 0.0, %v355
    %v357 = vpop.f32.mrb[0].mxu0
    %358 = vmatprep.mubr.f32.mxu0 0.0
    %359 = vmatmul.mubr.f32.gmra.mrb[0].mxu0 %v186
    %v360 = vpop.f32.mrb[0].mxu0
    %v361 = vadd.f32 0.0, %v360
    %v362 = vpop.f32.mrb[0].mxu0
    %363 = vdwg.mxu0
    %364 = vmatprep.subr.mxu0 0.0
    %365 = vmatpush1.msra.mxu0 %v106
    %366 = vmatprep.subr.mxu0 0.0
    %367 = vmatpush1.msra.mxu0 %v107
    %368 = vmatprep.subr.mxu0 0.0
    %369 = vmatpush1.msra.mxu0 %v108
    %370 = vmatprep.subr.mxu0 0.0
    %371 = vmatpush1.msra.mxu0 %v109
    %372 = vmatprep.subr.mxu0 0.0
    %373 = vmatpush1.msra.mxu0 %v110
    %374 = vmatprep.subr.mxu0 0.0
    %375 = vmatpush1.msra.mxu0 %v111
    %376 = vmatprep.subr.mxu0 0.0
    %377 = vmatpush1.msra.mxu0 %v112
    %378 = vmatprep.subr.mxu0 0.0
    %379 = vmatpush1.msra.mxu0 %v113
    %380 = vmatprep.subr.mxu0 0.0
    %381 = vmatpush1.msra.mxu0 %v114
    %382 = vmatprep.subr.mxu0 0.0
    %383 = vmatpush1.msra.mxu0 %v115
    %384 = vmatprep.subr.mxu0 0.0
    %385 = vmatpush1.msra.mxu0 %v116
    %386 = vmatprep.subr.mxu0 0.0
    %387 = vmatpush1.msra.mxu0 %v117
    %388 = vmatprep.subr.mxu0 0.0
    %389 = vmatpush1.msra.mxu0 %v118
    %390 = vmatprep.subr.mxu0 0.0
    %391 = vmatpush1.msra.mxu0 %v119
    %392 = vmatprep.subr.mxu0 0.0
    %393 = vmatpush1.msra.mxu0 %v120
    %394 = vmatprep.subr.mxu0 0.0
    %395 = vmatpush1.msra.mxu0 %v121
    %396 = vmatprep.subr.mxu0 0.0
    %397 = vmatpush1.msra.mxu0 0.0
    %398 = vmatprep.subr.mxu0 0.0
    %399 = vmatpush1.msra.mxu0 0.0
    %400 = vmatprep.subr.mxu0 0.0
    %401 = vmatpush1.msra.mxu0 0.0
    %402 = vmatprep.subr.mxu0 0.0
    %403 = vmatpush1.msra.mxu0 0.0
    %404 = vmatprep.subr.mxu0 0.0
    %405 = vmatpush1.msra.mxu0 0.0
    %406 = vmatprep.subr.mxu0 0.0
    %407 = vmatpush1.msra.mxu0 0.0
    %408 = vmatprep.subr.mxu0 0.0
    %409 = vmatpush1.msra.mxu0 0.0
    %410 = vmatprep.subr.mxu0 0.0
    %411 = vmatpush1.msra.mxu0 0.0
    %412 = vmatprep.subr.mxu0 0.0
    %413 = vmatpush1.msra.mxu0 0.0
    %414 = vmatprep.subr.mxu0 0.0
    %415 = vmatpush1.msra.mxu0 0.0
    %416 = vmatprep.subr.mxu0 0.0
    %417 = vmatpush1.msra.mxu0 0.0
    %418 = vmatprep.subr.mxu0 0.0
    %419 = vmatpush1.msra.mxu0 0.0
    %420 = vmatprep.subr.mxu0 0.0
    %421 = vmatpush1.msra.mxu0 0.0
    %422 = vmatprep.subr.mxu0 0.0
    %423 = vmatpush1.msra.mxu0 0.0
    %424 = vmatprep.subr.mxu0 0.0
    %425 = vmatpush1.msra.mxu0 0.0
    %426 = vmatprep.subr.mxu0 0.0
    %427 = vmatpush1.msra.mxu0 0.0
    %428 = vmatprep.mubr.f32.mxu0 0.0
    %429 = vmatmul.mubr.f32.gmra.mrb[0].mxu0 %v82
    %v430 = vpop.f32.mrb[0].mxu0
    %v431 = vadd.f32 %v286, %v430
    %v432 = vpop.f32.mrb[0].mxu0
    %433 = vmatprep.mubr.f32.mxu0 0.0
    %434 = vmatmul.mubr.f32.gmra.mrb[0].mxu0 %v83
    %v435 = vpop.f32.mrb[0].mxu0
    %v436 = vadd.f32 %v291, %v435
    %v437 = vpop.f32.mrb[0].mxu0
    %438 = vmatprep.mubr.f32.mxu0 0.0
    %439 = vmatmul.mubr.f32.gmra.mrb[0].mxu0 %v85
    %v440 = vpop.f32.mrb[0].mxu0
    %v441 = vadd.f32 %v296, %v440
    %v442 = vpop.f32.mrb[0].mxu0
    %443 = vmatprep.mubr.f32.mxu0 0.0
    %444 = vmatmul.mubr.f32.gmra.mrb[0].mxu0 %v86
    %v445 = vpop.f32.mrb[0].mxu0
    %v446 = vadd.f32 %v301, %v445
    %v447 = vpop.f32.mrb[0].mxu0
    %448 = vmatprep.mubr.f32.mxu0 0.0
    %449 = vmatmul.mubr.f32.gmra.mrb[0].mxu0 %v88
    %v450 = vpop.f32.mrb[0].mxu0
    %v451 = vadd.f32 %v306, %v450
    %v452 = vpop.f32.mrb[0].mxu0
    %453 = vmatprep.mubr.f32.mxu0 0.0
    %454 = vmatmul.mubr.f32.gmra.mrb[0].mxu0 %v89
    %v455 = vpop.f32.mrb[0].mxu0
    %v456 = vadd.f32 %v311, %v455
    %v457 = vpop.f32.mrb[0].mxu0
    %458 = vmatprep.mubr.f32.mxu0 0.0
    %459 = vmatmul.mubr.f32.gmra.mrb[0].mxu0 %v91
    %v460 = vpop.f32.mrb[0].mxu0
    %v461 = vadd.f32 %v316, %v460
    %v462 = vpop.f32.mrb[0].mxu0
    %463 = vmatprep.mubr.f32.mxu0 0.0
    %464 = vmatmul.mubr.f32.gmra.mrb[0].mxu0 %v92
    %v465 = vpop.f32.mrb[0].mxu0
    %v466 = vadd.f32 %v321, %v465
    %v467 = vpop.f32.mrb[0].mxu0
    %468 = vmatprep.mubr.f32.mxu0 0.0
    %469 = vmatmul.mubr.f32.gmra.mrb[0].mxu0 %v94
    %v470 = vpop.f32.mrb[0].mxu0
    %v471 = vadd.f32 %v326, %v470
    %v472 = vpop.f32.mrb[0].mxu0
    %473 = vmatprep.mubr.f32.mxu0 0.0
    %474 = vmatmul.mubr.f32.gmra.mrb[0].mxu0 %v95
    %v475 = vpop.f32.mrb[0].mxu0
    %v476 = vadd.f32 %v331, %v475
    %v477 = vpop.f32.mrb[0].mxu0
    %478 = vmatprep.mubr.f32.mxu0 0.0
    %479 = vmatmul.mubr.f32.gmra.mrb[0].mxu0 %v97
    %v480 = vpop.f32.mrb[0].mxu0
    %v481 = vadd.f32 %v336, %v480
    %v482 = vpop.f32.mrb[0].mxu0
    %483 = vmatprep.mubr.f32.mxu0 0.0
    %484 = vmatmul.mubr.f32.gmra.mrb[0].mxu0 %v98
    %v485 = vpop.f32.mrb[0].mxu0
    %v486 = vadd.f32 %v341, %v485
    %v487 = vpop.f32.mrb[0].mxu0
    %488 = vmatprep.mubr.f32.mxu0 0.0
    %489 = vmatmul.mubr.f32.gmra.mrb[0].mxu0 %v100
    %v490 = vpop.f32.mrb[0].mxu0
    %v491 = vadd.f32 %v346, %v490
    %v492 = vpop.f32.mrb[0].mxu0
    %493 = vmatprep.mubr.f32.mxu0 0.0
    %494 = vmatmul.mubr.f32.gmra.mrb[0].mxu0 %v101
    %v495 = vpop.f32.mrb[0].mxu0
    %v496 = vadd.f32 %v351, %v495
    %v497 = vpop.f32.mrb[0].mxu0
    %498 = vmatprep.mubr.f32.mxu0 0.0
    %499 = vmatmul.mubr.f32.gmra.mrb[0].mxu0 %v103
    %v500 = vpop.f32.mrb[0].mxu0
    %v501 = vadd.f32 %v356, %v500
    %v502 = vpop.f32.mrb[0].mxu0
    %503 = vmatprep.mubr.f32.mxu0 0.0
    %504 = vmatmul.mubr.f32.gmra.mrb[0].mxu0 %v104
    %v505 = vpop.f32.mrb[0].mxu0
    %v506 = vadd.f32 %v361, %v505
    %v507 = vpop.f32.mrb[0].mxu0
    %508 = vdwg.mxu0
    %vm509 = vcmask 1045504
    %v510 = vrot.slane %v82, 2
    %v511 = vrot.slane %v83, 2
    %v512 = vsel %vm509, %v510, %v511
    %v513 = vrot.slane %v84, 2
    %v514 = vsel %vm509, %v511, %v513
    %v515 = vrot.slane %v85, 2
    %v516 = vrot.slane %v86, 2
    %v517 = vsel %vm509, %v515, %v516
    %v518 = vrot.slane %v87, 2
    %v519 = vsel %vm509, %v516, %v518
    %v520 = vrot.slane %v88, 2
    %v521 = vrot.slane %v89, 2
    %v522 = vsel %vm509, %v520, %v521
    %v523 = vrot.slane %v90, 2
    %v524 = vsel %vm509, %v521, %v523
    %v525 = vrot.slane %v91, 2
    %v526 = vrot.slane %v92, 2
    %v527 = vsel %vm509, %v525, %v526
    %v528 = vrot.slane %v93, 2
    %v529 = vsel %vm509, %v526, %v528
    %v530 = vrot.slane %v94, 2
    %v531 = vrot.slane %v95, 2
    %v532 = vsel %vm509, %v530, %v531
    %v533 = vrot.slane %v96, 2
    %v534 = vsel %vm509, %v531, %v533
    %v535 = vrot.slane %v97, 2
    %v536 = vrot.slane %v98, 2
    %v537 = vsel %vm509, %v535, %v536
    %v538 = vrot.slane %v99, 2
    %v539 = vsel %vm509, %v536, %v538
    %v540 = vrot.slane %v100, 2
    %v541 = vrot.slane %v101, 2
    %v542 = vsel %vm509, %v540, %v541
    %v543 = vrot.slane %v102, 2
    %v544 = vsel %vm509, %v541, %v543
    %v545 = vrot.slane %v103, 2
    %v546 = vrot.slane %v104, 2
    %v547 = vsel %vm509, %v545, %v546
    %v548 = vrot.slane %v105, 2
    %v549 = vsel %vm509, %v546, %v548
    %v566 = vld [vmem:[#allocation2 + $0x100] sm:$0xff]
    %v567 = vld [vmem:[#allocation2 + $0x108] sm:$0xff]
    %v568 = vld [vmem:[#allocation2 + $0x110] sm:$0xff]
    %v569 = vld [vmem:[#allocation2 + $0x118] sm:$0xff]
    %v570 = vld [vmem:[#allocation2 + $0x120] sm:$0xff]
    %v571 = vld [vmem:[#allocation2 + $0x128] sm:$0xff]
    %v572 = vld [vmem:[#allocation2 + $0x130] sm:$0xff]
    %v573 = vld [vmem:[#allocation2 + $0x138] sm:$0xff]
    %v574 = vld [vmem:[#allocation2 + $0x140] sm:$0xff]
    %v575 = vld [vmem:[#allocation2 + $0x148] sm:$0xff]
    %v576 = vld [vmem:[#allocation2 + $0x150] sm:$0xff]
    %v577 = vld [vmem:[#allocation2 + $0x158] sm:$0xff]
    %v578 = vld [vmem:[#allocation2 + $0x160] sm:$0xff]
    %v579 = vld [vmem:[#allocation2 + $0x168] sm:$0xff]
    %v580 = vld [vmem:[#allocation2 + $0x170] sm:$0xff]
    %v581 = vld [vmem:[#allocation2 + $0x178] sm:$0xff]
    %582 = vmatprep.subr.mxu0 0.0
    %583 = vmatpush1.msra.mxu0 %v566
    %584 = vmatprep.subr.mxu0 0.0
    %585 = vmatpush1.msra.mxu0 %v567
    %586 = vmatprep.subr.mxu0 0.0
    %587 = vmatpush1.msra.mxu0 %v568
    %588 = vmatprep.subr.mxu0 0.0
    %589 = vmatpush1.msra.mxu0 %v569
    %590 = vmatprep.subr.mxu0 0.0
    %591 = vmatpush1.msra.mxu0 %v570
    %592 = vmatprep.subr.mxu0 0.0
    %593 = vmatpush1.msra.mxu0 %v571
    %594 = vmatprep.subr.mxu0 0.0
    %595 = vmatpush1.msra.mxu0 %v572
    %596 = vmatprep.subr.mxu0 0.0
    %597 = vmatpush1.msra.mxu0 %v573
    %598 = vmatprep.subr.mxu0 0.0
    %599 = vmatpush1.msra.mxu0 %v574
    %600 = vmatprep.subr.mxu0 0.0
    %601 = vmatpush1.msra.mxu0 %v575
    %602 = vmatprep.subr.mxu0 0.0
    %603 = vmatpush1.msra.mxu0 %v576
    %604 = vmatprep.subr.mxu0 0.0
    %605 = vmatpush1.msra.mxu0 %v577
    %606 = vmatprep.subr.mxu0 0.0
    %607 = vmatpush1.msra.mxu0 %v578
    %608 = vmatprep.subr.mxu0 0.0
    %609 = vmatpush1.msra.mxu0 %v579
    %610 = vmatprep.subr.mxu0 0.0
    %611 = vmatpush1.msra.mxu0 %v580
    %612 = vmatprep.subr.mxu0 0.0
    %613 = vmatpush1.msra.mxu0 %v581
    %614 = vmatprep.subr.mxu0 0.0
    %615 = vmatpush1.msra.mxu0 0.0
    %616 = vmatprep.subr.mxu0 0.0
    %617 = vmatpush1.msra.mxu0 0.0
    %618 = vmatprep.subr.mxu0 0.0
    %619 = vmatpush1.msra.mxu0 0.0
    %620 = vmatprep.subr.mxu0 0.0
    %621 = vmatpush1.msra.mxu0 0.0
    %622 = vmatprep.subr.mxu0 0.0
    %623 = vmatpush1.msra.mxu0 0.0
    %624 = vmatprep.subr.mxu0 0.0
    %625 = vmatpush1.msra.mxu0 0.0
    %626 = vmatprep.subr.mxu0 0.0
    %627 = vmatpush1.msra.mxu0 0.0
    %628 = vmatprep.subr.mxu0 0.0
    %629 = vmatpush1.msra.mxu0 0.0
    %630 = vmatprep.subr.mxu0 0.0
    %631 = vmatpush1.msra.mxu0 0.0
    %632 = vmatprep.subr.mxu0 0.0
    %633 = vmatpush1.msra.mxu0 0.0
    %634 = vmatprep.subr.mxu0 0.0
    %635 = vmatpush1.msra.mxu0 0.0
    %636 = vmatprep.subr.mxu0 0.0
    %637 = vmatpush1.msra.mxu0 0.0
    %638 = vmatprep.subr.mxu0 0.0
    %639 = vmatpush1.msra.mxu0 0.0
    %640 = vmatprep.subr.mxu0 0.0
    %641 = vmatpush1.msra.mxu0 0.0
    %642 = vmatprep.subr.mxu0 0.0
    %643 = vmatpush1.msra.mxu0 0.0
    %644 = vmatprep.subr.mxu0 0.0
    %645 = vmatpush1.msra.mxu0 0.0
    %646 = vmatprep.mubr.f32.mxu0 0.0
    %647 = vmatmul.mubr.f32.gmra.mrb[0].mxu0 %v512
    %v648 = vpop.f32.mrb[0].mxu0
    %v649 = vadd.f32 0.0, %v648
    %v650 = vpop.f32.mrb[0].mxu0
    %651 = vmatprep.mubr.f32.mxu0 0.0
    %652 = vmatmul.mubr.f32.gmra.mrb[0].mxu0 %v514
    %v653 = vpop.f32.mrb[0].mxu0
    %v654 = vadd.f32 0.0, %v653
    %v655 = vpop.f32.mrb[0].mxu0
    %656 = vmatprep.mubr.f32.mxu0 0.0
    %657 = vmatmul.mubr.f32.gmra.mrb[0].mxu0 %v517
    %v658 = vpop.f32.mrb[0].mxu0
    %v659 = vadd.f32 0.0, %v658
    %v660 = vpop.f32.mrb[0].mxu0
    %661 = vmatprep.mubr.f32.mxu0 0.0
    %662 = vmatmul.mubr.f32.gmra.mrb[0].mxu0 %v519
    %v663 = vpop.f32.mrb[0].mxu0
    %v664 = vadd.f32 0.0, %v663
    %v665 = vpop.f32.mrb[0].mxu0
    %666 = vmatprep.mubr.f32.mxu0 0.0
    %667 = vmatmul.mubr.f32.gmra.mrb[0].mxu0 %v522
    %v668 = vpop.f32.mrb[0].mxu0
    %v669 = vadd.f32 0.0, %v668
    %v670 = vpop.f32.mrb[0].mxu0
    %671 = vmatprep.mubr.f32.mxu0 0.0
    %672 = vmatmul.mubr.f32.gmra.mrb[0].mxu0 %v524
    %v673 = vpop.f32.mrb[0].mxu0
    %v674 = vadd.f32 0.0, %v673
    %v675 = vpop.f32.mrb[0].mxu0
    %676 = vmatprep.mubr.f32.mxu0 0.0
    %677 = vmatmul.mubr.f32.gmra.mrb[0].mxu0 %v527
    %v678 = vpop.f32.mrb[0].mxu0
    %v679 = vadd.f32 0.0, %v678
    %v680 = vpop.f32.mrb[0].mxu0
    %681 = vmatprep.mubr.f32.mxu0 0.0
    %682 = vmatmul.mubr.f32.gmra.mrb[0].mxu0 %v529
    %v683 = vpop.f32.mrb[0].mxu0
    %v684 = vadd.f32 0.0, %v683
    %v685 = vpop.f32.mrb[0].mxu0
    %686 = vmatprep.mubr.f32.mxu0 0.0
    %687 = vmatmul.mubr.f32.gmra.mrb[0].mxu0 %v532
    %v688 = vpop.f32.mrb[0].mxu0
    %v689 = vadd.f32 0.0, %v688
    %v690 = vpop.f32.mrb[0].mxu0
    %691 = vmatprep.mubr.f32.mxu0 0.0
    %692 = vmatmul.mubr.f32.gmra.mrb[0].mxu0 %v534
    %v693 = vpop.f32.mrb[0].mxu0
    %v694 = vadd.f32 0.0, %v693
    %v695 = vpop.f32.mrb[0].mxu0
    %696 = vmatprep.mubr.f32.mxu0 0.0
    %697 = vmatmul.mubr.f32.gmra.mrb[0].mxu0 %v537
    %v698 = vpop.f32.mrb[0].mxu0
    %v699 = vadd.f32 0.0, %v698
    %v700 = vpop.f32.mrb[0].mxu0
    %701 = vmatprep.mubr.f32.mxu0 0.0
    %702 = vmatmul.mubr.f32.gmra.mrb[0].mxu0 %v539
    %v703 = vpop.f32.mrb[0].mxu0
    %v704 = vadd.f32 0.0, %v703
    %v705 = vpop.f32.mrb[0].mxu0
    %706 = vmatprep.mubr.f32.mxu0 0.0
    %707 = vmatmul.mubr.f32.gmra.mrb[0].mxu0 %v542
    %v708 = vpop.f32.mrb[0].mxu0
    %v709 = vadd.f32 0.0, %v708
    %v710 = vpop.f32.mrb[0].mxu0
    %711 = vmatprep.mubr.f32.mxu0 0.0
    %712 = vmatmul.mubr.f32.gmra.mrb[0].mxu0 %v544
    %v713 = vpop.f32.mrb[0].mxu0
    %v714 = vadd.f32 0.0, %v713
    %v715 = vpop.f32.mrb[0].mxu0
    %716 = vmatprep.mubr.f32.mxu0 0.0
    %717 = vmatmul.mubr.f32.gmra.mrb[0].mxu0 %v547
    %v718 = vpop.f32.mrb[0].mxu0
    %v719 = vadd.f32 0.0, %v718
    %v720 = vpop.f32.mrb[0].mxu0
    %721 = vmatprep.mubr.f32.mxu0 0.0
    %722 = vmatmul.mubr.f32.gmra.mrb[0].mxu0 %v549
    %v723 = vpop.f32.mrb[0].mxu0
    %v724 = vadd.f32 0.0, %v723
    %v725 = vpop.f32.mrb[0].mxu0
    %726 = vdwg.mxu0
    %v727 = vadd.f32 %v431, %v649
    %v728 = vadd.f32 %v436, %v654
    %v729 = vadd.f32 %v441, %v659
    %v730 = vadd.f32 %v446, %v664
    %v731 = vadd.f32 %v451, %v669
    %v732 = vadd.f32 %v456, %v674
    %v733 = vadd.f32 %v461, %v679
    %v734 = vadd.f32 %v466, %v684
    %v735 = vadd.f32 %v471, %v689
    %v736 = vadd.f32 %v476, %v694
    %v737 = vadd.f32 %v481, %v699
    %v738 = vadd.f32 %v486, %v704
    %v739 = vadd.f32 %v491, %v709
    %v740 = vadd.f32 %v496, %v714
    %v741 = vadd.f32 %v501, %v719
    %v742 = vadd.f32 %v506, %v724
    %v743 = vld [vmem:[%s5] sm:$0x1]
    %v745 = vlaneseq
    %v746 = vshrl.u32 %v745, 7
    %v747 = vsub.s32 0, %v746
    %v748 = vrot.slane %v743, %v747
    %v750 = vadd.f32 %v727, %v748
    %v751 = vadd.f32 %v728, %v748
    %v752 = vadd.f32 %v729, %v748
    %v753 = vadd.f32 %v730, %v748
    %v754 = vadd.f32 %v731, %v748
    %v755 = vadd.f32 %v732, %v748
    %v756 = vadd.f32 %v733, %v748
    %v757 = vadd.f32 %v734, %v748
    %v758 = vadd.f32 %v735, %v748
    %v759 = vadd.f32 %v736, %v748
    %v760 = vadd.f32 %v737, %v748
    %v761 = vadd.f32 %v738, %v748
    %v762 = vadd.f32 %v739, %v748
    %v763 = vadd.f32 %v740, %v748
    %v764 = vadd.f32 %v741, %v748
    %v765 = vadd.f32 %v742, %v748
    %vm766 = vcmp.gt.f32.partialorder %v750, 0.0
    %vm767 = vcmp.gt.f32.partialorder %v751, 0.0
    %vm768 = vcmp.gt.f32.partialorder %v752, 0.0
    %vm769 = vcmp.gt.f32.partialorder %v753, 0.0
    %vm770 = vcmp.gt.f32.partialorder %v754, 0.0
    %vm771 = vcmp.gt.f32.partialorder %v755, 0.0
    %vm772 = vcmp.gt.f32.partialorder %v756, 0.0
    %vm773 = vcmp.gt.f32.partialorder %v757, 0.0
    %vm774 = vcmp.gt.f32.partialorder %v758, 0.0
    %vm775 = vcmp.gt.f32.partialorder %v759, 0.0
    %vm776 = vcmp.gt.f32.partialorder %v760, 0.0
    %vm777 = vcmp.gt.f32.partialorder %v761, 0.0
    %vm778 = vcmp.gt.f32.partialorder %v762, 0.0
    %vm779 = vcmp.gt.f32.partialorder %v763, 0.0
    %vm780 = vcmp.gt.f32.partialorder %v764, 0.0
    %vm781 = vcmp.gt.f32.partialorder %v765, 0.0
    %v782 = vmul.f32 %v750, 0.01
    %v783 = vmul.f32 %v751, 0.01
    %v784 = vmul.f32 %v752, 0.01
    %v785 = vmul.f32 %v753, 0.01
    %v786 = vmul.f32 %v754, 0.01
    %v787 = vmul.f32 %v755, 0.01
    %v788 = vmul.f32 %v756, 0.01
    %v789 = vmul.f32 %v757, 0.01
    %v790 = vmul.f32 %v758, 0.01
    %v791 = vmul.f32 %v759, 0.01
    %v792 = vmul.f32 %v760, 0.01
    %v793 = vmul.f32 %v761, 0.01
    %v794 = vmul.f32 %v762, 0.01
    %v795 = vmul.f32 %v763, 0.01
    %v796 = vmul.f32 %v764, 0.01
    %v797 = vmul.f32 %v765, 0.01
    %v798 = vsel %vm766, %v750, %v782
    %v799 = vsel %vm767, %v751, %v783
    %v800 = vsel %vm768, %v752, %v784
    %v801 = vsel %vm769, %v753, %v785
    %v802 = vsel %vm770, %v754, %v786
    %v803 = vsel %vm771, %v755, %v787
    %v804 = vsel %vm772, %v756, %v788
    %v805 = vsel %vm773, %v757, %v789
    %v806 = vsel %vm774, %v758, %v790
    %v807 = vsel %vm775, %v759, %v791
    %v808 = vsel %vm776, %v760, %v792
    %v809 = vsel %vm777, %v761, %v793
    %v810 = vsel %vm778, %v762, %v794
    %v811 = vsel %vm779, %v763, %v795
    %v812 = vsel %vm780, %v764, %v796
    %v813 = vsel %vm781, %v765, %v797
    %vm830 = vcmask 1040384
    %v831 = vrot.slane %v798, 7
    %v832 = vrot.slane %v799, 7
    %v833 = vsel %vm830, %v831, %v832
    %v834 = vrot.slane %v800, 7
    %v835 = vrot.slane %v801, 7
    %v836 = vsel %vm830, %v834, %v835
    %v837 = vrot.slane %v802, 7
    %v838 = vrot.slane %v803, 7
    %v839 = vsel %vm830, %v837, %v838
    %v840 = vrot.slane %v804, 7
    %v841 = vrot.slane %v805, 7
    %v842 = vsel %vm830, %v840, %v841
    %v843 = vrot.slane %v806, 7
    %v844 = vrot.slane %v807, 7
    %v845 = vsel %vm830, %v843, %v844
    %v846 = vrot.slane %v808, 7
    %v847 = vrot.slane %v809, 7
    %v848 = vsel %vm830, %v846, %v847
    %v849 = vrot.slane %v810, 7
    %v850 = vrot.slane %v811, 7
    %v851 = vsel %vm830, %v849, %v850
    %v852 = vrot.slane %v812, 7
    %v853 = vrot.slane %v813, 7
    %v854 = vsel %vm830, %v852, %v853
    %v879 = vsel %vm830, 0.0, %v831
    %v880 = vsel %vm830, 0.0, %v834
    %v881 = vsel %vm830, 0.0, %v837
    %v882 = vsel %vm830, 0.0, %v840
    %v883 = vsel %vm830, 0.0, %v843
    %v884 = vsel %vm830, 0.0, %v846
    %v885 = vsel %vm830, 0.0, %v849
    %v886 = vsel %vm830, 0.0, %v852
    %v887 = vsel %vm830, %v832, 0.0
    %v888 = vsel %vm830, %v835, 0.0
    %v889 = vsel %vm830, %v838, 0.0
    %v890 = vsel %vm830, %v841, 0.0
    %v891 = vsel %vm830, %v844, 0.0
    %v892 = vsel %vm830, %v847, 0.0
    %v893 = vsel %vm830, %v850, 0.0
    %v894 = vsel %vm830, %v853, 0.0
    %v895 = vld [vmem:[#allocation5] sm:$0xff]
    %v896 = vld [vmem:[#allocation5 + $0x8] sm:$0xff]
    %v897 = vld [vmem:[#allocation5 + $0x10] sm:$0xff]
    %v898 = vld [vmem:[#allocation5 + $0x18] sm:$0xff]
    %v899 = vld [vmem:[#allocation5 + $0x20] sm:$0xff]
    %v900 = vld [vmem:[#allocation5 + $0x28] sm:$0xff]
    %v901 = vld [vmem:[#allocation5 + $0x30] sm:$0xff]
    %v902 = vld [vmem:[#allocation5 + $0x38] sm:$0xff]
    %v903 = vld [vmem:[#allocation5 + $0x40] sm:$0xff]
    %v904 = vld [vmem:[#allocation5 + $0x48] sm:$0xff]
    %v905 = vld [vmem:[#allocation5 + $0x50] sm:$0xff]
    %v906 = vld [vmem:[#allocation5 + $0x58] sm:$0xff]
    %v907 = vld [vmem:[#allocation5 + $0x60] sm:$0xff]
    %v908 = vld [vmem:[#allocation5 + $0x68] sm:$0xff]
    %v909 = vld [vmem:[#allocation5 + $0x70] sm:$0xff]
    %v910 = vld [vmem:[#allocation5 + $0x78] sm:$0xff]
    %v911 = vld [vmem:[#allocation5 + $0x80] sm:$0xff]
    %v912 = vld [vmem:[#allocation5 + $0x88] sm:$0xff]
    %v913 = vld [vmem:[#allocation5 + $0x90] sm:$0xff]
    %v914 = vld [vmem:[#allocation5 + $0x98] sm:$0xff]
    %v915 = vld [vmem:[#allocation5 + $0xa0] sm:$0xff]
    %v916 = vld [vmem:[#allocation5 + $0xa8] sm:$0xff]
    %v917 = vld [vmem:[#allocation5 + $0xb0] sm:$0xff]
    %v918 = vld [vmem:[#allocation5 + $0xb8] sm:$0xff]
    %v919 = vld [vmem:[#allocation5 + $0xc0] sm:$0xff]
    %v920 = vld [vmem:[#allocation5 + $0xc8] sm:$0xff]
    %v921 = vld [vmem:[#allocation5 + $0xd0] sm:$0xff]
    %v922 = vld [vmem:[#allocation5 + $0xd8] sm:$0xff]
    %v923 = vld [vmem:[#allocation5 + $0xe0] sm:$0xff]
    %v924 = vld [vmem:[#allocation5 + $0xe8] sm:$0xff]
    %v925 = vld [vmem:[#allocation5 + $0xf0] sm:$0xff]
    %v926 = vld [vmem:[#allocation5 + $0xf8] sm:$0xff]
    %v943 = vrot.slane %v879, 1
    %v944 = vrot.slane %v833, 1
    %v945 = vsel %vm146, %v943, %v944
    %v946 = vrot.slane %v887, 1
    %v947 = vsel %vm146, %v944, %v946
    %v948 = vrot.slane %v880, 1
    %v949 = vrot.slane %v836, 1
    %v950 = vsel %vm146, %v948, %v949
    %v951 = vrot.slane %v888, 1
    %v952 = vsel %vm146, %v949, %v951
    %v953 = vrot.slane %v881, 1
    %v954 = vrot.slane %v839, 1
    %v955 = vsel %vm146, %v953, %v954
    %v956 = vrot.slane %v889, 1
    %v957 = vsel %vm146, %v954, %v956
    %v958 = vrot.slane %v882, 1
    %v959 = vrot.slane %v842, 1
    %v960 = vsel %vm146, %v958, %v959
    %v961 = vrot.slane %v890, 1
    %v962 = vsel %vm146, %v959, %v961
    %v963 = vrot.slane %v883, 1
    %v964 = vrot.slane %v845, 1
    %v965 = vsel %vm146, %v963, %v964
    %v966 = vrot.slane %v891, 1
    %v967 = vsel %vm146, %v964, %v966
    %v968 = vrot.slane %v884, 1
    %v969 = vrot.slane %v848, 1
    %v970 = vsel %vm146, %v968, %v969
    %v971 = vrot.slane %v892, 1
    %v972 = vsel %vm146, %v969, %v971
    %v973 = vrot.slane %v885, 1
    %v974 = vrot.slane %v851, 1
    %v975 = vsel %vm146, %v973, %v974
    %v976 = vrot.slane %v893, 1
    %v977 = vsel %vm146, %v974, %v976
    %v978 = vrot.slane %v886, 1
    %v979 = vrot.slane %v854, 1
    %v980 = vsel %vm146, %v978, %v979
    %v981 = vrot.slane %v894, 1
    %v982 = vsel %vm146, %v979, %v981
    %v999 = vld [vmem:[#allocation5 + $0x100] sm:$0xff]
    %v1000 = vld [vmem:[#allocation5 + $0x108] sm:$0xff]
    %v1001 = vld [vmem:[#allocation5 + $0x110] sm:$0xff]
    %v1002 = vld [vmem:[#allocation5 + $0x118] sm:$0xff]
    %v1003 = vld [vmem:[#allocation5 + $0x120] sm:$0xff]
    %v1004 = vld [vmem:[#allocation5 + $0x128] sm:$0xff]
    %v1005 = vld [vmem:[#allocation5 + $0x130] sm:$0xff]
    %v1006 = vld [vmem:[#allocation5 + $0x138] sm:$0xff]
    %v1007 = vld [vmem:[#allocation5 + $0x140] sm:$0xff]
    %v1008 = vld [vmem:[#allocation5 + $0x148] sm:$0xff]
    %v1009 = vld [vmem:[#allocation5 + $0x150] sm:$0xff]
    %v1010 = vld [vmem:[#allocation5 + $0x158] sm:$0xff]
    %v1011 = vld [vmem:[#allocation5 + $0x160] sm:$0xff]
    %v1012 = vld [vmem:[#allocation5 + $0x168] sm:$0xff]
    %v1013 = vld [vmem:[#allocation5 + $0x170] sm:$0xff]
    %v1014 = vld [vmem:[#allocation5 + $0x178] sm:$0xff]
    %v1015 = vld [vmem:[#allocation5 + $0x180] sm:$0xff]
    %v1016 = vld [vmem:[#allocation5 + $0x188] sm:$0xff]
    %v1017 = vld [vmem:[#allocation5 + $0x190] sm:$0xff]
    %v1018 = vld [vmem:[#allocation5 + $0x198] sm:$0xff]
    %v1019 = vld [vmem:[#allocation5 + $0x1a0] sm:$0xff]
    %v1020 = vld [vmem:[#allocation5 + $0x1a8] sm:$0xff]
    %v1021 = vld [vmem:[#allocation5 + $0x1b0] sm:$0xff]
    %v1022 = vld [vmem:[#allocation5 + $0x1b8] sm:$0xff]
    %v1023 = vld [vmem:[#allocation5 + $0x1c0] sm:$0xff]
    %v1024 = vld [vmem:[#allocation5 + $0x1c8] sm:$0xff]
    %v1025 = vld [vmem:[#allocation5 + $0x1d0] sm:$0xff]
    %v1026 = vld [vmem:[#allocation5 + $0x1d8] sm:$0xff]
    %v1027 = vld [vmem:[#allocation5 + $0x1e0] sm:$0xff]
    %v1028 = vld [vmem:[#allocation5 + $0x1e8] sm:$0xff]
    %v1029 = vld [vmem:[#allocation5 + $0x1f0] sm:$0xff]
    %v1030 = vld [vmem:[#allocation5 + $0x1f8] sm:$0xff]
    %1031 = vmatprep.subr.mxu0 %v1000
    %1032 = vmatpush1.msra.mxu0 %v999
    %1033 = vmatprep.subr.mxu0 %v1002
    %1034 = vmatpush1.msra.mxu0 %v1001
    %1035 = vmatprep.subr.mxu0 %v1004
    %1036 = vmatpush1.msra.mxu0 %v1003
    %1037 = vmatprep.subr.mxu0 %v1006
    %1038 = vmatpush1.msra.mxu0 %v1005
    %1039 = vmatprep.subr.mxu0 %v1008
    %1040 = vmatpush1.msra.mxu0 %v1007
    %1041 = vmatprep.subr.mxu0 %v1010
    %1042 = vmatpush1.msra.mxu0 %v1009
    %1043 = vmatprep.subr.mxu0 %v1012
    %1044 = vmatpush1.msra.mxu0 %v1011
    %1045 = vmatprep.subr.mxu0 %v1014
    %1046 = vmatpush1.msra.mxu0 %v1013
    %1047 = vmatprep.subr.mxu0 %v1016
    %1048 = vmatpush1.msra.mxu0 %v1015
    %1049 = vmatprep.subr.mxu0 %v1018
    %1050 = vmatpush1.msra.mxu0 %v1017
    %1051 = vmatprep.subr.mxu0 %v1020
    %1052 = vmatpush1.msra.mxu0 %v1019
    %1053 = vmatprep.subr.mxu0 %v1022
    %1054 = vmatpush1.msra.mxu0 %v1021
    %1055 = vmatprep.subr.mxu0 %v1024
    %1056 = vmatpush1.msra.mxu0 %v1023
    %1057 = vmatprep.subr.mxu0 %v1026
    %1058 = vmatpush1.msra.mxu0 %v1025
    %1059 = vmatprep.subr.mxu0 %v1028
    %1060 = vmatpush1.msra.mxu0 %v1027
    %1061 = vmatprep.subr.mxu0 %v1030
    %1062 = vmatpush1.msra.mxu0 %v1029
    %1063 = vmatprep.subr.mxu0 0.0
    %1064 = vmatpush1.msra.mxu0 0.0
    %1065 = vmatprep.subr.mxu0 0.0
    %1066 = vmatpush1.msra.mxu0 0.0
    %1067 = vmatprep.subr.mxu0 0.0
    %1068 = vmatpush1.msra.mxu0 0.0
    %1069 = vmatprep.subr.mxu0 0.0
    %1070 = vmatpush1.msra.mxu0 0.0
    %1071 = vmatprep.subr.mxu0 0.0
    %1072 = vmatpush1.msra.mxu0 0.0
    %1073 = vmatprep.subr.mxu0 0.0
    %1074 = vmatpush1.msra.mxu0 0.0
    %1075 = vmatprep.subr.mxu0 0.0
    %1076 = vmatpush1.msra.mxu0 0.0
    %1077 = vmatprep.subr.mxu0 0.0
    %1078 = vmatpush1.msra.mxu0 0.0
    %1079 = vmatprep.subr.mxu0 0.0
    %1080 = vmatpush1.msra.mxu0 0.0
    %1081 = vmatprep.subr.mxu0 0.0
    %1082 = vmatpush1.msra.mxu0 0.0
    %1083 = vmatprep.subr.mxu0 0.0
    %1084 = vmatpush1.msra.mxu0 0.0
    %1085 = vmatprep.subr.mxu0 0.0
    %1086 = vmatpush1.msra.mxu0 0.0
    %1087 = vmatprep.subr.mxu0 0.0
    %1088 = vmatpush1.msra.mxu0 0.0
    %1089 = vmatprep.subr.mxu0 0.0
    %1090 = vmatpush1.msra.mxu0 0.0
    %1091 = vmatprep.subr.mxu0 0.0
    %1092 = vmatpush1.msra.mxu0 0.0
    %1093 = vmatprep.subr.mxu0 0.0
    %1094 = vmatpush1.msra.mxu0 0.0
    %1095 = vmatprep.mubr.f32.mxu0 0.0
    %1096 = vmatmul.mubr.f32.gmra.mrb[0].mxu0 %v945
    %v1097 = vpop.f32.mrb[0].mxu0
    %v1098 = vadd.f32 0.0, %v1097
    %v1099 = vpop.f32.mrb[0].mxu0
    %v1100 = vadd.f32 0.0, %v1099
    %1101 = vmatprep.mubr.f32.mxu0 0.0
    %1102 = vmatmul.mubr.f32.gmra.mrb[0].mxu0 %v947
    %v1103 = vpop.f32.mrb[0].mxu0
    %v1104 = vadd.f32 0.0, %v1103
    %v1105 = vpop.f32.mrb[0].mxu0
    %v1106 = vadd.f32 0.0, %v1105
    %1107 = vmatprep.mubr.f32.mxu0 0.0
    %1108 = vmatmul.mubr.f32.gmra.mrb[0].mxu0 %v950
    %v1109 = vpop.f32.mrb[0].mxu0
    %v1110 = vadd.f32 0.0, %v1109
    %v1111 = vpop.f32.mrb[0].mxu0
    %v1112 = vadd.f32 0.0, %v1111
    %1113 = vmatprep.mubr.f32.mxu0 0.0
    %1114 = vmatmul.mubr.f32.gmra.mrb[0].mxu0 %v952
    %v1115 = vpop.f32.mrb[0].mxu0
    %v1116 = vadd.f32 0.0, %v1115
    %v1117 = vpop.f32.mrb[0].mxu0
    %v1118 = vadd.f32 0.0, %v1117
    %1119 = vmatprep.mubr.f32.mxu0 0.0
    %1120 = vmatmul.mubr.f32.gmra.mrb[0].mxu0 %v955
    %v1121 = vpop.f32.mrb[0].mxu0
    %v1122 = vadd.f32 0.0, %v1121
    %v1123 = vpop.f32.mrb[0].mxu0
    %v1124 = vadd.f32 0.0, %v1123
    %1125 = vmatprep.mubr.f32.mxu0 0.0
    %1126 = vmatmul.mubr.f32.gmra.mrb[0].mxu0 %v957
    %v1127 = vpop.f32.mrb[0].mxu0
    %v1128 = vadd.f32 0.0, %v1127
    %v1129 = vpop.f32.mrb[0].mxu0
    %v1130 = vadd.f32 0.0, %v1129
    %1131 = vmatprep.mubr.f32.mxu0 0.0
    %1132 = vmatmul.mubr.f32.gmra.mrb[0].mxu0 %v960
    %v1133 = vpop.f32.mrb[0].mxu0
    %v1134 = vadd.f32 0.0, %v1133
    %v1135 = vpop.f32.mrb[0].mxu0
    %v1136 = vadd.f32 0.0, %v1135
    %1137 = vmatprep.mubr.f32.mxu0 0.0
    %1138 = vmatmul.mubr.f32.gmra.mrb[0].mxu0 %v962
    %v1139 = vpop.f32.mrb[0].mxu0
    %v1140 = vadd.f32 0.0, %v1139
    %v1141 = vpop.f32.mrb[0].mxu0
    %v1142 = vadd.f32 0.0, %v1141
    %1143 = vmatprep.mubr.f32.mxu0 0.0
    %1144 = vmatmul.mubr.f32.gmra.mrb[0].mxu0 %v965
    %v1145 = vpop.f32.mrb[0].mxu0
    %v1146 = vadd.f32 0.0, %v1145
    %v1147 = vpop.f32.mrb[0].mxu0
    %v1148 = vadd.f32 0.0, %v1147
    %1149 = vmatprep.mubr.f32.mxu0 0.0
    %1150 = vmatmul.mubr.f32.gmra.mrb[0].mxu0 %v967
    %v1151 = vpop.f32.mrb[0].mxu0
    %v1152 = vadd.f32 0.0, %v1151
    %v1153 = vpop.f32.mrb[0].mxu0
    %v1154 = vadd.f32 0.0, %v1153
    %1155 = vmatprep.mubr.f32.mxu0 0.0
    %1156 = vmatmul.mubr.f32.gmra.mrb[0].mxu0 %v970
    %v1157 = vpop.f32.mrb[0].mxu0
    %v1158 = vadd.f32 0.0, %v1157
    %v1159 = vpop.f32.mrb[0].mxu0
    %v1160 = vadd.f32 0.0, %v1159
    %1161 = vmatprep.mubr.f32.mxu0 0.0
    %1162 = vmatmul.mubr.f32.gmra.mrb[0].mxu0 %v972
    %v1163 = vpop.f32.mrb[0].mxu0
    %v1164 = vadd.f32 0.0, %v1163
    %v1165 = vpop.f32.mrb[0].mxu0
    %v1166 = vadd.f32 0.0, %v1165
    %1167 = vmatprep.mubr.f32.mxu0 0.0
    %1168 = vmatmul.mubr.f32.gmra.mrb[0].mxu0 %v975
    %v1169 = vpop.f32.mrb[0].mxu0
    %v1170 = vadd.f32 0.0, %v1169
    %v1171 = vpop.f32.mrb[0].mxu0
    %v1172 = vadd.f32 0.0, %v1171
    %1173 = vmatprep.mubr.f32.mxu0 0.0
    %1174 = vmatmul.mubr.f32.gmra.mrb[0].mxu0 %v977
    %v1175 = vpop.f32.mrb[0].mxu0
    %v1176 = vadd.f32 0.0, %v1175
    %v1177 = vpop.f32.mrb[0].mxu0
    %v1178 = vadd.f32 0.0, %v1177
    %1179 = vmatprep.mubr.f32.mxu0 0.0
    %1180 = vmatmul.mubr.f32.gmra.mrb[0].mxu0 %v980
    %v1181 = vpop.f32.mrb[0].mxu0
    %v1182 = vadd.f32 0.0, %v1181
    %v1183 = vpop.f32.mrb[0].mxu0
    %v1184 = vadd.f32 0.0, %v1183
    %1185 = vmatprep.mubr.f32.mxu0 0.0
    %1186 = vmatmul.mubr.f32.gmra.mrb[0].mxu0 %v982
    %v1187 = vpop.f32.mrb[0].mxu0
    %v1188 = vadd.f32 0.0, %v1187
    %v1189 = vpop.f32.mrb[0].mxu0
    %v1190 = vadd.f32 0.0, %v1189
    %1191 = vdwg.mxu0
    %1192 = vmatprep.subr.mxu0 %v896
    %1193 = vmatpush1.msra.mxu0 %v895
    %1194 = vmatprep.subr.mxu0 %v898
    %1195 = vmatpush1.msra.mxu0 %v897
    %1196 = vmatprep.subr.mxu0 %v900
    %1197 = vmatpush1.msra.mxu0 %v899
    %1198 = vmatprep.subr.mxu0 %v902
    %1199 = vmatpush1.msra.mxu0 %v901
    %1200 = vmatprep.subr.mxu0 %v904
    %1201 = vmatpush1.msra.mxu0 %v903
    %1202 = vmatprep.subr.mxu0 %v906
    %1203 = vmatpush1.msra.mxu0 %v905
    %1204 = vmatprep.subr.mxu0 %v908
    %1205 = vmatpush1.msra.mxu0 %v907
    %1206 = vmatprep.subr.mxu0 %v910
    %1207 = vmatpush1.msra.mxu0 %v909
    %1208 = vmatprep.subr.mxu0 %v912
    %1209 = vmatpush1.msra.mxu0 %v911
    %1210 = vmatprep.subr.mxu0 %v914
    %1211 = vmatpush1.msra.mxu0 %v913
    %1212 = vmatprep.subr.mxu0 %v916
    %1213 = vmatpush1.msra.mxu0 %v915
    %1214 = vmatprep.subr.mxu0 %v918
    %1215 = vmatpush1.msra.mxu0 %v917
    %1216 = vmatprep.subr.mxu0 %v920
    %1217 = vmatpush1.msra.mxu0 %v919
    %1218 = vmatprep.subr.mxu0 %v922
    %1219 = vmatpush1.msra.mxu0 %v921
    %1220 = vmatprep.subr.mxu0 %v924
    %1221 = vmatpush1.msra.mxu0 %v923
    %1222 = vmatprep.subr.mxu0 %v926
    %1223 = vmatpush1.msra.mxu0 %v925
    %1224 = vmatprep.subr.mxu0 0.0
    %1225 = vmatpush1.msra.mxu0 0.0
    %1226 = vmatprep.subr.mxu0 0.0
    %1227 = vmatpush1.msra.mxu0 0.0
    %1228 = vmatprep.subr.mxu0 0.0
    %1229 = vmatpush1.msra.mxu0 0.0
    %1230 = vmatprep.subr.mxu0 0.0
    %1231 = vmatpush1.msra.mxu0 0.0
    %1232 = vmatprep.subr.mxu0 0.0
    %1233 = vmatpush1.msra.mxu0 0.0
    %1234 = vmatprep.subr.mxu0 0.0
    %1235 = vmatpush1.msra.mxu0 0.0
    %1236 = vmatprep.subr.mxu0 0.0
    %1237 = vmatpush1.msra.mxu0 0.0
    %1238 = vmatprep.subr.mxu0 0.0
    %1239 = vmatpush1.msra.mxu0 0.0
    %1240 = vmatprep.subr.mxu0 0.0
    %1241 = vmatpush1.msra.mxu0 0.0
    %1242 = vmatprep.subr.mxu0 0.0
    %1243 = vmatpush1.msra.mxu0 0.0
    %1244 = vmatprep.subr.mxu0 0.0
    %1245 = vmatpush1.msra.mxu0 0.0
    %1246 = vmatprep.subr.mxu0 0.0
    %1247 = vmatpush1.msra.mxu0 0.0
    %1248 = vmatprep.subr.mxu0 0.0
    %1249 = vmatpush1.msra.mxu0 0.0
    %1250 = vmatprep.subr.mxu0 0.0
    %1251 = vmatpush1.msra.mxu0 0.0
    %1252 = vmatprep.subr.mxu0 0.0
    %1253 = vmatpush1.msra.mxu0 0.0
    %1254 = vmatprep.subr.mxu0 0.0
    %1255 = vmatpush1.msra.mxu0 0.0
    %1256 = vmatprep.mubr.f32.mxu0 0.0
    %1257 = vmatmul.mubr.f32.gmra.mrb[0].mxu0 %v879
    %v1258 = vpop.f32.mrb[0].mxu0
    %v1259 = vadd.f32 %v1098, %v1258
    %v1260 = vpop.f32.mrb[0].mxu0
    %v1261 = vadd.f32 %v1100, %v1260
    %1262 = vmatprep.mubr.f32.mxu0 0.0
    %1263 = vmatmul.mubr.f32.gmra.mrb[0].mxu0 %v833
    %v1264 = vpop.f32.mrb[0].mxu0
    %v1265 = vadd.f32 %v1104, %v1264
    %v1266 = vpop.f32.mrb[0].mxu0
    %v1267 = vadd.f32 %v1106, %v1266
    %1268 = vmatprep.mubr.f32.mxu0 0.0
    %1269 = vmatmul.mubr.f32.gmra.mrb[0].mxu0 %v880
    %v1270 = vpop.f32.mrb[0].mxu0
    %v1271 = vadd.f32 %v1110, %v1270
    %v1272 = vpop.f32.mrb[0].mxu0
    %v1273 = vadd.f32 %v1112, %v1272
    %1274 = vmatprep.mubr.f32.mxu0 0.0
    %1275 = vmatmul.mubr.f32.gmra.mrb[0].mxu0 %v836
    %v1276 = vpop.f32.mrb[0].mxu0
    %v1277 = vadd.f32 %v1116, %v1276
    %v1278 = vpop.f32.mrb[0].mxu0
    %v1279 = vadd.f32 %v1118, %v1278
    %1280 = vmatprep.mubr.f32.mxu0 0.0
    %1281 = vmatmul.mubr.f32.gmra.mrb[0].mxu0 %v881
    %v1282 = vpop.f32.mrb[0].mxu0
    %v1283 = vadd.f32 %v1122, %v1282
    %v1284 = vpop.f32.mrb[0].mxu0
    %v1285 = vadd.f32 %v1124, %v1284
    %1286 = vmatprep.mubr.f32.mxu0 0.0
    %1287 = vmatmul.mubr.f32.gmra.mrb[0].mxu0 %v839
    %v1288 = vpop.f32.mrb[0].mxu0
    %v1289 = vadd.f32 %v1128, %v1288
    %v1290 = vpop.f32.mrb[0].mxu0
    %v1291 = vadd.f32 %v1130, %v1290
    %1292 = vmatprep.mubr.f32.mxu0 0.0
    %1293 = vmatmul.mubr.f32.gmra.mrb[0].mxu0 %v882
    %v1294 = vpop.f32.mrb[0].mxu0
    %v1295 = vadd.f32 %v1134, %v1294
    %v1296 = vpop.f32.mrb[0].mxu0
    %v1297 = vadd.f32 %v1136, %v1296
    %1298 = vmatprep.mubr.f32.mxu0 0.0
    %1299 = vmatmul.mubr.f32.gmra.mrb[0].mxu0 %v842
    %v1300 = vpop.f32.mrb[0].mxu0
    %v1301 = vadd.f32 %v1140, %v1300
    %v1302 = vpop.f32.mrb[0].mxu0
    %v1303 = vadd.f32 %v1142, %v1302
    %1304 = vmatprep.mubr.f32.mxu0 0.0
    %1305 = vmatmul.mubr.f32.gmra.mrb[0].mxu0 %v883
    %v1306 = vpop.f32.mrb[0].mxu0
    %v1307 = vadd.f32 %v1146, %v1306
    %v1308 = vpop.f32.mrb[0].mxu0
    %v1309 = vadd.f32 %v1148, %v1308
    %1310 = vmatprep.mubr.f32.mxu0 0.0
    %1311 = vmatmul.mubr.f32.gmra.mrb[0].mxu0 %v845
    %v1312 = vpop.f32.mrb[0].mxu0
    %v1313 = vadd.f32 %v1152, %v1312
    %v1314 = vpop.f32.mrb[0].mxu0
    %v1315 = vadd.f32 %v1154, %v1314
    %1316 = vmatprep.mubr.f32.mxu0 0.0
    %1317 = vmatmul.mubr.f32.gmra.mrb[0].mxu0 %v884
    %v1318 = vpop.f32.mrb[0].mxu0
    %v1319 = vadd.f32 %v1158, %v1318
    %v1320 = vpop.f32.mrb[0].mxu0
    %v1321 = vadd.f32 %v1160, %v1320
    %1322 = vmatprep.mubr.f32.mxu0 0.0
    %1323 = vmatmul.mubr.f32.gmra.mrb[0].mxu0 %v848
    %v1324 = vpop.f32.mrb[0].mxu0
    %v1325 = vadd.f32 %v1164, %v1324
    %v1326 = vpop.f32.mrb[0].mxu0
    %v1327 = vadd.f32 %v1166, %v1326
    %1328 = vmatprep.mubr.f32.mxu0 0.0
    %1329 = vmatmul.mubr.f32.gmra.mrb[0].mxu0 %v885
    %v1330 = vpop.f32.mrb[0].mxu0
    %v1331 = vadd.f32 %v1170, %v1330
    %v1332 = vpop.f32.mrb[0].mxu0
    %v1333 = vadd.f32 %v1172, %v1332
    %1334 = vmatprep.mubr.f32.mxu0 0.0
    %1335 = vmatmul.mubr.f32.gmra.mrb[0].mxu0 %v851
    %v1336 = vpop.f32.mrb[0].mxu0
    %v1337 = vadd.f32 %v1176, %v1336
    %v1338 = vpop.f32.mrb[0].mxu0
    %v1339 = vadd.f32 %v1178, %v1338
    %1340 = vmatprep.mubr.f32.mxu0 0.0
    %1341 = vmatmul.mubr.f32.gmra.mrb[0].mxu0 %v886
    %v1342 = vpop.f32.mrb[0].mxu0
    %v1343 = vadd.f32 %v1182, %v1342
    %v1344 = vpop.f32.mrb[0].mxu0
    %v1345 = vadd.f32 %v1184, %v1344
    %1346 = vmatprep.mubr.f32.mxu0 0.0
    %1347 = vmatmul.mubr.f32.gmra.mrb[0].mxu0 %v854
    %v1348 = vpop.f32.mrb[0].mxu0
    %v1349 = vadd.f32 %v1188, %v1348
    %v1350 = vpop.f32.mrb[0].mxu0
    %v1351 = vadd.f32 %v1190, %v1350
    %1352 = vdwg.mxu0
    %v1353 = vrot.slane %v879, 2
    %v1354 = vrot.slane %v833, 2
    %v1355 = vsel %vm509, %v1353, %v1354
    %v1356 = vrot.slane %v887, 2
    %v1357 = vsel %vm509, %v1354, %v1356
    %v1358 = vrot.slane %v880, 2
    %v1359 = vrot.slane %v836, 2
    %v1360 = vsel %vm509, %v1358, %v1359
    %v1361 = vrot.slane %v888, 2
    %v1362 = vsel %vm509, %v1359, %v1361
    %v1363 = vrot.slane %v881, 2
    %v1364 = vrot.slane %v839, 2
    %v1365 = vsel %vm509, %v1363, %v1364
    %v1366 = vrot.slane %v889, 2
    %v1367 = vsel %vm509, %v1364, %v1366
    %v1368 = vrot.slane %v882, 2
    %v1369 = vrot.slane %v842, 2
    %v1370 = vsel %vm509, %v1368, %v1369
    %v1371 = vrot.slane %v890, 2
    %v1372 = vsel %vm509, %v1369, %v1371
    %v1373 = vrot.slane %v883, 2
    %v1374 = vrot.slane %v845, 2
    %v1375 = vsel %vm509, %v1373, %v1374
    %v1376 = vrot.slane %v891, 2
    %v1377 = vsel %vm509, %v1374, %v1376
    %v1378 = vrot.slane %v884, 2
    %v1379 = vrot.slane %v848, 2
    %v1380 = vsel %vm509, %v1378, %v1379
    %v1381 = vrot.slane %v892, 2
    %v1382 = vsel %vm509, %v1379, %v1381
    %v1383 = vrot.slane %v885, 2
    %v1384 = vrot.slane %v851, 2
    %v1385 = vsel %vm509, %v1383, %v1384
    %v1386 = vrot.slane %v893, 2
    %v1387 = vsel %vm509, %v1384, %v1386
    %v1388 = vrot.slane %v886, 2
    %v1389 = vrot.slane %v854, 2
    %v1390 = vsel %vm509, %v1388, %v1389
    %v1391 = vrot.slane %v894, 2
    %v1392 = vsel %vm509, %v1389, %v1391
    %v1409 = vld [vmem:[#allocation5 + $0x200] sm:$0xff]
    %v1410 = vld [vmem:[#allocation5 + $0x208] sm:$0xff]
    %v1411 = vld [vmem:[#allocation5 + $0x210] sm:$0xff]
    %v1412 = vld [vmem:[#allocation5 + $0x218] sm:$0xff]
    %v1413 = vld [vmem:[#allocation5 + $0x220] sm:$0xff]
    %v1414 = vld [vmem:[#allocation5 + $0x228] sm:$0xff]
    %v1415 = vld [vmem:[#allocation5 + $0x230] sm:$0xff]
    %v1416 = vld [vmem:[#allocation5 + $0x238] sm:$0xff]
    %v1417 = vld [vmem:[#allocation5 + $0x240] sm:$0xff]
    %v1418 = vld [vmem:[#allocation5 + $0x248] sm:$0xff]
    %v1419 = vld [vmem:[#allocation5 + $0x250] sm:$0xff]
    %v1420 = vld [vmem:[#allocation5 + $0x258] sm:$0xff]
    %v1421 = vld [vmem:[#allocation5 + $0x260] sm:$0xff]
    %v1422 = vld [vmem:[#allocation5 + $0x268] sm:$0xff]
    %v1423 = vld [vmem:[#allocation5 + $0x270] sm:$0xff]
    %v1424 = vld [vmem:[#allocation5 + $0x278] sm:$0xff]
    %v1425 = vld [vmem:[#allocation5 + $0x280] sm:$0xff]
    %v1426 = vld [vmem:[#allocation5 + $0x288] sm:$0xff]
    %v1427 = vld [vmem:[#allocation5 + $0x290] sm:$0xff]
    %v1428 = vld [vmem:[#allocation5 + $0x298] sm:$0xff]
    %v1429 = vld [vmem:[#allocation5 + $0x2a0] sm:$0xff]
    %v1430 = vld [vmem:[#allocation5 + $0x2a8] sm:$0xff]
    %v1431 = vld [vmem:[#allocation5 + $0x2b0] sm:$0xff]
    %v1432 = vld [vmem:[#allocation5 + $0x2b8] sm:$0xff]
    %v1433 = vld [vmem:[#allocation5 + $0x2c0] sm:$0xff]
    %v1434 = vld [vmem:[#allocation5 + $0x2c8] sm:$0xff]
    %v1435 = vld [vmem:[#allocation5 + $0x2d0] sm:$0xff]
    %v1436 = vld [vmem:[#allocation5 + $0x2d8] sm:$0xff]
    %v1437 = vld [vmem:[#allocation5 + $0x2e0] sm:$0xff]
    %v1438 = vld [vmem:[#allocation5 + $0x2e8] sm:$0xff]
    %v1439 = vld [vmem:[#allocation5 + $0x2f0] sm:$0xff]
    %v1440 = vld [vmem:[#allocation5 + $0x2f8] sm:$0xff]
    %1441 = vmatprep.subr.mxu0 %v1410
    %1442 = vmatpush1.msra.mxu0 %v1409
    %1443 = vmatprep.subr.mxu0 %v1412
    %1444 = vmatpush1.msra.mxu0 %v1411
    %1445 = vmatprep.subr.mxu0 %v1414
    %1446 = vmatpush1.msra.mxu0 %v1413
    %1447 = vmatprep.subr.mxu0 %v1416
    %1448 = vmatpush1.msra.mxu0 %v1415
    %1449 = vmatprep.subr.mxu0 %v1418
    %1450 = vmatpush1.msra.mxu0 %v1417
    %1451 = vmatprep.subr.mxu0 %v1420
    %1452 = vmatpush1.msra.mxu0 %v1419
    %1453 = vmatprep.subr.mxu0 %v1422
    %1454 = vmatpush1.msra.mxu0 %v1421
    %1455 = vmatprep.subr.mxu0 %v1424
    %1456 = vmatpush1.msra.mxu0 %v1423
    %1457 = vmatprep.subr.mxu0 %v1426
    %1458 = vmatpush1.msra.mxu0 %v1425
    %1459 = vmatprep.subr.mxu0 %v1428
    %1460 = vmatpush1.msra.mxu0 %v1427
    %1461 = vmatprep.subr.mxu0 %v1430
    %1462 = vmatpush1.msra.mxu0 %v1429
    %1463 = vmatprep.subr.mxu0 %v1432
    %1464 = vmatpush1.msra.mxu0 %v1431
    %1465 = vmatprep.subr.mxu0 %v1434
    %1466 = vmatpush1.msra.mxu0 %v1433
    %1467 = vmatprep.subr.mxu0 %v1436
    %1468 = vmatpush1.msra.mxu0 %v1435
    %1469 = vmatprep.subr.mxu0 %v1438
    %1470 = vmatpush1.msra.mxu0 %v1437
    %1471 = vmatprep.subr.mxu0 %v1440
    %1472 = vmatpush1.msra.mxu0 %v1439
    %1473 = vmatprep.subr.mxu0 0.0
    %1474 = vmatpush1.msra.mxu0 0.0
    %1475 = vmatprep.subr.mxu0 0.0
    %1476 = vmatpush1.msra.mxu0 0.0
    %1477 = vmatprep.subr.mxu0 0.0
    %1478 = vmatpush1.msra.mxu0 0.0
    %1479 = vmatprep.subr.mxu0 0.0
    %1480 = vmatpush1.msra.mxu0 0.0
    %1481 = vmatprep.subr.mxu0 0.0
    %1482 = vmatpush1.msra.mxu0 0.0
    %1483 = vmatprep.subr.mxu0 0.0
    %1484 = vmatpush1.msra.mxu0 0.0
    %1485 = vmatprep.subr.mxu0 0.0
    %1486 = vmatpush1.msra.mxu0 0.0
    %1487 = vmatprep.subr.mxu0 0.0
    %1488 = vmatpush1.msra.mxu0 0.0
    %1489 = vmatprep.subr.mxu0 0.0
    %1490 = vmatpush1.msra.mxu0 0.0
    %1491 = vmatprep.subr.mxu0 0.0
    %1492 = vmatpush1.msra.mxu0 0.0
    %1493 = vmatprep.subr.mxu0 0.0
    %1494 = vmatpush1.msra.mxu0 0.0
    %1495 = vmatprep.subr.mxu0 0.0
    %1496 = vmatpush1.msra.mxu0 0.0
    %1497 = vmatprep.subr.mxu0 0.0
    %1498 = vmatpush1.msra.mxu0 0.0
    %1499 = vmatprep.subr.mxu0 0.0
    %1500 = vmatpush1.msra.mxu0 0.0
    %1501 = vmatprep.subr.mxu0 0.0
    %1502 = vmatpush1.msra.mxu0 0.0
    %1503 = vmatprep.subr.mxu0 0.0
    %1504 = vmatpush1.msra.mxu0 0.0
    %1505 = vmatprep.mubr.f32.mxu0 0.0
    %1506 = vmatmul.mubr.f32.gmra.mrb[0].mxu0 %v1355
    %v1507 = vpop.f32.mrb[0].mxu0
    %v1508 = vadd.f32 0.0, %v1507
    %v1509 = vpop.f32.mrb[0].mxu0
    %v1510 = vadd.f32 0.0, %v1509
    %1511 = vmatprep.mubr.f32.mxu0 0.0
    %1512 = vmatmul.mubr.f32.gmra.mrb[0].mxu0 %v1357
    %v1513 = vpop.f32.mrb[0].mxu0
    %v1514 = vadd.f32 0.0, %v1513
    %v1515 = vpop.f32.mrb[0].mxu0
    %v1516 = vadd.f32 0.0, %v1515
    %1517 = vmatprep.mubr.f32.mxu0 0.0
    %1518 = vmatmul.mubr.f32.gmra.mrb[0].mxu0 %v1360
    %v1519 = vpop.f32.mrb[0].mxu0
    %v1520 = vadd.f32 0.0, %v1519
    %v1521 = vpop.f32.mrb[0].mxu0
    %v1522 = vadd.f32 0.0, %v1521
    %1523 = vmatprep.mubr.f32.mxu0 0.0
    %1524 = vmatmul.mubr.f32.gmra.mrb[0].mxu0 %v1362
    %v1525 = vpop.f32.mrb[0].mxu0
    %v1526 = vadd.f32 0.0, %v1525
    %v1527 = vpop.f32.mrb[0].mxu0
    %v1528 = vadd.f32 0.0, %v1527
    %1529 = vmatprep.mubr.f32.mxu0 0.0
    %1530 = vmatmul.mubr.f32.gmra.mrb[0].mxu0 %v1365
    %v1531 = vpop.f32.mrb[0].mxu0
    %v1532 = vadd.f32 0.0, %v1531
    %v1533 = vpop.f32.mrb[0].mxu0
    %v1534 = vadd.f32 0.0, %v1533
    %1535 = vmatprep.mubr.f32.mxu0 0.0
    %1536 = vmatmul.mubr.f32.gmra.mrb[0].mxu0 %v1367
    %v1537 = vpop.f32.mrb[0].mxu0
    %v1538 = vadd.f32 0.0, %v1537
    %v1539 = vpop.f32.mrb[0].mxu0
    %v1540 = vadd.f32 0.0, %v1539
    %1541 = vmatprep.mubr.f32.mxu0 0.0
    %1542 = vmatmul.mubr.f32.gmra.mrb[0].mxu0 %v1370
    %v1543 = vpop.f32.mrb[0].mxu0
    %v1544 = vadd.f32 0.0, %v1543
    %v1545 = vpop.f32.mrb[0].mxu0
    %v1546 = vadd.f32 0.0, %v1545
    %1547 = vmatprep.mubr.f32.mxu0 0.0
    %1548 = vmatmul.mubr.f32.gmra.mrb[0].mxu0 %v1372
    %v1549 = vpop.f32.mrb[0].mxu0
    %v1550 = vadd.f32 0.0, %v1549
    %v1551 = vpop.f32.mrb[0].mxu0
    %v1552 = vadd.f32 0.0, %v1551
    %1553 = vmatprep.mubr.f32.mxu0 0.0
    %1554 = vmatmul.mubr.f32.gmra.mrb[0].mxu0 %v1375
    %v1555 = vpop.f32.mrb[0].mxu0
    %v1556 = vadd.f32 0.0, %v1555
    %v1557 = vpop.f32.mrb[0].mxu0
    %v1558 = vadd.f32 0.0, %v1557
    %1559 = vmatprep.mubr.f32.mxu0 0.0
    %1560 = vmatmul.mubr.f32.gmra.mrb[0].mxu0 %v1377
    %v1561 = vpop.f32.mrb[0].mxu0
    %v1562 = vadd.f32 0.0, %v1561
    %v1563 = vpop.f32.mrb[0].mxu0
    %v1564 = vadd.f32 0.0, %v1563
    %1565 = vmatprep.mubr.f32.mxu0 0.0
    %1566 = vmatmul.mubr.f32.gmra.mrb[0].mxu0 %v1380
    %v1567 = vpop.f32.mrb[0].mxu0
    %v1568 = vadd.f32 0.0, %v1567
    %v1569 = vpop.f32.mrb[0].mxu0
    %v1570 = vadd.f32 0.0, %v1569
    %1571 = vmatprep.mubr.f32.mxu0 0.0
    %1572 = vmatmul.mubr.f32.gmra.mrb[0].mxu0 %v1382
    %v1573 = vpop.f32.mrb[0].mxu0
    %v1574 = vadd.f32 0.0, %v1573
    %v1575 = vpop.f32.mrb[0].mxu0
    %v1576 = vadd.f32 0.0, %v1575
    %1577 = vmatprep.mubr.f32.mxu0 0.0
    %1578 = vmatmul.mubr.f32.gmra.mrb[0].mxu0 %v1385
    %v1579 = vpop.f32.mrb[0].mxu0
    %v1580 = vadd.f32 0.0, %v1579
    %v1581 = vpop.f32.mrb[0].mxu0
    %v1582 = vadd.f32 0.0, %v1581
    %1583 = vmatprep.mubr.f32.mxu0 0.0
    %1584 = vmatmul.mubr.f32.gmra.mrb[0].mxu0 %v1387
    %v1585 = vpop.f32.mrb[0].mxu0
    %v1586 = vadd.f32 0.0, %v1585
    %v1587 = vpop.f32.mrb[0].mxu0
    %v1588 = vadd.f32 0.0, %v1587
    %1589 = vmatprep.mubr.f32.mxu0 0.0
    %1590 = vmatmul.mubr.f32.gmra.mrb[0].mxu0 %v1390
    %v1591 = vpop.f32.mrb[0].mxu0
    %v1592 = vadd.f32 0.0, %v1591
    %v1593 = vpop.f32.mrb[0].mxu0
    %v1594 = vadd.f32 0.0, %v1593
    %1595 = vmatprep.mubr.f32.mxu0 0.0
    %1596 = vmatmul.mubr.f32.gmra.mrb[0].mxu0 %v1392
    %v1597 = vpop.f32.mrb[0].mxu0
    %v1598 = vadd.f32 0.0, %v1597
    %v1599 = vpop.f32.mrb[0].mxu0
    %v1600 = vadd.f32 0.0, %v1599
    %1601 = vdwg.mxu0
    %v1602 = vadd.f32 %v1259, %v1508
    %v1603 = vadd.f32 %v1261, %v1510
    %v1604 = vadd.f32 %v1265, %v1514
    %v1605 = vadd.f32 %v1267, %v1516
    %v1606 = vadd.f32 %v1271, %v1520
    %v1607 = vadd.f32 %v1273, %v1522
    %v1608 = vadd.f32 %v1277, %v1526
    %v1609 = vadd.f32 %v1279, %v1528
    %v1610 = vadd.f32 %v1283, %v1532
    %v1611 = vadd.f32 %v1285, %v1534
    %v1612 = vadd.f32 %v1289, %v1538
    %v1613 = vadd.f32 %v1291, %v1540
    %v1614 = vadd.f32 %v1295, %v1544
    %v1615 = vadd.f32 %v1297, %v1546
    %v1616 = vadd.f32 %v1301, %v1550
    %v1617 = vadd.f32 %v1303, %v1552
    %v1618 = vadd.f32 %v1307, %v1556
    %v1619 = vadd.f32 %v1309, %v1558
    %v1620 = vadd.f32 %v1313, %v1562
    %v1621 = vadd.f32 %v1315, %v1564
    %v1622 = vadd.f32 %v1319, %v1568
    %v1623 = vadd.f32 %v1321, %v1570
    %v1624 = vadd.f32 %v1325, %v1574
    %v1625 = vadd.f32 %v1327, %v1576
    %v1626 = vadd.f32 %v1331, %v1580
    %v1627 = vadd.f32 %v1333, %v1582
    %v1628 = vadd.f32 %v1337, %v1586
    %v1629 = vadd.f32 %v1339, %v1588
    %v1630 = vadd.f32 %v1343, %v1592
    %v1631 = vadd.f32 %v1345, %v1594
    %v1632 = vadd.f32 %v1349, %v1598
    %v1633 = vadd.f32 %v1351, %v1600
    %v1634 = vld [vmem:[%s5 + $0x1] sm:$0x3]
    %v1636 = vlaneseq
    %v1637 = vshrl.u32 %v1636, 7
    %v1638 = vsub.s32 0, %v1637
    %v1639 = vrot.slane %v1634, %v1638
    %v1640 = vlaneseq
    %v1641 = vshrl.u32 %v1640, 7
    %v1642 = vsub.s32 1, %v1641
    %v1643 = vrot.slane %v1634, %v1642
    %v1646 = vadd.f32 %v1602, %v1639
    %v1647 = vadd.f32 %v1603, %v1643
    %v1648 = vadd.f32 %v1604, %v1639
    %v1649 = vadd.f32 %v1605, %v1643
    %v1650 = vadd.f32 %v1606, %v1639
    %v1651 = vadd.f32 %v1607, %v1643
    %v1652 = vadd.f32 %v1608, %v1639
    %v1653 = vadd.f32 %v1609, %v1643
    %v1654 = vadd.f32 %v1610, %v1639
    %v1655 = vadd.f32 %v1611, %v1643
    %v1656 = vadd.f32 %v1612, %v1639
    %v1657 = vadd.f32 %v1613, %v1643
    %v1658 = vadd.f32 %v1614, %v1639
    %v1659 = vadd.f32 %v1615, %v1643
    %v1660 = vadd.f32 %v1616, %v1639
    %v1661 = vadd.f32 %v1617, %v1643
    %v1662 = vadd.f32 %v1618, %v1639
    %v1663 = vadd.f32 %v1619, %v1643
    %v1664 = vadd.f32 %v1620, %v1639
    %v1665 = vadd.f32 %v1621, %v1643
    %v1666 = vadd.f32 %v1622, %v1639
    %v1667 = vadd.f32 %v1623, %v1643
    %v1668 = vadd.f32 %v1624, %v1639
    %v1669 = vadd.f32 %v1625, %v1643
    %v1670 = vadd.f32 %v1626, %v1639
    %v1671 = vadd.f32 %v1627, %v1643
    %v1672 = vadd.f32 %v1628, %v1639
    %v1673 = vadd.f32 %v1629, %v1643
    %v1674 = vadd.f32 %v1630, %v1639
    %v1675 = vadd.f32 %v1631, %v1643
    %v1676 = vadd.f32 %v1632, %v1639
    %v1677 = vadd.f32 %v1633, %v1643
    %vm1678 = vcmp.gt.f32.partialorder %v1646, 0.0
    %vm1679 = vcmp.gt.f32.partialorder %v1647, 0.0
    %vm1680 = vcmp.gt.f32.partialorder %v1648, 0.0
    %vm1681 = vcmp.gt.f32.partialorder %v1649, 0.0
    %vm1682 = vcmp.gt.f32.partialorder %v1650, 0.0
    %vm1683 = vcmp.gt.f32.partialorder %v1651, 0.0
    %vm1684 = vcmp.gt.f32.partialorder %v1652, 0.0
    %vm1685 = vcmp.gt.f32.partialorder %v1653, 0.0
    %vm1686 = vcmp.gt.f32.partialorder %v1654, 0.0
    %vm1687 = vcmp.gt.f32.partialorder %v1655, 0.0
    %vm1688 = vcmp.gt.f32.partialorder %v1656, 0.0
    %vm1689 = vcmp.gt.f32.partialorder %v1657, 0.0
    %vm1690 = vcmp.gt.f32.partialorder %v1658, 0.0
    %vm1691 = vcmp.gt.f32.partialorder %v1659, 0.0
    %vm1692 = vcmp.gt.f32.partialorder %v1660, 0.0
    %vm1693 = vcmp.gt.f32.partialorder %v1661, 0.0
    %vm1694 = vcmp.gt.f32.partialorder %v1662, 0.0
    %vm1695 = vcmp.gt.f32.partialorder %v1663, 0.0
    %vm1696 = vcmp.gt.f32.partialorder %v1664, 0.0
    %vm1697 = vcmp.gt.f32.partialorder %v1665, 0.0
    %vm1698 = vcmp.gt.f32.partialorder %v1666, 0.0
    %vm1699 = vcmp.gt.f32.partialorder %v1667, 0.0
    %vm1700 = vcmp.gt.f32.partialorder %v1668, 0.0
    %vm1701 = vcmp.gt.f32.partialorder %v1669, 0.0
    %vm1702 = vcmp.gt.f32.partialorder %v1670, 0.0
    %vm1703 = vcmp.gt.f32.partialorder %v1671, 0.0
    %vm1704 = vcmp.gt.f32.partialorder %v1672, 0.0
    %vm1705 = vcmp.gt.f32.partialorder %v1673, 0.0
    %vm1706 = vcmp.gt.f32.partialorder %v1674, 0.0
    %vm1707 = vcmp.gt.f32.partialorder %v1675, 0.0
    %vm1708 = vcmp.gt.f32.partialorder %v1676, 0.0
    %vm1709 = vcmp.gt.f32.partialorder %v1677, 0.0
    %v1710 = vmul.f32 %v1646, 0.01
    %v1711 = vmul.f32 %v1647, 0.01
    %v1712 = vmul.f32 %v1648, 0.01
    %v1713 = vmul.f32 %v1649, 0.01
    %v1714 = vmul.f32 %v1650, 0.01
    %v1715 = vmul.f32 %v1651, 0.01
    %v1716 = vmul.f32 %v1652, 0.01
    %v1717 = vmul.f32 %v1653, 0.01
    %v1718 = vmul.f32 %v1654, 0.01
    %v1719 = vmul.f32 %v1655, 0.01
    %v1720 = vmul.f32 %v1656, 0.01
    %v1721 = vmul.f32 %v1657, 0.01
    %v1722 = vmul.f32 %v1658, 0.01
    %v1723 = vmul.f32 %v1659, 0.01
    %v1724 = vmul.f32 %v1660, 0.01
    %v1725 = vmul.f32 %v1661, 0.01
    %v1726 = vmul.f32 %v1662, 0.01
    %v1727 = vmul.f32 %v1663, 0.01
    %v1728 = vmul.f32 %v1664, 0.01
    %v1729 = vmul.f32 %v1665, 0.01
    %v1730 = vmul.f32 %v1666, 0.01
    %v1731 = vmul.f32 %v1667, 0.01
    %v1732 = vmul.f32 %v1668, 0.01
    %v1733 = vmul.f32 %v1669, 0.01
    %v1734 = vmul.f32 %v1670, 0.01
    %v1735 = vmul.f32 %v1671, 0.01
    %v1736 = vmul.f32 %v1672, 0.01
    %v1737 = vmul.f32 %v1673, 0.01
    %v1738 = vmul.f32 %v1674, 0.01
    %v1739 = vmul.f32 %v1675, 0.01
    %v1740 = vmul.f32 %v1676, 0.01
    %v1741 = vmul.f32 %v1677, 0.01
    %v1742 = vsel %vm1678, %v1646, %v1710
    %v1743 = vsel %vm1679, %v1647, %v1711
    %v1744 = vsel %vm1680, %v1648, %v1712
    %v1745 = vsel %vm1681, %v1649, %v1713
    %v1746 = vsel %vm1682, %v1650, %v1714
    %v1747 = vsel %vm1683, %v1651, %v1715
    %v1748 = vsel %vm1684, %v1652, %v1716
    %v1749 = vsel %vm1685, %v1653, %v1717
    %v1750 = vsel %vm1686, %v1654, %v1718
    %v1751 = vsel %vm1687, %v1655, %v1719
    %v1752 = vsel %vm1688, %v1656, %v1720
    %v1753 = vsel %vm1689, %v1657, %v1721
    %v1754 = vsel %vm1690, %v1658, %v1722
    %v1755 = vsel %vm1691, %v1659, %v1723
    %v1756 = vsel %vm1692, %v1660, %v1724
    %v1757 = vsel %vm1693, %v1661, %v1725
    %v1758 = vsel %vm1694, %v1662, %v1726
    %v1759 = vsel %vm1695, %v1663, %v1727
    %v1760 = vsel %vm1696, %v1664, %v1728
    %v1761 = vsel %vm1697, %v1665, %v1729
    %v1762 = vsel %vm1698, %v1666, %v1730
    %v1763 = vsel %vm1699, %v1667, %v1731
    %v1764 = vsel %vm1700, %v1668, %v1732
    %v1765 = vsel %vm1701, %v1669, %v1733
    %v1766 = vsel %vm1702, %v1670, %v1734
    %v1767 = vsel %vm1703, %v1671, %v1735
    %v1768 = vsel %vm1704, %v1672, %v1736
    %v1769 = vsel %vm1705, %v1673, %v1737
    %v1770 = vsel %vm1706, %v1674, %v1738
    %v1771 = vsel %vm1707, %v1675, %v1739
    %v1772 = vsel %vm1708, %v1676, %v1740
    %v1773 = vsel %vm1709, %v1677, %v1741
    %v1806 = vrot.slane %v1742, 7
    %v1807 = vrot.slane %v1743, 7
    %v1808 = vrot.slane %v1744, 7
    %v1809 = vsel %vm830, %v1806, %v1808
    %v1810 = vrot.slane %v1745, 7
    %v1811 = vsel %vm830, %v1807, %v1810
    %v1812 = vrot.slane %v1746, 7
    %v1813 = vrot.slane %v1747, 7
    %v1814 = vrot.slane %v1748, 7
    %v1815 = vsel %vm830, %v1812, %v1814
    %v1816 = vrot.slane %v1749, 7
    %v1817 = vsel %vm830, %v1813, %v1816
    %v1818 = vrot.slane %v1750, 7
    %v1819 = vrot.slane %v1751, 7
    %v1820 = vrot.slane %v1752, 7
    %v1821 = vsel %vm830, %v1818, %v1820
    %v1822 = vrot.slane %v1753, 7
    %v1823 = vsel %vm830, %v1819, %v1822
    %v1824 = vrot.slane %v1754, 7
    %v1825 = vrot.slane %v1755, 7
    %v1826 = vrot.slane %v1756, 7
    %v1827 = vsel %vm830, %v1824, %v1826
    %v1828 = vrot.slane %v1757, 7
    %v1829 = vsel %vm830, %v1825, %v1828
    %v1830 = vrot.slane %v1758, 7
    %v1831 = vrot.slane %v1759, 7
    %v1832 = vrot.slane %v1760, 7
    %v1833 = vsel %vm830, %v1830, %v1832
    %v1834 = vrot.slane %v1761, 7
    %v1835 = vsel %vm830, %v1831, %v1834
    %v1836 = vrot.slane %v1762, 7
    %v1837 = vrot.slane %v1763, 7
    %v1838 = vrot.slane %v1764, 7
    %v1839 = vsel %vm830, %v1836, %v1838
    %v1840 = vrot.slane %v1765, 7
    %v1841 = vsel %vm830, %v1837, %v1840
    %v1842 = vrot.slane %v1766, 7
    %v1843 = vrot.slane %v1767, 7
    %v1844 = vrot.slane %v1768, 7
    %v1845 = vsel %vm830, %v1842, %v1844
    %v1846 = vrot.slane %v1769, 7
    %v1847 = vsel %vm830, %v1843, %v1846
    %v1848 = vrot.slane %v1770, 7
    %v1849 = vrot.slane %v1771, 7
    %v1850 = vrot.slane %v1772, 7
    %v1851 = vsel %vm830, %v1848, %v1850
    %v1852 = vrot.slane %v1773, 7
    %v1853 = vsel %vm830, %v1849, %v1852
    %v1902 = vsel %vm830, 0.0, %v1806
    %v1903 = vsel %vm830, 0.0, %v1807
    %v1904 = vsel %vm830, 0.0, %v1812
    %v1905 = vsel %vm830, 0.0, %v1813
    %v1906 = vsel %vm830, 0.0, %v1818
    %v1907 = vsel %vm830, 0.0, %v1819
    %v1908 = vsel %vm830, 0.0, %v1824
    %v1909 = vsel %vm830, 0.0, %v1825
    %v1910 = vsel %vm830, 0.0, %v1830
    %v1911 = vsel %vm830, 0.0, %v1831
    %v1912 = vsel %vm830, 0.0, %v1836
    %v1913 = vsel %vm830, 0.0, %v1837
    %v1914 = vsel %vm830, 0.0, %v1842
    %v1915 = vsel %vm830, 0.0, %v1843
    %v1916 = vsel %vm830, 0.0, %v1848
    %v1917 = vsel %vm830, 0.0, %v1849
    %v1918 = vsel %vm830, %v1808, 0.0
    %v1919 = vsel %vm830, %v1810, 0.0
    %v1920 = vsel %vm830, %v1814, 0.0
    %v1921 = vsel %vm830, %v1816, 0.0
    %v1922 = vsel %vm830, %v1820, 0.0
    %v1923 = vsel %vm830, %v1822, 0.0
    %v1924 = vsel %vm830, %v1826, 0.0
    %v1925 = vsel %vm830, %v1828, 0.0
    %v1926 = vsel %vm830, %v1832, 0.0
    %v1927 = vsel %vm830, %v1834, 0.0
    %v1928 = vsel %vm830, %v1838, 0.0
    %v1929 = vsel %vm830, %v1840, 0.0
    %v1930 = vsel %vm830, %v1844, 0.0
    %v1931 = vsel %vm830, %v1846, 0.0
    %v1932 = vsel %vm830, %v1850, 0.0
    %v1933 = vsel %vm830, %v1852, 0.0
    %v1934 = vld [vmem:[#allocation7] sm:$0xff]
    %v1935 = vld [vmem:[#allocation7 + $0x8] sm:$0xff]
    %v1936 = vld [vmem:[#allocation7 + $0x10] sm:$0xff]
    %v1937 = vld [vmem:[#allocation7 + $0x18] sm:$0xff]
    %v1938 = vld [vmem:[#allocation7 + $0x20] sm:$0xff]
    %v1939 = vld [vmem:[#allocation7 + $0x28] sm:$0xff]
    %v1940 = vld [vmem:[#allocation7 + $0x30] sm:$0xff]
    %v1941 = vld [vmem:[#allocation7 + $0x38] sm:$0xff]
    %v1942 = vld [vmem:[#allocation7 + $0x40] sm:$0xff]
    %v1943 = vld [vmem:[#allocation7 + $0x48] sm:$0xff]
    %v1944 = vld [vmem:[#allocation7 + $0x50] sm:$0xff]
    %v1945 = vld [vmem:[#allocation7 + $0x58] sm:$0xff]
    %v1946 = vld [vmem:[#allocation7 + $0x60] sm:$0xff]
    %v1947 = vld [vmem:[#allocation7 + $0x68] sm:$0xff]
    %v1948 = vld [vmem:[#allocation7 + $0x70] sm:$0xff]
    %v1949 = vld [vmem:[#allocation7 + $0x78] sm:$0xff]
    %v1950 = vld [vmem:[#allocation7 + $0x80] sm:$0xff]
    %v1951 = vld [vmem:[#allocation7 + $0x88] sm:$0xff]
    %v1952 = vld [vmem:[#allocation7 + $0x90] sm:$0xff]
    %v1953 = vld [vmem:[#allocation7 + $0x98] sm:$0xff]
    %v1954 = vld [vmem:[#allocation7 + $0xa0] sm:$0xff]
    %v1955 = vld [vmem:[#allocation7 + $0xa8] sm:$0xff]
    %v1956 = vld [vmem:[#allocation7 + $0xb0] sm:$0xff]
    %v1957 = vld [vmem:[#allocation7 + $0xb8] sm:$0xff]
    %v1958 = vld [vmem:[#allocation7 + $0xc0] sm:$0xff]
    %v1959 = vld [vmem:[#allocation7 + $0xc8] sm:$0xff]
    %v1960 = vld [vmem:[#allocation7 + $0xd0] sm:$0xff]
    %v1961 = vld [vmem:[#allocation7 + $0xd8] sm:$0xff]
    %v1962 = vld [vmem:[#allocation7 + $0xe0] sm:$0xff]
    %v1963 = vld [vmem:[#allocation7 + $0xe8] sm:$0xff]
    %v1964 = vld [vmem:[#allocation7 + $0xf0] sm:$0xff]
    %v1965 = vld [vmem:[#allocation7 + $0xf8] sm:$0xff]
    %v1966 = vld [vmem:[#allocation7 + $0x100] sm:$0xff]
    %v1967 = vld [vmem:[#allocation7 + $0x108] sm:$0xff]
    %v1968 = vld [vmem:[#allocation7 + $0x110] sm:$0xff]
    %v1969 = vld [vmem:[#allocation7 + $0x118] sm:$0xff]
    %v1970 = vld [vmem:[#allocation7 + $0x120] sm:$0xff]
    %v1971 = vld [vmem:[#allocation7 + $0x128] sm:$0xff]
    %v1972 = vld [vmem:[#allocation7 + $0x130] sm:$0xff]
    %v1973 = vld [vmem:[#allocation7 + $0x138] sm:$0xff]
    %v1974 = vld [vmem:[#allocation7 + $0x140] sm:$0xff]
    %v1975 = vld [vmem:[#allocation7 + $0x148] sm:$0xff]
    %v1976 = vld [vmem:[#allocation7 + $0x150] sm:$0xff]
    %v1977 = vld [vmem:[#allocation7 + $0x158] sm:$0xff]
    %v1978 = vld [vmem:[#allocation7 + $0x160] sm:$0xff]
    %v1979 = vld [vmem:[#allocation7 + $0x168] sm:$0xff]
    %v1980 = vld [vmem:[#allocation7 + $0x170] sm:$0xff]
    %v1981 = vld [vmem:[#allocation7 + $0x178] sm:$0xff]
    %v1982 = vld [vmem:[#allocation7 + $0x180] sm:$0xff]
    %v1983 = vld [vmem:[#allocation7 + $0x188] sm:$0xff]
    %v1984 = vld [vmem:[#allocation7 + $0x190] sm:$0xff]
    %v1985 = vld [vmem:[#allocation7 + $0x198] sm:$0xff]
    %v1986 = vld [vmem:[#allocation7 + $0x1a0] sm:$0xff]
    %v1987 = vld [vmem:[#allocation7 + $0x1a8] sm:$0xff]
    %v1988 = vld [vmem:[#allocation7 + $0x1b0] sm:$0xff]
    %v1989 = vld [vmem:[#allocation7 + $0x1b8] sm:$0xff]
    %v1990 = vld [vmem:[#allocation7 + $0x1c0] sm:$0xff]
    %v1991 = vld [vmem:[#allocation7 + $0x1c8] sm:$0xff]
    %v1992 = vld [vmem:[#allocation7 + $0x1d0] sm:$0xff]
    %v1993 = vld [vmem:[#allocation7 + $0x1d8] sm:$0xff]
    %v1994 = vld [vmem:[#allocation7 + $0x1e0] sm:$0xff]
    %v1995 = vld [vmem:[#allocation7 + $0x1e8] sm:$0xff]
    %v1996 = vld [vmem:[#allocation7 + $0x1f0] sm:$0xff]
    %v1997 = vld [vmem:[#allocation7 + $0x1f8] sm:$0xff]
    %v2030 = vrot.slane %v1902, 1
    %v2031 = vrot.slane %v1809, 1
    %v2032 = vsel %vm146, %v2030, %v2031
    %v2033 = vrot.slane %v1903, 1
    %v2034 = vrot.slane %v1811, 1
    %v2035 = vsel %vm146, %v2033, %v2034
    %v2036 = vrot.slane %v1918, 1
    %v2037 = vsel %vm146, %v2031, %v2036
    %v2038 = vrot.slane %v1919, 1
    %v2039 = vsel %vm146, %v2034, %v2038
    %v2040 = vrot.slane %v1904, 1
    %v2041 = vrot.slane %v1815, 1
    %v2042 = vsel %vm146, %v2040, %v2041
    %v2043 = vrot.slane %v1905, 1
    %v2044 = vrot.slane %v1817, 1
    %v2045 = vsel %vm146, %v2043, %v2044
    %v2046 = vrot.slane %v1920, 1
    %v2047 = vsel %vm146, %v2041, %v2046
    %v2048 = vrot.slane %v1921, 1
    %v2049 = vsel %vm146, %v2044, %v2048
    %v2050 = vrot.slane %v1906, 1
    %v2051 = vrot.slane %v1821, 1
    %v2052 = vsel %vm146, %v2050, %v2051
    %v2053 = vrot.slane %v1907, 1
    %v2054 = vrot.slane %v1823, 1
    %v2055 = vsel %vm146, %v2053, %v2054
    %v2056 = vrot.slane %v1922, 1
    %v2057 = vsel %vm146, %v2051, %v2056
    %v2058 = vrot.slane %v1923, 1
    %v2059 = vsel %vm146, %v2054, %v2058
    %v2060 = vrot.slane %v1908, 1
    %v2061 = vrot.slane %v1827, 1
    %v2062 = vsel %vm146, %v2060, %v2061
    %v2063 = vrot.slane %v1909, 1
    %v2064 = vrot.slane %v1829, 1
    %v2065 = vsel %vm146, %v2063, %v2064
    %v2066 = vrot.slane %v1924, 1
    %v2067 = vsel %vm146, %v2061, %v2066
    %v2068 = vrot.slane %v1925, 1
    %v2069 = vsel %vm146, %v2064, %v2068
    %v2070 = vrot.slane %v1910, 1
    %v2071 = vrot.slane %v1833, 1
    %v2072 = vsel %vm146, %v2070, %v2071
    %v2073 = vrot.slane %v1911, 1
    %v2074 = vrot.slane %v1835, 1
    %v2075 = vsel %vm146, %v2073, %v2074
    %v2076 = vrot.slane %v1926, 1
    %v2077 = vsel %vm146, %v2071, %v2076
    %v2078 = vrot.slane %v1927, 1
    %v2079 = vsel %vm146, %v2074, %v2078
    %v2080 = vrot.slane %v1912, 1
    %v2081 = vrot.slane %v1839, 1
    %v2082 = vsel %vm146, %v2080, %v2081
    %v2083 = vrot.slane %v1913, 1
    %v2084 = vrot.slane %v1841, 1
    %v2085 = vsel %vm146, %v2083, %v2084
    %v2086 = vrot.slane %v1928, 1
    %v2087 = vsel %vm146, %v2081, %v2086
    %v2088 = vrot.slane %v1929, 1
    %v2089 = vsel %vm146, %v2084, %v2088
    %v2090 = vrot.slane %v1914, 1
    %v2091 = vrot.slane %v1845, 1
    %v2092 = vsel %vm146, %v2090, %v2091
    %v2093 = vrot.slane %v1915, 1
    %v2094 = vrot.slane %v1847, 1
    %v2095 = vsel %vm146, %v2093, %v2094
    %v2096 = vrot.slane %v1930, 1
    %v2097 = vsel %vm146, %v2091, %v2096
    %v2098 = vrot.slane %v1931, 1
    %v2099 = vsel %vm146, %v2094, %v2098
    %v2100 = vrot.slane %v1916, 1
    %v2101 = vrot.slane %v1851, 1
    %v2102 = vsel %vm146, %v2100, %v2101
    %v2103 = vrot.slane %v1917, 1
    %v2104 = vrot.slane %v1853, 1
    %v2105 = vsel %vm146, %v2103, %v2104
    %v2106 = vrot.slane %v1932, 1
    %v2107 = vsel %vm146, %v2101, %v2106
    %v2108 = vrot.slane %v1933, 1
    %v2109 = vsel %vm146, %v2104, %v2108
    %v2142 = vld [vmem:[#allocation7 + $0x200] sm:$0xff]
    %v2143 = vld [vmem:[#allocation7 + $0x208] sm:$0xff]
    %v2144 = vld [vmem:[#allocation7 + $0x210] sm:$0xff]
    %v2145 = vld [vmem:[#allocation7 + $0x218] sm:$0xff]
    %v2146 = vld [vmem:[#allocation7 + $0x220] sm:$0xff]
    %v2147 = vld [vmem:[#allocation7 + $0x228] sm:$0xff]
    %v2148 = vld [vmem:[#allocation7 + $0x230] sm:$0xff]
    %v2149 = vld [vmem:[#allocation7 + $0x238] sm:$0xff]
    %v2150 = vld [vmem:[#allocation7 + $0x240] sm:$0xff]
    %v2151 = vld [vmem:[#allocation7 + $0x248] sm:$0xff]
    %v2152 = vld [vmem:[#allocation7 + $0x250] sm:$0xff]
    %v2153 = vld [vmem:[#allocation7 + $0x258] sm:$0xff]
    %v2154 = vld [vmem:[#allocation7 + $0x260] sm:$0xff]
    %v2155 = vld [vmem:[#allocation7 + $0x268] sm:$0xff]
    %v2156 = vld [vmem:[#allocation7 + $0x270] sm:$0xff]
    %v2157 = vld [vmem:[#allocation7 + $0x278] sm:$0xff]
    %v2158 = vld [vmem:[#allocation7 + $0x280] sm:$0xff]
    %v2159 = vld [vmem:[#allocation7 + $0x288] sm:$0xff]
    %v2160 = vld [vmem:[#allocation7 + $0x290] sm:$0xff]
    %v2161 = vld [vmem:[#allocation7 + $0x298] sm:$0xff]
    %v2162 = vld [vmem:[#allocation7 + $0x2a0] sm:$0xff]
    %v2163 = vld [vmem:[#allocation7 + $0x2a8] sm:$0xff]
    %v2164 = vld [vmem:[#allocation7 + $0x2b0] sm:$0xff]
    %v2165 = vld [vmem:[#allocation7 + $0x2b8] sm:$0xff]
    %v2166 = vld [vmem:[#allocation7 + $0x2c0] sm:$0xff]
    %v2167 = vld [vmem:[#allocation7 + $0x2c8] sm:$0xff]
    %v2168 = vld [vmem:[#allocation7 + $0x2d0] sm:$0xff]
    %v2169 = vld [vmem:[#allocation7 + $0x2d8] sm:$0xff]
    %v2170 = vld [vmem:[#allocation7 + $0x2e0] sm:$0xff]
    %v2171 = vld [vmem:[#allocation7 + $0x2e8] sm:$0xff]
    %v2172 = vld [vmem:[#allocation7 + $0x2f0] sm:$0xff]
    %v2173 = vld [vmem:[#allocation7 + $0x2f8] sm:$0xff]
    %v2174 = vld [vmem:[#allocation7 + $0x300] sm:$0xff]
    %v2175 = vld [vmem:[#allocation7 + $0x308] sm:$0xff]
    %v2176 = vld [vmem:[#allocation7 + $0x310] sm:$0xff]
    %v2177 = vld [vmem:[#allocation7 + $0x318] sm:$0xff]
    %v2178 = vld [vmem:[#allocation7 + $0x320] sm:$0xff]
    %v2179 = vld [vmem:[#allocation7 + $0x328] sm:$0xff]
    %v2180 = vld [vmem:[#allocation7 + $0x330] sm:$0xff]
    %v2181 = vld [vmem:[#allocation7 + $0x338] sm:$0xff]
    %v2182 = vld [vmem:[#allocation7 + $0x340] sm:$0xff]
    %v2183 = vld [vmem:[#allocation7 + $0x348] sm:$0xff]
    %v2184 = vld [vmem:[#allocation7 + $0x350] sm:$0xff]
    %v2185 = vld [vmem:[#allocation7 + $0x358] sm:$0xff]
    %v2186 = vld [vmem:[#allocation7 + $0x360] sm:$0xff]
    %v2187 = vld [vmem:[#allocation7 + $0x368] sm:$0xff]
    %v2188 = vld [vmem:[#allocation7 + $0x370] sm:$0xff]
    %v2189 = vld [vmem:[#allocation7 + $0x378] sm:$0xff]
    %v2190 = vld [vmem:[#allocation7 + $0x380] sm:$0xff]
    %v2191 = vld [vmem:[#allocation7 + $0x388] sm:$0xff]
    %v2192 = vld [vmem:[#allocation7 + $0x390] sm:$0xff]
    %v2193 = vld [vmem:[#allocation7 + $0x398] sm:$0xff]
    %v2194 = vld [vmem:[#allocation7 + $0x3a0] sm:$0xff]
    %v2195 = vld [vmem:[#allocation7 + $0x3a8] sm:$0xff]
    %v2196 = vld [vmem:[#allocation7 + $0x3b0] sm:$0xff]
    %v2197 = vld [vmem:[#allocation7 + $0x3b8] sm:$0xff]
    %v2198 = vld [vmem:[#allocation7 + $0x3c0] sm:$0xff]
    %v2199 = vld [vmem:[#allocation7 + $0x3c8] sm:$0xff]
    %v2200 = vld [vmem:[#allocation7 + $0x3d0] sm:$0xff]
    %v2201 = vld [vmem:[#allocation7 + $0x3d8] sm:$0xff]
    %v2202 = vld [vmem:[#allocation7 + $0x3e0] sm:$0xff]
    %v2203 = vld [vmem:[#allocation7 + $0x3e8] sm:$0xff]
    %v2204 = vld [vmem:[#allocation7 + $0x3f0] sm:$0xff]
    %v2205 = vld [vmem:[#allocation7 + $0x3f8] sm:$0xff]
    %2206 = vmatprep.subr.mxu0 %v2143
    %2207 = vmatpush1.msra.mxu0 %v2142
    %2208 = vmatprep.subr.mxu0 %v2145
    %2209 = vmatpush1.msra.mxu0 %v2144
    %2210 = vmatprep.subr.mxu0 %v2147
    %2211 = vmatpush1.msra.mxu0 %v2146
    %2212 = vmatprep.subr.mxu0 %v2149
    %2213 = vmatpush1.msra.mxu0 %v2148
    %2214 = vmatprep.subr.mxu0 %v2151
    %2215 = vmatpush1.msra.mxu0 %v2150
    %2216 = vmatprep.subr.mxu0 %v2153
    %2217 = vmatpush1.msra.mxu0 %v2152
    %2218 = vmatprep.subr.mxu0 %v2155
    %2219 = vmatpush1.msra.mxu0 %v2154
    %2220 = vmatprep.subr.mxu0 %v2157
    %2221 = vmatpush1.msra.mxu0 %v2156
    %2222 = vmatprep.subr.mxu0 %v2159
    %2223 = vmatpush1.msra.mxu0 %v2158
    %2224 = vmatprep.subr.mxu0 %v2161
    %2225 = vmatpush1.msra.mxu0 %v2160
    %2226 = vmatprep.subr.mxu0 %v2163
    %2227 = vmatpush1.msra.mxu0 %v2162
    %2228 = vmatprep.subr.mxu0 %v2165
    %2229 = vmatpush1.msra.mxu0 %v2164
    %2230 = vmatprep.subr.mxu0 %v2167
    %2231 = vmatpush1.msra.mxu0 %v2166
    %2232 = vmatprep.subr.mxu0 %v2169
    %2233 = vmatpush1.msra.mxu0 %v2168
    %2234 = vmatprep.subr.mxu0 %v2171
    %2235 = vmatpush1.msra.mxu0 %v2170
    %2236 = vmatprep.subr.mxu0 %v2173
    %2237 = vmatpush1.msra.mxu0 %v2172
    %2238 = vmatprep.subr.mxu0 %v2175
    %2239 = vmatpush1.msra.mxu0 %v2174
    %2240 = vmatprep.subr.mxu0 %v2177
    %2241 = vmatpush1.msra.mxu0 %v2176
    %2242 = vmatprep.subr.mxu0 %v2179
    %2243 = vmatpush1.msra.mxu0 %v2178
    %2244 = vmatprep.subr.mxu0 %v2181
    %2245 = vmatpush1.msra.mxu0 %v2180
    %2246 = vmatprep.subr.mxu0 %v2183
    %2247 = vmatpush1.msra.mxu0 %v2182
    %2248 = vmatprep.subr.mxu0 %v2185
    %2249 = vmatpush1.msra.mxu0 %v2184
    %2250 = vmatprep.subr.mxu0 %v2187
    %2251 = vmatpush1.msra.mxu0 %v2186
    %2252 = vmatprep.subr.mxu0 %v2189
    %2253 = vmatpush1.msra.mxu0 %v2188
    %2254 = vmatprep.subr.mxu0 %v2191
    %2255 = vmatpush1.msra.mxu0 %v2190
    %2256 = vmatprep.subr.mxu0 %v2193
    %2257 = vmatpush1.msra.mxu0 %v2192
    %2258 = vmatprep.subr.mxu0 %v2195
    %2259 = vmatpush1.msra.mxu0 %v2194
    %2260 = vmatprep.subr.mxu0 %v2197
    %2261 = vmatpush1.msra.mxu0 %v2196
    %2262 = vmatprep.subr.mxu0 %v2199
    %2263 = vmatpush1.msra.mxu0 %v2198
    %2264 = vmatprep.subr.mxu0 %v2201
    %2265 = vmatpush1.msra.mxu0 %v2200
    %2266 = vmatprep.subr.mxu0 %v2203
    %2267 = vmatpush1.msra.mxu0 %v2202
    %2268 = vmatprep.subr.mxu0 %v2205
    %2269 = vmatpush1.msra.mxu0 %v2204
    %2270 = vmatprep.mubr.f32.mxu0 %v2035
    %2271 = vmatmul.mubr.f32.gmra.mrb[0].mxu0 %v2032
    %v2272 = vpop.f32.mrb[0].mxu0
    %v2273 = vadd.f32 0.0, %v2272
    %v2274 = vpop.f32.mrb[0].mxu0
    %v2275 = vadd.f32 0.0, %v2274
    %2276 = vmatprep.mubr.f32.mxu0 %v2039
    %2277 = vmatmul.mubr.f32.gmra.mrb[0].mxu0 %v2037
    %v2278 = vpop.f32.mrb[0].mxu0
    %v2279 = vadd.f32 0.0, %v2278
    %v2280 = vpop.f32.mrb[0].mxu0
    %v2281 = vadd.f32 0.0, %v2280
    %2282 = vmatprep.mubr.f32.mxu0 %v2045
    %2283 = vmatmul.mubr.f32.gmra.mrb[0].mxu0 %v2042
    %v2284 = vpop.f32.mrb[0].mxu0
    %v2285 = vadd.f32 0.0, %v2284
    %v2286 = vpop.f32.mrb[0].mxu0
    %v2287 = vadd.f32 0.0, %v2286
    %2288 = vmatprep.mubr.f32.mxu0 %v2049
    %2289 = vmatmul.mubr.f32.gmra.mrb[0].mxu0 %v2047
    %v2290 = vpop.f32.mrb[0].mxu0
    %v2291 = vadd.f32 0.0, %v2290
    %v2292 = vpop.f32.mrb[0].mxu0
    %v2293 = vadd.f32 0.0, %v2292
    %2294 = vmatprep.mubr.f32.mxu0 %v2055
    %2295 = vmatmul.mubr.f32.gmra.mrb[0].mxu0 %v2052
    %v2296 = vpop.f32.mrb[0].mxu0
    %v2297 = vadd.f32 0.0, %v2296
    %v2298 = vpop.f32.mrb[0].mxu0
    %v2299 = vadd.f32 0.0, %v2298
    %2300 = vmatprep.mubr.f32.mxu0 %v2059
    %2301 = vmatmul.mubr.f32.gmra.mrb[0].mxu0 %v2057
    %v2302 = vpop.f32.mrb[0].mxu0
    %v2303 = vadd.f32 0.0, %v2302
    %v2304 = vpop.f32.mrb[0].mxu0
    %v2305 = vadd.f32 0.0, %v2304
    %2306 = vmatprep.mubr.f32.mxu0 %v2065
    %2307 = vmatmul.mubr.f32.gmra.mrb[0].mxu0 %v2062
    %v2308 = vpop.f32.mrb[0].mxu0
    %v2309 = vadd.f32 0.0, %v2308
    %v2310 = vpop.f32.mrb[0].mxu0
    %v2311 = vadd.f32 0.0, %v2310
    %2312 = vmatprep.mubr.f32.mxu0 %v2069
    %2313 = vmatmul.mubr.f32.gmra.mrb[0].mxu0 %v2067
    %v2314 = vpop.f32.mrb[0].mxu0
    %v2315 = vadd.f32 0.0, %v2314
    %v2316 = vpop.f32.mrb[0].mxu0
    %v2317 = vadd.f32 0.0, %v2316
    %2318 = vmatprep.mubr.f32.mxu0 %v2075
    %2319 = vmatmul.mubr.f32.gmra.mrb[0].mxu0 %v2072
    %v2320 = vpop.f32.mrb[0].mxu0
    %v2321 = vadd.f32 0.0, %v2320
    %v2322 = vpop.f32.mrb[0].mxu0
    %v2323 = vadd.f32 0.0, %v2322
    %2324 = vmatprep.mubr.f32.mxu0 %v2079
    %2325 = vmatmul.mubr.f32.gmra.mrb[0].mxu0 %v2077
    %v2326 = vpop.f32.mrb[0].mxu0
    %v2327 = vadd.f32 0.0, %v2326
    %v2328 = vpop.f32.mrb[0].mxu0
    %v2329 = vadd.f32 0.0, %v2328
    %2330 = vmatprep.mubr.f32.mxu0 %v2085
    %2331 = vmatmul.mubr.f32.gmra.mrb[0].mxu0 %v2082
    %v2332 = vpop.f32.mrb[0].mxu0
    %v2333 = vadd.f32 0.0, %v2332
    %v2334 = vpop.f32.mrb[0].mxu0
    %v2335 = vadd.f32 0.0, %v2334
    %2336 = vmatprep.mubr.f32.mxu0 %v2089
    %2337 = vmatmul.mubr.f32.gmra.mrb[0].mxu0 %v2087
    %v2338 = vpop.f32.mrb[0].mxu0
    %v2339 = vadd.f32 0.0, %v2338
    %v2340 = vpop.f32.mrb[0].mxu0
    %v2341 = vadd.f32 0.0, %v2340
    %2342 = vmatprep.mubr.f32.mxu0 %v2095
    %2343 = vmatmul.mubr.f32.gmra.mrb[0].mxu0 %v2092
    %v2344 = vpop.f32.mrb[0].mxu0
    %v2345 = vadd.f32 0.0, %v2344
    %v2346 = vpop.f32.mrb[0].mxu0
    %v2347 = vadd.f32 0.0, %v2346
    %2348 = vmatprep.mubr.f32.mxu0 %v2099
    %2349 = vmatmul.mubr.f32.gmra.mrb[0].mxu0 %v2097
    %v2350 = vpop.f32.mrb[0].mxu0
    %v2351 = vadd.f32 0.0, %v2350
    %v2352 = vpop.f32.mrb[0].mxu0
    %v2353 = vadd.f32 0.0, %v2352
    %2354 = vmatprep.mubr.f32.mxu0 %v2105
    %2355 = vmatmul.mubr.f32.gmra.mrb[0].mxu0 %v2102
    %v2356 = vpop.f32.mrb[0].mxu0
    %v2357 = vadd.f32 0.0, %v2356
    %v2358 = vpop.f32.mrb[0].mxu0
    %v2359 = vadd.f32 0.0, %v2358
    %2360 = vmatprep.mubr.f32.mxu0 %v2109
    %2361 = vmatmul.mubr.f32.gmra.mrb[0].mxu0 %v2107
    %v2362 = vpop.f32.mrb[0].mxu0
    %v2363 = vadd.f32 0.0, %v2362
    %v2364 = vpop.f32.mrb[0].mxu0
    %v2365 = vadd.f32 0.0, %v2364
    %2366 = vdwg.mxu0
    %2367 = vmatprep.subr.mxu0 %v1935
    %2368 = vmatpush1.msra.mxu0 %v1934
    %2369 = vmatprep.subr.mxu0 %v1937
    %2370 = vmatpush1.msra.mxu0 %v1936
    %2371 = vmatprep.subr.mxu0 %v1939
    %2372 = vmatpush1.msra.mxu0 %v1938
    %2373 = vmatprep.subr.mxu0 %v1941
    %2374 = vmatpush1.msra.mxu0 %v1940
    %2375 = vmatprep.subr.mxu0 %v1943
    %2376 = vmatpush1.msra.mxu0 %v1942
    %2377 = vmatprep.subr.mxu0 %v1945
    %2378 = vmatpush1.msra.mxu0 %v1944
    %2379 = vmatprep.subr.mxu0 %v1947
    %2380 = vmatpush1.msra.mxu0 %v1946
    %2381 = vmatprep.subr.mxu0 %v1949
    %2382 = vmatpush1.msra.mxu0 %v1948
    %2383 = vmatprep.subr.mxu0 %v1951
    %2384 = vmatpush1.msra.mxu0 %v1950
    %2385 = vmatprep.subr.mxu0 %v1953
    %2386 = vmatpush1.msra.mxu0 %v1952
    %2387 = vmatprep.subr.mxu0 %v1955
    %2388 = vmatpush1.msra.mxu0 %v1954
    %2389 = vmatprep.subr.mxu0 %v1957
    %2390 = vmatpush1.msra.mxu0 %v1956
    %2391 = vmatprep.subr.mxu0 %v1959
    %2392 = vmatpush1.msra.mxu0 %v1958
    %2393 = vmatprep.subr.mxu0 %v1961
    %2394 = vmatpush1.msra.mxu0 %v1960
    %2395 = vmatprep.subr.mxu0 %v1963
    %2396 = vmatpush1.msra.mxu0 %v1962
    %2397 = vmatprep.subr.mxu0 %v1965
    %2398 = vmatpush1.msra.mxu0 %v1964
    %2399 = vmatprep.subr.mxu0 %v1967
    %2400 = vmatpush1.msra.mxu0 %v1966
    %2401 = vmatprep.subr.mxu0 %v1969
    %2402 = vmatpush1.msra.mxu0 %v1968
    %2403 = vmatprep.subr.mxu0 %v1971
    %2404 = vmatpush1.msra.mxu0 %v1970
    %2405 = vmatprep.subr.mxu0 %v1973
    %2406 = vmatpush1.msra.mxu0 %v1972
    %2407 = vmatprep.subr.mxu0 %v1975
    %2408 = vmatpush1.msra.mxu0 %v1974
    %2409 = vmatprep.subr.mxu0 %v1977
    %2410 = vmatpush1.msra.mxu0 %v1976
    %2411 = vmatprep.subr.mxu0 %v1979
    %2412 = vmatpush1.msra.mxu0 %v1978
    %2413 = vmatprep.subr.mxu0 %v1981
    %2414 = vmatpush1.msra.mxu0 %v1980
    %2415 = vmatprep.subr.mxu0 %v1983
    %2416 = vmatpush1.msra.mxu0 %v1982
    %2417 = vmatprep.subr.mxu0 %v1985
    %2418 = vmatpush1.msra.mxu0 %v1984
    %2419 = vmatprep.subr.mxu0 %v1987
    %2420 = vmatpush1.msra.mxu0 %v1986
    %2421 = vmatprep.subr.mxu0 %v1989
    %2422 = vmatpush1.msra.mxu0 %v1988
    %2423 = vmatprep.subr.mxu0 %v1991
    %2424 = vmatpush1.msra.mxu0 %v1990
    %2425 = vmatprep.subr.mxu0 %v1993
    %2426 = vmatpush1.msra.mxu0 %v1992
    %2427 = vmatprep.subr.mxu0 %v1995
    %2428 = vmatpush1.msra.mxu0 %v1994
    %2429 = vmatprep.subr.mxu0 %v1997
    %2430 = vmatpush1.msra.mxu0 %v1996
    %2431 = vmatprep.mubr.f32.mxu0 %v1903
    %2432 = vmatmul.mubr.f32.gmra.mrb[0].mxu0 %v1902
    %v2433 = vpop.f32.mrb[0].mxu0
    %v2434 = vadd.f32 %v2273, %v2433
    %v2435 = vpop.f32.mrb[0].mxu0
    %v2436 = vadd.f32 %v2275, %v2435
    %2437 = vmatprep.mubr.f32.mxu0 %v1811
    %2438 = vmatmul.mubr.f32.gmra.mrb[0].mxu0 %v1809
    %v2439 = vpop.f32.mrb[0].mxu0
    %v2440 = vadd.f32 %v2279, %v2439
    %v2441 = vpop.f32.mrb[0].mxu0
    %v2442 = vadd.f32 %v2281, %v2441
    %2443 = vmatprep.mubr.f32.mxu0 %v1905
    %2444 = vmatmul.mubr.f32.gmra.mrb[0].mxu0 %v1904
    %v2445 = vpop.f32.mrb[0].mxu0
    %v2446 = vadd.f32 %v2285, %v2445
    %v2447 = vpop.f32.mrb[0].mxu0
    %v2448 = vadd.f32 %v2287, %v2447
    %2449 = vmatprep.mubr.f32.mxu0 %v1817
    %2450 = vmatmul.mubr.f32.gmra.mrb[0].mxu0 %v1815
    %v2451 = vpop.f32.mrb[0].mxu0
    %v2452 = vadd.f32 %v2291, %v2451
    %v2453 = vpop.f32.mrb[0].mxu0
    %v2454 = vadd.f32 %v2293, %v2453
    %2455 = vmatprep.mubr.f32.mxu0 %v1907
    %2456 = vmatmul.mubr.f32.gmra.mrb[0].mxu0 %v1906
    %v2457 = vpop.f32.mrb[0].mxu0
    %v2458 = vadd.f32 %v2297, %v2457
    %v2459 = vpop.f32.mrb[0].mxu0
    %v2460 = vadd.f32 %v2299, %v2459
    %2461 = vmatprep.mubr.f32.mxu0 %v1823
    %2462 = vmatmul.mubr.f32.gmra.mrb[0].mxu0 %v1821
    %v2463 = vpop.f32.mrb[0].mxu0
    %v2464 = vadd.f32 %v2303, %v2463
    %v2465 = vpop.f32.mrb[0].mxu0
    %v2466 = vadd.f32 %v2305, %v2465
    %2467 = vmatprep.mubr.f32.mxu0 %v1909
    %2468 = vmatmul.mubr.f32.gmra.mrb[0].mxu0 %v1908
    %v2469 = vpop.f32.mrb[0].mxu0
    %v2470 = vadd.f32 %v2309, %v2469
    %v2471 = vpop.f32.mrb[0].mxu0
    %v2472 = vadd.f32 %v2311, %v2471
    %2473 = vmatprep.mubr.f32.mxu0 %v1829
    %2474 = vmatmul.mubr.f32.gmra.mrb[0].mxu0 %v1827
    %v2475 = vpop.f32.mrb[0].mxu0
    %v2476 = vadd.f32 %v2315, %v2475
    %v2477 = vpop.f32.mrb[0].mxu0
    %v2478 = vadd.f32 %v2317, %v2477
    %2479 = vmatprep.mubr.f32.mxu0 %v1911
    %2480 = vmatmul.mubr.f32.gmra.mrb[0].mxu0 %v1910
    %v2481 = vpop.f32.mrb[0].mxu0
    %v2482 = vadd.f32 %v2321, %v2481
    %v2483 = vpop.f32.mrb[0].mxu0
    %v2484 = vadd.f32 %v2323, %v2483
    %2485 = vmatprep.mubr.f32.mxu0 %v1835
    %2486 = vmatmul.mubr.f32.gmra.mrb[0].mxu0 %v1833
    %v2487 = vpop.f32.mrb[0].mxu0
    %v2488 = vadd.f32 %v2327, %v2487
    %v2489 = vpop.f32.mrb[0].mxu0
    %v2490 = vadd.f32 %v2329, %v2489
    %2491 = vmatprep.mubr.f32.mxu0 %v1913
    %2492 = vmatmul.mubr.f32.gmra.mrb[0].mxu0 %v1912
    %v2493 = vpop.f32.mrb[0].mxu0
    %v2494 = vadd.f32 %v2333, %v2493
    %v2495 = vpop.f32.mrb[0].mxu0
    %v2496 = vadd.f32 %v2335, %v2495
    %2497 = vmatprep.mubr.f32.mxu0 %v1841
    %2498 = vmatmul.mubr.f32.gmra.mrb[0].mxu0 %v1839
    %v2499 = vpop.f32.mrb[0].mxu0
    %v2500 = vadd.f32 %v2339, %v2499
    %v2501 = vpop.f32.mrb[0].mxu0
    %v2502 = vadd.f32 %v2341, %v2501
    %2503 = vmatprep.mubr.f32.mxu0 %v1915
    %2504 = vmatmul.mubr.f32.gmra.mrb[0].mxu0 %v1914
    %v2505 = vpop.f32.mrb[0].mxu0
    %v2506 = vadd.f32 %v2345, %v2505
    %v2507 = vpop.f32.mrb[0].mxu0
    %v2508 = vadd.f32 %v2347, %v2507
    %2509 = vmatprep.mubr.f32.mxu0 %v1847
    %2510 = vmatmul.mubr.f32.gmra.mrb[0].mxu0 %v1845
    %v2511 = vpop.f32.mrb[0].mxu0
    %v2512 = vadd.f32 %v2351, %v2511
    %v2513 = vpop.f32.mrb[0].mxu0
    %v2514 = vadd.f32 %v2353, %v2513
    %2515 = vmatprep.mubr.f32.mxu0 %v1917
    %2516 = vmatmul.mubr.f32.gmra.mrb[0].mxu0 %v1916
    %v2517 = vpop.f32.mrb[0].mxu0
    %v2518 = vadd.f32 %v2357, %v2517
    %v2519 = vpop.f32.mrb[0].mxu0
    %v2520 = vadd.f32 %v2359, %v2519
    %2521 = vmatprep.mubr.f32.mxu0 %v1853
    %2522 = vmatmul.mubr.f32.gmra.mrb[0].mxu0 %v1851
    %v2523 = vpop.f32.mrb[0].mxu0
    %v2524 = vadd.f32 %v2363, %v2523
    %v2525 = vpop.f32.mrb[0].mxu0
    %v2526 = vadd.f32 %v2365, %v2525
    %2527 = vdwg.mxu0
    %v2528 = vrot.slane %v1902, 2
    %v2529 = vrot.slane %v1809, 2
    %v2530 = vsel %vm509, %v2528, %v2529
    %v2531 = vrot.slane %v1903, 2
    %v2532 = vrot.slane %v1811, 2
    %v2533 = vsel %vm509, %v2531, %v2532
    %v2534 = vrot.slane %v1918, 2
    %v2535 = vsel %vm509, %v2529, %v2534
    %v2536 = vrot.slane %v1919, 2
    %v2537 = vsel %vm509, %v2532, %v2536
    %v2538 = vrot.slane %v1904, 2
    %v2539 = vrot.slane %v1815, 2
    %v2540 = vsel %vm509, %v2538, %v2539
    %v2541 = vrot.slane %v1905, 2
    %v2542 = vrot.slane %v1817, 2
    %v2543 = vsel %vm509, %v2541, %v2542
    %v2544 = vrot.slane %v1920, 2
    %v2545 = vsel %vm509, %v2539, %v2544
    %v2546 = vrot.slane %v1921, 2
    %v2547 = vsel %vm509, %v2542, %v2546
    %v2548 = vrot.slane %v1906, 2
    %v2549 = vrot.slane %v1821, 2
    %v2550 = vsel %vm509, %v2548, %v2549
    %v2551 = vrot.slane %v1907, 2
    %v2552 = vrot.slane %v1823, 2
    %v2553 = vsel %vm509, %v2551, %v2552
    %v2554 = vrot.slane %v1922, 2
    %v2555 = vsel %vm509, %v2549, %v2554
    %v2556 = vrot.slane %v1923, 2
    %v2557 = vsel %vm509, %v2552, %v2556
    %v2558 = vrot.slane %v1908, 2
    %v2559 = vrot.slane %v1827, 2
    %v2560 = vsel %vm509, %v2558, %v2559
    %v2561 = vrot.slane %v1909, 2
    %v2562 = vrot.slane %v1829, 2
    %v2563 = vsel %vm509, %v2561, %v2562
    %v2564 = vrot.slane %v1924, 2
    %v2565 = vsel %vm509, %v2559, %v2564
    %v2566 = vrot.slane %v1925, 2
    %v2567 = vsel %vm509, %v2562, %v2566
    %v2568 = vrot.slane %v1910, 2
    %v2569 = vrot.slane %v1833, 2
    %v2570 = vsel %vm509, %v2568, %v2569
    %v2571 = vrot.slane %v1911, 2
    %v2572 = vrot.slane %v1835, 2
    %v2573 = vsel %vm509, %v2571, %v2572
    %v2574 = vrot.slane %v1926, 2
    %v2575 = vsel %vm509, %v2569, %v2574
    %v2576 = vrot.slane %v1927, 2
    %v2577 = vsel %vm509, %v2572, %v2576
    %v2578 = vrot.slane %v1912, 2
    %v2579 = vrot.slane %v1839, 2
    %v2580 = vsel %vm509, %v2578, %v2579
    %v2581 = vrot.slane %v1913, 2
    %v2582 = vrot.slane %v1841, 2
    %v2583 = vsel %vm509, %v2581, %v2582
    %v2584 = vrot.slane %v1928, 2
    %v2585 = vsel %vm509, %v2579, %v2584
    %v2586 = vrot.slane %v1929, 2
    %v2587 = vsel %vm509, %v2582, %v2586
    %v2588 = vrot.slane %v1914, 2
    %v2589 = vrot.slane %v1845, 2
    %v2590 = vsel %vm509, %v2588, %v2589
    %v2591 = vrot.slane %v1915, 2
    %v2592 = vrot.slane %v1847, 2
    %v2593 = vsel %vm509, %v2591, %v2592
    %v2594 = vrot.slane %v1930, 2
    %v2595 = vsel %vm509, %v2589, %v2594
    %v2596 = vrot.slane %v1931, 2
    %v2597 = vsel %vm509, %v2592, %v2596
    %v2598 = vrot.slane %v1916, 2
    %v2599 = vrot.slane %v1851, 2
    %v2600 = vsel %vm509, %v2598, %v2599
    %v2601 = vrot.slane %v1917, 2
    %v2602 = vrot.slane %v1853, 2
    %v2603 = vsel %vm509, %v2601, %v2602
    %v2604 = vrot.slane %v1932, 2
    %v2605 = vsel %vm509, %v2599, %v2604
    %v2606 = vrot.slane %v1933, 2
    %v2607 = vsel %vm509, %v2602, %v2606
    %v2640 = vld [vmem:[#allocation7 + $0x400] sm:$0xff]
    %v2641 = vld [vmem:[#allocation7 + $0x408] sm:$0xff]
    %v2642 = vld [vmem:[#allocation7 + $0x410] sm:$0xff]
    %v2643 = vld [vmem:[#allocation7 + $0x418] sm:$0xff]
    %v2644 = vld [vmem:[#allocation7 + $0x420] sm:$0xff]
    %v2645 = vld [vmem:[#allocation7 + $0x428] sm:$0xff]
    %v2646 = vld [vmem:[#allocation7 + $0x430] sm:$0xff]
    %v2647 = vld [vmem:[#allocation7 + $0x438] sm:$0xff]
    %v2648 = vld [vmem:[#allocation7 + $0x440] sm:$0xff]
    %v2649 = vld [vmem:[#allocation7 + $0x448] sm:$0xff]
    %v2650 = vld [vmem:[#allocation7 + $0x450] sm:$0xff]
    %v2651 = vld [vmem:[#allocation7 + $0x458] sm:$0xff]
    %v2652 = vld [vmem:[#allocation7 + $0x460] sm:$0xff]
    %v2653 = vld [vmem:[#allocation7 + $0x468] sm:$0xff]
    %v2654 = vld [vmem:[#allocation7 + $0x470] sm:$0xff]
    %v2655 = vld [vmem:[#allocation7 + $0x478] sm:$0xff]
    %v2656 = vld [vmem:[#allocation7 + $0x480] sm:$0xff]
    %v2657 = vld [vmem:[#allocation7 + $0x488] sm:$0xff]
    %v2658 = vld [vmem:[#allocation7 + $0x490] sm:$0xff]
    %v2659 = vld [vmem:[#allocation7 + $0x498] sm:$0xff]
    %v2660 = vld [vmem:[#allocation7 + $0x4a0] sm:$0xff]
    %v2661 = vld [vmem:[#allocation7 + $0x4a8] sm:$0xff]
    %v2662 = vld [vmem:[#allocation7 + $0x4b0] sm:$0xff]
    %v2663 = vld [vmem:[#allocation7 + $0x4b8] sm:$0xff]
    %v2664 = vld [vmem:[#allocation7 + $0x4c0] sm:$0xff]
    %v2665 = vld [vmem:[#allocation7 + $0x4c8] sm:$0xff]
    %v2666 = vld [vmem:[#allocation7 + $0x4d0] sm:$0xff]
    %v2667 = vld [vmem:[#allocation7 + $0x4d8] sm:$0xff]
    %v2668 = vld [vmem:[#allocation7 + $0x4e0] sm:$0xff]
    %v2669 = vld [vmem:[#allocation7 + $0x4e8] sm:$0xff]
    %v2670 = vld [vmem:[#allocation7 + $0x4f0] sm:$0xff]
    %v2671 = vld [vmem:[#allocation7 + $0x4f8] sm:$0xff]
    %v2672 = vld [vmem:[#allocation7 + $0x500] sm:$0xff]
    %v2673 = vld [vmem:[#allocation7 + $0x508] sm:$0xff]
    %v2674 = vld [vmem:[#allocation7 + $0x510] sm:$0xff]
    %v2675 = vld [vmem:[#allocation7 + $0x518] sm:$0xff]
    %v2676 = vld [vmem:[#allocation7 + $0x520] sm:$0xff]
    %v2677 = vld [vmem:[#allocation7 + $0x528] sm:$0xff]
    %v2678 = vld [vmem:[#allocation7 + $0x530] sm:$0xff]
    %v2679 = vld [vmem:[#allocation7 + $0x538] sm:$0xff]
    %v2680 = vld [vmem:[#allocation7 + $0x540] sm:$0xff]
    %v2681 = vld [vmem:[#allocation7 + $0x548] sm:$0xff]
    %v2682 = vld [vmem:[#allocation7 + $0x550] sm:$0xff]
    %v2683 = vld [vmem:[#allocation7 + $0x558] sm:$0xff]
    %v2684 = vld [vmem:[#allocation7 + $0x560] sm:$0xff]
    %v2685 = vld [vmem:[#allocation7 + $0x568] sm:$0xff]
    %v2686 = vld [vmem:[#allocation7 + $0x570] sm:$0xff]
    %v2687 = vld [vmem:[#allocation7 + $0x578] sm:$0xff]
    %v2688 = vld [vmem:[#allocation7 + $0x580] sm:$0xff]
    %v2689 = vld [vmem:[#allocation7 + $0x588] sm:$0xff]
    %v2690 = vld [vmem:[#allocation7 + $0x590] sm:$0xff]
    %v2691 = vld [vmem:[#allocation7 + $0x598] sm:$0xff]
    %v2692 = vld [vmem:[#allocation7 + $0x5a0] sm:$0xff]
    %v2693 = vld [vmem:[#allocation7 + $0x5a8] sm:$0xff]
    %v2694 = vld [vmem:[#allocation7 + $0x5b0] sm:$0xff]
    %v2695 = vld [vmem:[#allocation7 + $0x5b8] sm:$0xff]
    %v2696 = vld [vmem:[#allocation7 + $0x5c0] sm:$0xff]
    %v2697 = vld [vmem:[#allocation7 + $0x5c8] sm:$0xff]
    %v2698 = vld [vmem:[#allocation7 + $0x5d0] sm:$0xff]
    %v2699 = vld [vmem:[#allocation7 + $0x5d8] sm:$0xff]
    %v2700 = vld [vmem:[#allocation7 + $0x5e0] sm:$0xff]
    %v2701 = vld [vmem:[#allocation7 + $0x5e8] sm:$0xff]
    %v2702 = vld [vmem:[#allocation7 + $0x5f0] sm:$0xff]
    %v2703 = vld [vmem:[#allocation7 + $0x5f8] sm:$0xff]
    %2704 = vmatprep.subr.mxu0 %v2641
    %2705 = vmatpush1.msra.mxu0 %v2640
    %2706 = vmatprep.subr.mxu0 %v2643
    %2707 = vmatpush1.msra.mxu0 %v2642
    %2708 = vmatprep.subr.mxu0 %v2645
    %2709 = vmatpush1.msra.mxu0 %v2644
    %2710 = vmatprep.subr.mxu0 %v2647
    %2711 = vmatpush1.msra.mxu0 %v2646
    %2712 = vmatprep.subr.mxu0 %v2649
    %2713 = vmatpush1.msra.mxu0 %v2648
    %2714 = vmatprep.subr.mxu0 %v2651
    %2715 = vmatpush1.msra.mxu0 %v2650
    %2716 = vmatprep.subr.mxu0 %v2653
    %2717 = vmatpush1.msra.mxu0 %v2652
    %2718 = vmatprep.subr.mxu0 %v2655
    %2719 = vmatpush1.msra.mxu0 %v2654
    %2720 = vmatprep.subr.mxu0 %v2657
    %2721 = vmatpush1.msra.mxu0 %v2656
    %2722 = vmatprep.subr.mxu0 %v2659
    %2723 = vmatpush1.msra.mxu0 %v2658
    %2724 = vmatprep.subr.mxu0 %v2661
    %2725 = vmatpush1.msra.mxu0 %v2660
    %2726 = vmatprep.subr.mxu0 %v2663
    %2727 = vmatpush1.msra.mxu0 %v2662
    %2728 = vmatprep.subr.mxu0 %v2665
    %2729 = vmatpush1.msra.mxu0 %v2664
    %2730 = vmatprep.subr.mxu0 %v2667
    %2731 = vmatpush1.msra.mxu0 %v2666
    %2732 = vmatprep.subr.mxu0 %v2669
    %2733 = vmatpush1.msra.mxu0 %v2668
    %2734 = vmatprep.subr.mxu0 %v2671
    %2735 = vmatpush1.msra.mxu0 %v2670
    %2736 = vmatprep.subr.mxu0 %v2673
    %2737 = vmatpush1.msra.mxu0 %v2672
    %2738 = vmatprep.subr.mxu0 %v2675
    %2739 = vmatpush1.msra.mxu0 %v2674
    %2740 = vmatprep.subr.mxu0 %v2677
    %2741 = vmatpush1.msra.mxu0 %v2676
    %2742 = vmatprep.subr.mxu0 %v2679
    %2743 = vmatpush1.msra.mxu0 %v2678
    %2744 = vmatprep.subr.mxu0 %v2681
    %2745 = vmatpush1.msra.mxu0 %v2680
    %2746 = vmatprep.subr.mxu0 %v2683
    %2747 = vmatpush1.msra.mxu0 %v2682
    %2748 = vmatprep.subr.mxu0 %v2685
    %2749 = vmatpush1.msra.mxu0 %v2684
    %2750 = vmatprep.subr.mxu0 %v2687
    %2751 = vmatpush1.msra.mxu0 %v2686
    %2752 = vmatprep.subr.mxu0 %v2689
    %2753 = vmatpush1.msra.mxu0 %v2688
    %2754 = vmatprep.subr.mxu0 %v2691
    %2755 = vmatpush1.msra.mxu0 %v2690
    %2756 = vmatprep.subr.mxu0 %v2693
    %2757 = vmatpush1.msra.mxu0 %v2692
    %2758 = vmatprep.subr.mxu0 %v2695
    %2759 = vmatpush1.msra.mxu0 %v2694
    %2760 = vmatprep.subr.mxu0 %v2697
    %2761 = vmatpush1.msra.mxu0 %v2696
    %2762 = vmatprep.subr.mxu0 %v2699
    %2763 = vmatpush1.msra.mxu0 %v2698
    %2764 = vmatprep.subr.mxu0 %v2701
    %2765 = vmatpush1.msra.mxu0 %v2700
    %2766 = vmatprep.subr.mxu0 %v2703
    %2767 = vmatpush1.msra.mxu0 %v2702
    %2768 = vmatprep.mubr.f32.mxu0 %v2533
    %2769 = vmatmul.mubr.f32.gmra.mrb[0].mxu0 %v2530
    %v2770 = vpop.f32.mrb[0].mxu0
    %v2771 = vadd.f32 0.0, %v2770
    %v2772 = vpop.f32.mrb[0].mxu0
    %v2773 = vadd.f32 0.0, %v2772
    %2774 = vmatprep.mubr.f32.mxu0 %v2537
    %2775 = vmatmul.mubr.f32.gmra.mrb[0].mxu0 %v2535
    %v2776 = vpop.f32.mrb[0].mxu0
    %v2777 = vadd.f32 0.0, %v2776
    %v2778 = vpop.f32.mrb[0].mxu0
    %v2779 = vadd.f32 0.0, %v2778
    %2780 = vmatprep.mubr.f32.mxu0 %v2543
    %2781 = vmatmul.mubr.f32.gmra.mrb[0].mxu0 %v2540
    %v2782 = vpop.f32.mrb[0].mxu0
    %v2783 = vadd.f32 0.0, %v2782
    %v2784 = vpop.f32.mrb[0].mxu0
    %v2785 = vadd.f32 0.0, %v2784
    %2786 = vmatprep.mubr.f32.mxu0 %v2547
    %2787 = vmatmul.mubr.f32.gmra.mrb[0].mxu0 %v2545
    %v2788 = vpop.f32.mrb[0].mxu0
    %v2789 = vadd.f32 0.0, %v2788
    %v2790 = vpop.f32.mrb[0].mxu0
    %v2791 = vadd.f32 0.0, %v2790
    %2792 = vmatprep.mubr.f32.mxu0 %v2553
    %2793 = vmatmul.mubr.f32.gmra.mrb[0].mxu0 %v2550
    %v2794 = vpop.f32.mrb[0].mxu0
    %v2795 = vadd.f32 0.0, %v2794
    %v2796 = vpop.f32.mrb[0].mxu0
    %v2797 = vadd.f32 0.0, %v2796
    %2798 = vmatprep.mubr.f32.mxu0 %v2557
    %2799 = vmatmul.mubr.f32.gmra.mrb[0].mxu0 %v2555
    %v2800 = vpop.f32.mrb[0].mxu0
    %v2801 = vadd.f32 0.0, %v2800
    %v2802 = vpop.f32.mrb[0].mxu0
    %v2803 = vadd.f32 0.0, %v2802
    %2804 = vmatprep.mubr.f32.mxu0 %v2563
    %2805 = vmatmul.mubr.f32.gmra.mrb[0].mxu0 %v2560
    %v2806 = vpop.f32.mrb[0].mxu0
    %v2807 = vadd.f32 0.0, %v2806
    %v2808 = vpop.f32.mrb[0].mxu0
    %v2809 = vadd.f32 0.0, %v2808
    %2810 = vmatprep.mubr.f32.mxu0 %v2567
    %2811 = vmatmul.mubr.f32.gmra.mrb[0].mxu0 %v2565
    %v2812 = vpop.f32.mrb[0].mxu0
    %v2813 = vadd.f32 0.0, %v2812
    %v2814 = vpop.f32.mrb[0].mxu0
    %v2815 = vadd.f32 0.0, %v2814
    %2816 = vmatprep.mubr.f32.mxu0 %v2573
    %2817 = vmatmul.mubr.f32.gmra.mrb[0].mxu0 %v2570
    %v2818 = vpop.f32.mrb[0].mxu0
    %v2819 = vadd.f32 0.0, %v2818
    %v2820 = vpop.f32.mrb[0].mxu0
    %v2821 = vadd.f32 0.0, %v2820
    %2822 = vmatprep.mubr.f32.mxu0 %v2577
    %2823 = vmatmul.mubr.f32.gmra.mrb[0].mxu0 %v2575
    %v2824 = vpop.f32.mrb[0].mxu0
    %v2825 = vadd.f32 0.0, %v2824
    %v2826 = vpop.f32.mrb[0].mxu0
    %v2827 = vadd.f32 0.0, %v2826
    %2828 = vmatprep.mubr.f32.mxu0 %v2583
    %2829 = vmatmul.mubr.f32.gmra.mrb[0].mxu0 %v2580
    %v2830 = vpop.f32.mrb[0].mxu0
    %v2831 = vadd.f32 0.0, %v2830
    %v2832 = vpop.f32.mrb[0].mxu0
    %v2833 = vadd.f32 0.0, %v2832
    %2834 = vmatprep.mubr.f32.mxu0 %v2587
    %2835 = vmatmul.mubr.f32.gmra.mrb[0].mxu0 %v2585
    %v2836 = vpop.f32.mrb[0].mxu0
    %v2837 = vadd.f32 0.0, %v2836
    %v2838 = vpop.f32.mrb[0].mxu0
    %v2839 = vadd.f32 0.0, %v2838
    %2840 = vmatprep.mubr.f32.mxu0 %v2593
    %2841 = vmatmul.mubr.f32.gmra.mrb[0].mxu0 %v2590
    %v2842 = vpop.f32.mrb[0].mxu0
    %v2843 = vadd.f32 0.0, %v2842
    %v2844 = vpop.f32.mrb[0].mxu0
    %v2845 = vadd.f32 0.0, %v2844
    %2846 = vmatprep.mubr.f32.mxu0 %v2597
    %2847 = vmatmul.mubr.f32.gmra.mrb[0].mxu0 %v2595
    %v2848 = vpop.f32.mrb[0].mxu0
    %v2849 = vadd.f32 0.0, %v2848
    %v2850 = vpop.f32.mrb[0].mxu0
    %v2851 = vadd.f32 0.0, %v2850
    %2852 = vmatprep.mubr.f32.mxu0 %v2603
    %2853 = vmatmul.mubr.f32.gmra.mrb[0].mxu0 %v2600
    %v2854 = vpop.f32.mrb[0].mxu0
    %v2855 = vadd.f32 0.0, %v2854
    %v2856 = vpop.f32.mrb[0].mxu0
    %v2857 = vadd.f32 0.0, %v2856
    %2858 = vmatprep.mubr.f32.mxu0 %v2607
    %2859 = vmatmul.mubr.f32.gmra.mrb[0].mxu0 %v2605
    %v2860 = vpop.f32.mrb[0].mxu0
    %v2861 = vadd.f32 0.0, %v2860
    %v2862 = vpop.f32.mrb[0].mxu0
    %v2863 = vadd.f32 0.0, %v2862
    %2864 = vdwg.mxu0
    %v2865 = vadd.f32 %v2434, %v2771
    %v2866 = vadd.f32 %v2436, %v2773
    %v2867 = vadd.f32 %v2440, %v2777
    %v2868 = vadd.f32 %v2442, %v2779
    %v2869 = vadd.f32 %v2446, %v2783
    %v2870 = vadd.f32 %v2448, %v2785
    %v2871 = vadd.f32 %v2452, %v2789
    %v2872 = vadd.f32 %v2454, %v2791
    %v2873 = vadd.f32 %v2458, %v2795
    %v2874 = vadd.f32 %v2460, %v2797
    %v2875 = vadd.f32 %v2464, %v2801
    %v2876 = vadd.f32 %v2466, %v2803
    %v2877 = vadd.f32 %v2470, %v2807
    %v2878 = vadd.f32 %v2472, %v2809
    %v2879 = vadd.f32 %v2476, %v2813
    %v2880 = vadd.f32 %v2478, %v2815
    %v2881 = vadd.f32 %v2482, %v2819
    %v2882 = vadd.f32 %v2484, %v2821
    %v2883 = vadd.f32 %v2488, %v2825
    %v2884 = vadd.f32 %v2490, %v2827
    %v2885 = vadd.f32 %v2494, %v2831
    %v2886 = vadd.f32 %v2496, %v2833
    %v2887 = vadd.f32 %v2500, %v2837
    %v2888 = vadd.f32 %v2502, %v2839
    %v2889 = vadd.f32 %v2506, %v2843
    %v2890 = vadd.f32 %v2508, %v2845
    %v2891 = vadd.f32 %v2512, %v2849
    %v2892 = vadd.f32 %v2514, %v2851
    %v2893 = vadd.f32 %v2518, %v2855
    %v2894 = vadd.f32 %v2520, %v2857
    %v2895 = vadd.f32 %v2524, %v2861
    %v2896 = vadd.f32 %v2526, %v2863
    %v2897 = vld [vmem:[%s5 + $0x3] sm:$0x3]
    %v2899 = vlaneseq
    %v2900 = vshrl.u32 %v2899, 7
    %v2901 = vsub.s32 0, %v2900
    %v2902 = vrot.slane %v2897, %v2901
    %v2903 = vlaneseq
    %v2904 = vshrl.u32 %v2903, 7
    %v2905 = vsub.s32 1, %v2904
    %v2906 = vrot.slane %v2897, %v2905
    %v2909 = vadd.f32 %v2865, %v2902
    %v2910 = vadd.f32 %v2866, %v2906
    %v2911 = vadd.f32 %v2867, %v2902
    %v2912 = vadd.f32 %v2868, %v2906
    %v2913 = vadd.f32 %v2869, %v2902
    %v2914 = vadd.f32 %v2870, %v2906
    %v2915 = vadd.f32 %v2871, %v2902
    %v2916 = vadd.f32 %v2872, %v2906
    %v2917 = vadd.f32 %v2873, %v2902
    %v2918 = vadd.f32 %v2874, %v2906
    %v2919 = vadd.f32 %v2875, %v2902
    %v2920 = vadd.f32 %v2876, %v2906
    %v2921 = vadd.f32 %v2877, %v2902
    %v2922 = vadd.f32 %v2878, %v2906
    %v2923 = vadd.f32 %v2879, %v2902
    %v2924 = vadd.f32 %v2880, %v2906
    %v2925 = vadd.f32 %v2881, %v2902
    %v2926 = vadd.f32 %v2882, %v2906
    %v2927 = vadd.f32 %v2883, %v2902
    %v2928 = vadd.f32 %v2884, %v2906
    %v2929 = vadd.f32 %v2885, %v2902
    %v2930 = vadd.f32 %v2886, %v2906
    %v2931 = vadd.f32 %v2887, %v2902
    %v2932 = vadd.f32 %v2888, %v2906
    %v2933 = vadd.f32 %v2889, %v2902
    %v2934 = vadd.f32 %v2890, %v2906
    %v2935 = vadd.f32 %v2891, %v2902
    %v2936 = vadd.f32 %v2892, %v2906
    %v2937 = vadd.f32 %v2893, %v2902
    %v2938 = vadd.f32 %v2894, %v2906
    %v2939 = vadd.f32 %v2895, %v2902
    %v2940 = vadd.f32 %v2896, %v2906
    %vm2941 = vcmp.gt.f32.partialorder %v2909, 0.0
    %vm2942 = vcmp.gt.f32.partialorder %v2910, 0.0
    %vm2943 = vcmp.gt.f32.partialorder %v2911, 0.0
    %vm2944 = vcmp.gt.f32.partialorder %v2912, 0.0
    %vm2945 = vcmp.gt.f32.partialorder %v2913, 0.0
    %vm2946 = vcmp.gt.f32.partialorder %v2914, 0.0
    %vm2947 = vcmp.gt.f32.partialorder %v2915, 0.0
    %vm2948 = vcmp.gt.f32.partialorder %v2916, 0.0
    %vm2949 = vcmp.gt.f32.partialorder %v2917, 0.0
    %vm2950 = vcmp.gt.f32.partialorder %v2918, 0.0
    %vm2951 = vcmp.gt.f32.partialorder %v2919, 0.0
    %vm2952 = vcmp.gt.f32.partialorder %v2920, 0.0
    %vm2953 = vcmp.gt.f32.partialorder %v2921, 0.0
    %vm2954 = vcmp.gt.f32.partialorder %v2922, 0.0
    %vm2955 = vcmp.gt.f32.partialorder %v2923, 0.0
    %vm2956 = vcmp.gt.f32.partialorder %v2924, 0.0
    %vm2957 = vcmp.gt.f32.partialorder %v2925, 0.0
    %vm2958 = vcmp.gt.f32.partialorder %v2926, 0.0
    %vm2959 = vcmp.gt.f32.partialorder %v2927, 0.0
    %vm2960 = vcmp.gt.f32.partialorder %v2928, 0.0
    %vm2961 = vcmp.gt.f32.partialorder %v2929, 0.0
    %vm2962 = vcmp.gt.f32.partialorder %v2930, 0.0
    %vm2963 = vcmp.gt.f32.partialorder %v2931, 0.0
    %vm2964 = vcmp.gt.f32.partialorder %v2932, 0.0
    %vm2965 = vcmp.gt.f32.partialorder %v2933, 0.0
    %vm2966 = vcmp.gt.f32.partialorder %v2934, 0.0
    %vm2967 = vcmp.gt.f32.partialorder %v2935, 0.0
    %vm2968 = vcmp.gt.f32.partialorder %v2936, 0.0
    %vm2969 = vcmp.gt.f32.partialorder %v2937, 0.0
    %vm2970 = vcmp.gt.f32.partialorder %v2938, 0.0
    %vm2971 = vcmp.gt.f32.partialorder %v2939, 0.0
    %vm2972 = vcmp.gt.f32.partialorder %v2940, 0.0
    %v2973 = vmul.f32 %v2909, 0.01
    %v2974 = vmul.f32 %v2910, 0.01
    %v2975 = vmul.f32 %v2911, 0.01
    %v2976 = vmul.f32 %v2912, 0.01
    %v2977 = vmul.f32 %v2913, 0.01
    %v2978 = vmul.f32 %v2914, 0.01
    %v2979 = vmul.f32 %v2915, 0.01
    %v2980 = vmul.f32 %v2916, 0.01
    %v2981 = vmul.f32 %v2917, 0.01
    %v2982 = vmul.f32 %v2918, 0.01
    %v2983 = vmul.f32 %v2919, 0.01
    %v2984 = vmul.f32 %v2920, 0.01
    %v2985 = vmul.f32 %v2921, 0.01
    %v2986 = vmul.f32 %v2922, 0.01
    %v2987 = vmul.f32 %v2923, 0.01
    %v2988 = vmul.f32 %v2924, 0.01
    %v2989 = vmul.f32 %v2925, 0.01
    %v2990 = vmul.f32 %v2926, 0.01
    %v2991 = vmul.f32 %v2927, 0.01
    %v2992 = vmul.f32 %v2928, 0.01
    %v2993 = vmul.f32 %v2929, 0.01
    %v2994 = vmul.f32 %v2930, 0.01
    %v2995 = vmul.f32 %v2931, 0.01
    %v2996 = vmul.f32 %v2932, 0.01
    %v2997 = vmul.f32 %v2933, 0.01
    %v2998 = vmul.f32 %v2934, 0.01
    %v2999 = vmul.f32 %v2935, 0.01
    %v3000 = vmul.f32 %v2936, 0.01
    %v3001 = vmul.f32 %v2937, 0.01
    %v3002 = vmul.f32 %v2938, 0.01
    %v3003 = vmul.f32 %v2939, 0.01
    %v3004 = vmul.f32 %v2940, 0.01
    %v3005 = vsel %vm2941, %v2909, %v2973
    %v3006 = vsel %vm2942, %v2910, %v2974
    %v3007 = vsel %vm2943, %v2911, %v2975
    %v3008 = vsel %vm2944, %v2912, %v2976
    %v3009 = vsel %vm2945, %v2913, %v2977
    %v3010 = vsel %vm2946, %v2914, %v2978
    %v3011 = vsel %vm2947, %v2915, %v2979
    %v3012 = vsel %vm2948, %v2916, %v2980
    %v3013 = vsel %vm2949, %v2917, %v2981
    %v3014 = vsel %vm2950, %v2918, %v2982
    %v3015 = vsel %vm2951, %v2919, %v2983
    %v3016 = vsel %vm2952, %v2920, %v2984
    %v3017 = vsel %vm2953, %v2921, %v2985
    %v3018 = vsel %vm2954, %v2922, %v2986
    %v3019 = vsel %vm2955, %v2923, %v2987
    %v3020 = vsel %vm2956, %v2924, %v2988
    %v3021 = vsel %vm2957, %v2925, %v2989
    %v3022 = vsel %vm2958, %v2926, %v2990
    %v3023 = vsel %vm2959, %v2927, %v2991
    %v3024 = vsel %vm2960, %v2928, %v2992
    %v3025 = vsel %vm2961, %v2929, %v2993
    %v3026 = vsel %vm2962, %v2930, %v2994
    %v3027 = vsel %vm2963, %v2931, %v2995
    %v3028 = vsel %vm2964, %v2932, %v2996
    %v3029 = vsel %vm2965, %v2933, %v2997
    %v3030 = vsel %vm2966, %v2934, %v2998
    %v3031 = vsel %vm2967, %v2935, %v2999
    %v3032 = vsel %vm2968, %v2936, %v3000
    %v3033 = vsel %vm2969, %v2937, %v3001
    %v3034 = vsel %vm2970, %v2938, %v3002
    %v3035 = vsel %vm2971, %v2939, %v3003
    %v3036 = vsel %vm2972, %v2940, %v3004
    %v3069 = vrot.slane %v3005, 7
    %v3070 = vrot.slane %v3006, 7
    %v3071 = vrot.slane %v3007, 7
    %v3072 = vsel %vm830, %v3069, %v3071
    %v3073 = vrot.slane %v3008, 7
    %v3074 = vsel %vm830, %v3070, %v3073
    %v3075 = vrot.slane %v3009, 7
    %v3076 = vrot.slane %v3010, 7
    %v3077 = vrot.slane %v3011, 7
    %v3078 = vsel %vm830, %v3075, %v3077
    %v3079 = vrot.slane %v3012, 7
    %v3080 = vsel %vm830, %v3076, %v3079
    %v3081 = vrot.slane %v3013, 7
    %v3082 = vrot.slane %v3014, 7
    %v3083 = vrot.slane %v3015, 7
    %v3084 = vsel %vm830, %v3081, %v3083
    %v3085 = vrot.slane %v3016, 7
    %v3086 = vsel %vm830, %v3082, %v3085
    %v3087 = vrot.slane %v3017, 7
    %v3088 = vrot.slane %v3018, 7
    %v3089 = vrot.slane %v3019, 7
    %v3090 = vsel %vm830, %v3087, %v3089
    %v3091 = vrot.slane %v3020, 7
    %v3092 = vsel %vm830, %v3088, %v3091
    %v3093 = vrot.slane %v3021, 7
    %v3094 = vrot.slane %v3022, 7
    %v3095 = vrot.slane %v3023, 7
    %v3096 = vsel %vm830, %v3093, %v3095
    %v3097 = vrot.slane %v3024, 7
    %v3098 = vsel %vm830, %v3094, %v3097
    %v3099 = vrot.slane %v3025, 7
    %v3100 = vrot.slane %v3026, 7
    %v3101 = vrot.slane %v3027, 7
    %v3102 = vsel %vm830, %v3099, %v3101
    %v3103 = vrot.slane %v3028, 7
    %v3104 = vsel %vm830, %v3100, %v3103
    %v3105 = vrot.slane %v3029, 7
    %v3106 = vrot.slane %v3030, 7
    %v3107 = vrot.slane %v3031, 7
    %v3108 = vsel %vm830, %v3105, %v3107
    %v3109 = vrot.slane %v3032, 7
    %v3110 = vsel %vm830, %v3106, %v3109
    %v3111 = vrot.slane %v3033, 7
    %v3112 = vrot.slane %v3034, 7
    %v3113 = vrot.slane %v3035, 7
    %v3114 = vsel %vm830, %v3111, %v3113
    %v3115 = vrot.slane %v3036, 7
    %v3116 = vsel %vm830, %v3112, %v3115
    %v3165 = vsel %vm830, 0.0, %v3069
    %v3166 = vsel %vm830, 0.0, %v3070
    %v3167 = vsel %vm830, 0.0, %v3075
    %v3168 = vsel %vm830, 0.0, %v3076
    %v3169 = vsel %vm830, 0.0, %v3081
    %v3170 = vsel %vm830, 0.0, %v3082
    %v3171 = vsel %vm830, 0.0, %v3087
    %v3172 = vsel %vm830, 0.0, %v3088
    %v3173 = vsel %vm830, 0.0, %v3093
    %v3174 = vsel %vm830, 0.0, %v3094
    %v3175 = vsel %vm830, 0.0, %v3099
    %v3176 = vsel %vm830, 0.0, %v3100
    %v3177 = vsel %vm830, 0.0, %v3105
    %v3178 = vsel %vm830, 0.0, %v3106
    %v3179 = vsel %vm830, 0.0, %v3111
    %v3180 = vsel %vm830, 0.0, %v3112
    %v3181 = vsel %vm830, %v3071, 0.0
    %v3182 = vsel %vm830, %v3073, 0.0
    %v3183 = vsel %vm830, %v3077, 0.0
    %v3184 = vsel %vm830, %v3079, 0.0
    %v3185 = vsel %vm830, %v3083, 0.0
    %v3186 = vsel %vm830, %v3085, 0.0
    %v3187 = vsel %vm830, %v3089, 0.0
    %v3188 = vsel %vm830, %v3091, 0.0
    %v3189 = vsel %vm830, %v3095, 0.0
    %v3190 = vsel %vm830, %v3097, 0.0
    %v3191 = vsel %vm830, %v3101, 0.0
    %v3192 = vsel %vm830, %v3103, 0.0
    %v3193 = vsel %vm830, %v3107, 0.0
    %v3194 = vsel %vm830, %v3109, 0.0
    %v3195 = vsel %vm830, %v3113, 0.0
    %v3196 = vsel %vm830, %v3115, 0.0
    %v3197 = vld [vmem:[#allocation8] sm:$0xff]
    %v3198 = vld [vmem:[#allocation8 + $0x8] sm:$0xff]
    %v3199 = vld [vmem:[#allocation8 + $0x10] sm:$0xff]
    %v3200 = vld [vmem:[#allocation8 + $0x18] sm:$0xff]
    %v3201 = vld [vmem:[#allocation8 + $0x20] sm:$0xff]
    %v3202 = vld [vmem:[#allocation8 + $0x28] sm:$0xff]
    %v3203 = vld [vmem:[#allocation8 + $0x30] sm:$0xff]
    %v3204 = vld [vmem:[#allocation8 + $0x38] sm:$0xff]
    %v3205 = vld [vmem:[#allocation8 + $0x40] sm:$0xff]
    %v3206 = vld [vmem:[#allocation8 + $0x48] sm:$0xff]
    %v3207 = vld [vmem:[#allocation8 + $0x50] sm:$0xff]
    %v3208 = vld [vmem:[#allocation8 + $0x58] sm:$0xff]
    %v3209 = vld [vmem:[#allocation8 + $0x60] sm:$0xff]
    %v3210 = vld [vmem:[#allocation8 + $0x68] sm:$0xff]
    %v3211 = vld [vmem:[#allocation8 + $0x70] sm:$0xff]
    %v3212 = vld [vmem:[#allocation8 + $0x78] sm:$0xff]
    %v3213 = vld [vmem:[#allocation8 + $0x80] sm:$0xff]
    %v3214 = vld [vmem:[#allocation8 + $0x88] sm:$0xff]
    %v3215 = vld [vmem:[#allocation8 + $0x90] sm:$0xff]
    %v3216 = vld [vmem:[#allocation8 + $0x98] sm:$0xff]
    %v3217 = vld [vmem:[#allocation8 + $0xa0] sm:$0xff]
    %v3218 = vld [vmem:[#allocation8 + $0xa8] sm:$0xff]
    %v3219 = vld [vmem:[#allocation8 + $0xb0] sm:$0xff]
    %v3220 = vld [vmem:[#allocation8 + $0xb8] sm:$0xff]
    %v3221 = vld [vmem:[#allocation8 + $0xc0] sm:$0xff]
    %v3222 = vld [vmem:[#allocation8 + $0xc8] sm:$0xff]
    %v3223 = vld [vmem:[#allocation8 + $0xd0] sm:$0xff]
    %v3224 = vld [vmem:[#allocation8 + $0xd8] sm:$0xff]
    %v3225 = vld [vmem:[#allocation8 + $0xe0] sm:$0xff]
    %v3226 = vld [vmem:[#allocation8 + $0xe8] sm:$0xff]
    %v3227 = vld [vmem:[#allocation8 + $0xf0] sm:$0xff]
    %v3228 = vld [vmem:[#allocation8 + $0xf8] sm:$0xff]
    %v3261 = vrot.slane %v3165, 1
    %v3262 = vrot.slane %v3072, 1
    %v3263 = vsel %vm146, %v3261, %v3262
    %v3264 = vrot.slane %v3166, 1
    %v3265 = vrot.slane %v3074, 1
    %v3266 = vsel %vm146, %v3264, %v3265
    %v3267 = vrot.slane %v3181, 1
    %v3268 = vsel %vm146, %v3262, %v3267
    %v3269 = vrot.slane %v3182, 1
    %v3270 = vsel %vm146, %v3265, %v3269
    %v3271 = vrot.slane %v3167, 1
    %v3272 = vrot.slane %v3078, 1
    %v3273 = vsel %vm146, %v3271, %v3272
    %v3274 = vrot.slane %v3168, 1
    %v3275 = vrot.slane %v3080, 1
    %v3276 = vsel %vm146, %v3274, %v3275
    %v3277 = vrot.slane %v3183, 1
    %v3278 = vsel %vm146, %v3272, %v3277
    %v3279 = vrot.slane %v3184, 1
    %v3280 = vsel %vm146, %v3275, %v3279
    %v3281 = vrot.slane %v3169, 1
    %v3282 = vrot.slane %v3084, 1
    %v3283 = vsel %vm146, %v3281, %v3282
    %v3284 = vrot.slane %v3170, 1
    %v3285 = vrot.slane %v3086, 1
    %v3286 = vsel %vm146, %v3284, %v3285
    %v3287 = vrot.slane %v3185, 1
    %v3288 = vsel %vm146, %v3282, %v3287
    %v3289 = vrot.slane %v3186, 1
    %v3290 = vsel %vm146, %v3285, %v3289
    %v3291 = vrot.slane %v3171, 1
    %v3292 = vrot.slane %v3090, 1
    %v3293 = vsel %vm146, %v3291, %v3292
    %v3294 = vrot.slane %v3172, 1
    %v3295 = vrot.slane %v3092, 1
    %v3296 = vsel %vm146, %v3294, %v3295
    %v3297 = vrot.slane %v3187, 1
    %v3298 = vsel %vm146, %v3292, %v3297
    %v3299 = vrot.slane %v3188, 1
    %v3300 = vsel %vm146, %v3295, %v3299
    %v3301 = vrot.slane %v3173, 1
    %v3302 = vrot.slane %v3096, 1
    %v3303 = vsel %vm146, %v3301, %v3302
    %v3304 = vrot.slane %v3174, 1
    %v3305 = vrot.slane %v3098, 1
    %v3306 = vsel %vm146, %v3304, %v3305
    %v3307 = vrot.slane %v3189, 1
    %v3308 = vsel %vm146, %v3302, %v3307
    %v3309 = vrot.slane %v3190, 1
    %v3310 = vsel %vm146, %v3305, %v3309
    %v3311 = vrot.slane %v3175, 1
    %v3312 = vrot.slane %v3102, 1
    %v3313 = vsel %vm146, %v3311, %v3312
    %v3314 = vrot.slane %v3176, 1
    %v3315 = vrot.slane %v3104, 1
    %v3316 = vsel %vm146, %v3314, %v3315
    %v3317 = vrot.slane %v3191, 1
    %v3318 = vsel %vm146, %v3312, %v3317
    %v3319 = vrot.slane %v3192, 1
    %v3320 = vsel %vm146, %v3315, %v3319
    %v3321 = vrot.slane %v3177, 1
    %v3322 = vrot.slane %v3108, 1
    %v3323 = vsel %vm146, %v3321, %v3322
    %v3324 = vrot.slane %v3178, 1
    %v3325 = vrot.slane %v3110, 1
    %v3326 = vsel %vm146, %v3324, %v3325
    %v3327 = vrot.slane %v3193, 1
    %v3328 = vsel %vm146, %v3322, %v3327
    %v3329 = vrot.slane %v3194, 1
    %v3330 = vsel %vm146, %v3325, %v3329
    %v3331 = vrot.slane %v3179, 1
    %v3332 = vrot.slane %v3114, 1
    %v3333 = vsel %vm146, %v3331, %v3332
    %v3334 = vrot.slane %v3180, 1
    %v3335 = vrot.slane %v3116, 1
    %v3336 = vsel %vm146, %v3334, %v3335
    %v3337 = vrot.slane %v3195, 1
    %v3338 = vsel %vm146, %v3332, %v3337
    %v3339 = vrot.slane %v3196, 1
    %v3340 = vsel %vm146, %v3335, %v3339
    %v3373 = vld [vmem:[#allocation8 + $0x100] sm:$0xff]
    %v3374 = vld [vmem:[#allocation8 + $0x108] sm:$0xff]
    %v3375 = vld [vmem:[#allocation8 + $0x110] sm:$0xff]
    %v3376 = vld [vmem:[#allocation8 + $0x118] sm:$0xff]
    %v3377 = vld [vmem:[#allocation8 + $0x120] sm:$0xff]
    %v3378 = vld [vmem:[#allocation8 + $0x128] sm:$0xff]
    %v3379 = vld [vmem:[#allocation8 + $0x130] sm:$0xff]
    %v3380 = vld [vmem:[#allocation8 + $0x138] sm:$0xff]
    %v3381 = vld [vmem:[#allocation8 + $0x140] sm:$0xff]
    %v3382 = vld [vmem:[#allocation8 + $0x148] sm:$0xff]
    %v3383 = vld [vmem:[#allocation8 + $0x150] sm:$0xff]
    %v3384 = vld [vmem:[#allocation8 + $0x158] sm:$0xff]
    %v3385 = vld [vmem:[#allocation8 + $0x160] sm:$0xff]
    %v3386 = vld [vmem:[#allocation8 + $0x168] sm:$0xff]
    %v3387 = vld [vmem:[#allocation8 + $0x170] sm:$0xff]
    %v3388 = vld [vmem:[#allocation8 + $0x178] sm:$0xff]
    %v3389 = vld [vmem:[#allocation8 + $0x180] sm:$0xff]
    %v3390 = vld [vmem:[#allocation8 + $0x188] sm:$0xff]
    %v3391 = vld [vmem:[#allocation8 + $0x190] sm:$0xff]
    %v3392 = vld [vmem:[#allocation8 + $0x198] sm:$0xff]
    %v3393 = vld [vmem:[#allocation8 + $0x1a0] sm:$0xff]
    %v3394 = vld [vmem:[#allocation8 + $0x1a8] sm:$0xff]
    %v3395 = vld [vmem:[#allocation8 + $0x1b0] sm:$0xff]
    %v3396 = vld [vmem:[#allocation8 + $0x1b8] sm:$0xff]
    %v3397 = vld [vmem:[#allocation8 + $0x1c0] sm:$0xff]
    %v3398 = vld [vmem:[#allocation8 + $0x1c8] sm:$0xff]
    %v3399 = vld [vmem:[#allocation8 + $0x1d0] sm:$0xff]
    %v3400 = vld [vmem:[#allocation8 + $0x1d8] sm:$0xff]
    %v3401 = vld [vmem:[#allocation8 + $0x1e0] sm:$0xff]
    %v3402 = vld [vmem:[#allocation8 + $0x1e8] sm:$0xff]
    %v3403 = vld [vmem:[#allocation8 + $0x1f0] sm:$0xff]
    %v3404 = vld [vmem:[#allocation8 + $0x1f8] sm:$0xff]
    %3405 = vmatprep.subr.mxu0 0.0
    %3406 = vmatpush1.msra.mxu0 %v3373
    %3407 = vmatprep.subr.mxu0 0.0
    %3408 = vmatpush1.msra.mxu0 %v3374
    %3409 = vmatprep.subr.mxu0 0.0
    %3410 = vmatpush1.msra.mxu0 %v3375
    %3411 = vmatprep.subr.mxu0 0.0
    %3412 = vmatpush1.msra.mxu0 %v3376
    %3413 = vmatprep.subr.mxu0 0.0
    %3414 = vmatpush1.msra.mxu0 %v3377
    %3415 = vmatprep.subr.mxu0 0.0
    %3416 = vmatpush1.msra.mxu0 %v3378
    %3417 = vmatprep.subr.mxu0 0.0
    %3418 = vmatpush1.msra.mxu0 %v3379
    %3419 = vmatprep.subr.mxu0 0.0
    %3420 = vmatpush1.msra.mxu0 %v3380
    %3421 = vmatprep.subr.mxu0 0.0
    %3422 = vmatpush1.msra.mxu0 %v3381
    %3423 = vmatprep.subr.mxu0 0.0
    %3424 = vmatpush1.msra.mxu0 %v3382
    %3425 = vmatprep.subr.mxu0 0.0
    %3426 = vmatpush1.msra.mxu0 %v3383
    %3427 = vmatprep.subr.mxu0 0.0
    %3428 = vmatpush1.msra.mxu0 %v3384
    %3429 = vmatprep.subr.mxu0 0.0
    %3430 = vmatpush1.msra.mxu0 %v3385
    %3431 = vmatprep.subr.mxu0 0.0
    %3432 = vmatpush1.msra.mxu0 %v3386
    %3433 = vmatprep.subr.mxu0 0.0
    %3434 = vmatpush1.msra.mxu0 %v3387
    %3435 = vmatprep.subr.mxu0 0.0
    %3436 = vmatpush1.msra.mxu0 %v3388
    %3437 = vmatprep.subr.mxu0 0.0
    %3438 = vmatpush1.msra.mxu0 %v3389
    %3439 = vmatprep.subr.mxu0 0.0
    %3440 = vmatpush1.msra.mxu0 %v3390
    %3441 = vmatprep.subr.mxu0 0.0
    %3442 = vmatpush1.msra.mxu0 %v3391
    %3443 = vmatprep.subr.mxu0 0.0
    %3444 = vmatpush1.msra.mxu0 %v3392
    %3445 = vmatprep.subr.mxu0 0.0
    %3446 = vmatpush1.msra.mxu0 %v3393
    %3447 = vmatprep.subr.mxu0 0.0
    %3448 = vmatpush1.msra.mxu0 %v3394
    %3449 = vmatprep.subr.mxu0 0.0
    %3450 = vmatpush1.msra.mxu0 %v3395
    %3451 = vmatprep.subr.mxu0 0.0
    %3452 = vmatpush1.msra.mxu0 %v3396
    %3453 = vmatprep.subr.mxu0 0.0
    %3454 = vmatpush1.msra.mxu0 %v3397
    %3455 = vmatprep.subr.mxu0 0.0
    %3456 = vmatpush1.msra.mxu0 %v3398
    %3457 = vmatprep.subr.mxu0 0.0
    %3458 = vmatpush1.msra.mxu0 %v3399
    %3459 = vmatprep.subr.mxu0 0.0
    %3460 = vmatpush1.msra.mxu0 %v3400
    %3461 = vmatprep.subr.mxu0 0.0
    %3462 = vmatpush1.msra.mxu0 %v3401
    %3463 = vmatprep.subr.mxu0 0.0
    %3464 = vmatpush1.msra.mxu0 %v3402
    %3465 = vmatprep.subr.mxu0 0.0
    %3466 = vmatpush1.msra.mxu0 %v3403
    %3467 = vmatprep.subr.mxu0 0.0
    %3468 = vmatpush1.msra.mxu0 %v3404
    %3469 = vmatprep.mubr.f32.mxu0 %v3266
    %3470 = vmatmul.mubr.f32.gmra.mrb[0].mxu0 %v3263
    %v3471 = vpop.f32.mrb[0].mxu0
    %v3472 = vadd.f32 0.0, %v3471
    %v3473 = vpop.f32.mrb[0].mxu0
    %3474 = vmatprep.mubr.f32.mxu0 %v3270
    %3475 = vmatmul.mubr.f32.gmra.mrb[0].mxu0 %v3268
    %v3476 = vpop.f32.mrb[0].mxu0
    %v3477 = vadd.f32 0.0, %v3476
    %v3478 = vpop.f32.mrb[0].mxu0
    %3479 = vmatprep.mubr.f32.mxu0 %v3276
    %3480 = vmatmul.mubr.f32.gmra.mrb[0].mxu0 %v3273
    %v3481 = vpop.f32.mrb[0].mxu0
    %v3482 = vadd.f32 0.0, %v3481
    %v3483 = vpop.f32.mrb[0].mxu0
    %3484 = vmatprep.mubr.f32.mxu0 %v3280
    %3485 = vmatmul.mubr.f32.gmra.mrb[0].mxu0 %v3278
    %v3486 = vpop.f32.mrb[0].mxu0
    %v3487 = vadd.f32 0.0, %v3486
    %v3488 = vpop.f32.mrb[0].mxu0
    %3489 = vmatprep.mubr.f32.mxu0 %v3286
    %3490 = vmatmul.mubr.f32.gmra.mrb[0].mxu0 %v3283
    %v3491 = vpop.f32.mrb[0].mxu0
    %v3492 = vadd.f32 0.0, %v3491
    %v3493 = vpop.f32.mrb[0].mxu0
    %3494 = vmatprep.mubr.f32.mxu0 %v3290
    %3495 = vmatmul.mubr.f32.gmra.mrb[0].mxu0 %v3288
    %v3496 = vpop.f32.mrb[0].mxu0
    %v3497 = vadd.f32 0.0, %v3496
    %v3498 = vpop.f32.mrb[0].mxu0
    %3499 = vmatprep.mubr.f32.mxu0 %v3296
    %3500 = vmatmul.mubr.f32.gmra.mrb[0].mxu0 %v3293
    %v3501 = vpop.f32.mrb[0].mxu0
    %v3502 = vadd.f32 0.0, %v3501
    %v3503 = vpop.f32.mrb[0].mxu0
    %3504 = vmatprep.mubr.f32.mxu0 %v3300
    %3505 = vmatmul.mubr.f32.gmra.mrb[0].mxu0 %v3298
    %v3506 = vpop.f32.mrb[0].mxu0
    %v3507 = vadd.f32 0.0, %v3506
    %v3508 = vpop.f32.mrb[0].mxu0
    %3509 = vmatprep.mubr.f32.mxu0 %v3306
    %3510 = vmatmul.mubr.f32.gmra.mrb[0].mxu0 %v3303
    %v3511 = vpop.f32.mrb[0].mxu0
    %v3512 = vadd.f32 0.0, %v3511
    %v3513 = vpop.f32.mrb[0].mxu0
    %3514 = vmatprep.mubr.f32.mxu0 %v3310
    %3515 = vmatmul.mubr.f32.gmra.mrb[0].mxu0 %v3308
    %v3516 = vpop.f32.mrb[0].mxu0
    %v3517 = vadd.f32 0.0, %v3516
    %v3518 = vpop.f32.mrb[0].mxu0
    %3519 = vmatprep.mubr.f32.mxu0 %v3316
    %3520 = vmatmul.mubr.f32.gmra.mrb[0].mxu0 %v3313
    %v3521 = vpop.f32.mrb[0].mxu0
    %v3522 = vadd.f32 0.0, %v3521
    %v3523 = vpop.f32.mrb[0].mxu0
    %3524 = vmatprep.mubr.f32.mxu0 %v3320
    %3525 = vmatmul.mubr.f32.gmra.mrb[0].mxu0 %v3318
    %v3526 = vpop.f32.mrb[0].mxu0
    %v3527 = vadd.f32 0.0, %v3526
    %v3528 = vpop.f32.mrb[0].mxu0
    %3529 = vmatprep.mubr.f32.mxu0 %v3326
    %3530 = vmatmul.mubr.f32.gmra.mrb[0].mxu0 %v3323
    %v3531 = vpop.f32.mrb[0].mxu0
    %v3532 = vadd.f32 0.0, %v3531
    %v3533 = vpop.f32.mrb[0].mxu0
    %3534 = vmatprep.mubr.f32.mxu0 %v3330
    %3535 = vmatmul.mubr.f32.gmra.mrb[0].mxu0 %v3328
    %v3536 = vpop.f32.mrb[0].mxu0
    %v3537 = vadd.f32 0.0, %v3536
    %v3538 = vpop.f32.mrb[0].mxu0
    %3539 = vmatprep.mubr.f32.mxu0 %v3336
    %3540 = vmatmul.mubr.f32.gmra.mrb[0].mxu0 %v3333
    %v3541 = vpop.f32.mrb[0].mxu0
    %v3542 = vadd.f32 0.0, %v3541
    %v3543 = vpop.f32.mrb[0].mxu0
    %3544 = vmatprep.mubr.f32.mxu0 %v3340
    %3545 = vmatmul.mubr.f32.gmra.mrb[0].mxu0 %v3338
    %v3546 = vpop.f32.mrb[0].mxu0
    %v3547 = vadd.f32 0.0, %v3546
    %v3548 = vpop.f32.mrb[0].mxu0
    %3549 = vdwg.mxu0
    %3550 = vmatprep.subr.mxu0 0.0
    %3551 = vmatpush1.msra.mxu0 %v3197
    %3552 = vmatprep.subr.mxu0 0.0
    %3553 = vmatpush1.msra.mxu0 %v3198
    %3554 = vmatprep.subr.mxu0 0.0
    %3555 = vmatpush1.msra.mxu0 %v3199
    %3556 = vmatprep.subr.mxu0 0.0
    %3557 = vmatpush1.msra.mxu0 %v3200
    %3558 = vmatprep.subr.mxu0 0.0
    %3559 = vmatpush1.msra.mxu0 %v3201
    %3560 = vmatprep.subr.mxu0 0.0
    %3561 = vmatpush1.msra.mxu0 %v3202
    %3562 = vmatprep.subr.mxu0 0.0
    %3563 = vmatpush1.msra.mxu0 %v3203
    %3564 = vmatprep.subr.mxu0 0.0
    %3565 = vmatpush1.msra.mxu0 %v3204
    %3566 = vmatprep.subr.mxu0 0.0
    %3567 = vmatpush1.msra.mxu0 %v3205
    %3568 = vmatprep.subr.mxu0 0.0
    %3569 = vmatpush1.msra.mxu0 %v3206
    %3570 = vmatprep.subr.mxu0 0.0
    %3571 = vmatpush1.msra.mxu0 %v3207
    %3572 = vmatprep.subr.mxu0 0.0
    %3573 = vmatpush1.msra.mxu0 %v3208
    %3574 = vmatprep.subr.mxu0 0.0
    %3575 = vmatpush1.msra.mxu0 %v3209
    %3576 = vmatprep.subr.mxu0 0.0
    %3577 = vmatpush1.msra.mxu0 %v3210
    %3578 = vmatprep.subr.mxu0 0.0
    %3579 = vmatpush1.msra.mxu0 %v3211
    %3580 = vmatprep.subr.mxu0 0.0
    %3581 = vmatpush1.msra.mxu0 %v3212
    %3582 = vmatprep.subr.mxu0 0.0
    %3583 = vmatpush1.msra.mxu0 %v3213
    %3584 = vmatprep.subr.mxu0 0.0
    %3585 = vmatpush1.msra.mxu0 %v3214
    %3586 = vmatprep.subr.mxu0 0.0
    %3587 = vmatpush1.msra.mxu0 %v3215
    %3588 = vmatprep.subr.mxu0 0.0
    %3589 = vmatpush1.msra.mxu0 %v3216
    %3590 = vmatprep.subr.mxu0 0.0
    %3591 = vmatpush1.msra.mxu0 %v3217
    %3592 = vmatprep.subr.mxu0 0.0
    %3593 = vmatpush1.msra.mxu0 %v3218
    %3594 = vmatprep.subr.mxu0 0.0
    %3595 = vmatpush1.msra.mxu0 %v3219
    %3596 = vmatprep.subr.mxu0 0.0
    %3597 = vmatpush1.msra.mxu0 %v3220
    %3598 = vmatprep.subr.mxu0 0.0
    %3599 = vmatpush1.msra.mxu0 %v3221
    %3600 = vmatprep.subr.mxu0 0.0
    %3601 = vmatpush1.msra.mxu0 %v3222
    %3602 = vmatprep.subr.mxu0 0.0
    %3603 = vmatpush1.msra.mxu0 %v3223
    %3604 = vmatprep.subr.mxu0 0.0
    %3605 = vmatpush1.msra.mxu0 %v3224
    %3606 = vmatprep.subr.mxu0 0.0
    %3607 = vmatpush1.msra.mxu0 %v3225
    %3608 = vmatprep.subr.mxu0 0.0
    %3609 = vmatpush1.msra.mxu0 %v3226
    %3610 = vmatprep.subr.mxu0 0.0
    %3611 = vmatpush1.msra.mxu0 %v3227
    %3612 = vmatprep.subr.mxu0 0.0
    %3613 = vmatpush1.msra.mxu0 %v3228
    %3614 = vmatprep.mubr.f32.mxu0 %v3166
    %3615 = vmatmul.mubr.f32.gmra.mrb[0].mxu0 %v3165
    %v3616 = vpop.f32.mrb[0].mxu0
    %v3617 = vadd.f32 %v3472, %v3616
    %v3618 = vpop.f32.mrb[0].mxu0
    %3619 = vmatprep.mubr.f32.mxu0 %v3074
    %3620 = vmatmul.mubr.f32.gmra.mrb[0].mxu0 %v3072
    %v3621 = vpop.f32.mrb[0].mxu0
    %v3622 = vadd.f32 %v3477, %v3621
    %v3623 = vpop.f32.mrb[0].mxu0
    %3624 = vmatprep.mubr.f32.mxu0 %v3168
    %3625 = vmatmul.mubr.f32.gmra.mrb[0].mxu0 %v3167
    %v3626 = vpop.f32.mrb[0].mxu0
    %v3627 = vadd.f32 %v3482, %v3626
    %v3628 = vpop.f32.mrb[0].mxu0
    %3629 = vmatprep.mubr.f32.mxu0 %v3080
    %3630 = vmatmul.mubr.f32.gmra.mrb[0].mxu0 %v3078
    %v3631 = vpop.f32.mrb[0].mxu0
    %v3632 = vadd.f32 %v3487, %v3631
    %v3633 = vpop.f32.mrb[0].mxu0
    %3634 = vmatprep.mubr.f32.mxu0 %v3170
    %3635 = vmatmul.mubr.f32.gmra.mrb[0].mxu0 %v3169
    %v3636 = vpop.f32.mrb[0].mxu0
    %v3637 = vadd.f32 %v3492, %v3636
    %v3638 = vpop.f32.mrb[0].mxu0
    %3639 = vmatprep.mubr.f32.mxu0 %v3086
    %3640 = vmatmul.mubr.f32.gmra.mrb[0].mxu0 %v3084
    %v3641 = vpop.f32.mrb[0].mxu0
    %v3642 = vadd.f32 %v3497, %v3641
    %v3643 = vpop.f32.mrb[0].mxu0
    %3644 = vmatprep.mubr.f32.mxu0 %v3172
    %3645 = vmatmul.mubr.f32.gmra.mrb[0].mxu0 %v3171
    %v3646 = vpop.f32.mrb[0].mxu0
    %v3647 = vadd.f32 %v3502, %v3646
    %v3648 = vpop.f32.mrb[0].mxu0
    %3649 = vmatprep.mubr.f32.mxu0 %v3092
    %3650 = vmatmul.mubr.f32.gmra.mrb[0].mxu0 %v3090
    %v3651 = vpop.f32.mrb[0].mxu0
    %v3652 = vadd.f32 %v3507, %v3651
    %v3653 = vpop.f32.mrb[0].mxu0
    %3654 = vmatprep.mubr.f32.mxu0 %v3174
    %3655 = vmatmul.mubr.f32.gmra.mrb[0].mxu0 %v3173
    %v3656 = vpop.f32.mrb[0].mxu0
    %v3657 = vadd.f32 %v3512, %v3656
    %v3658 = vpop.f32.mrb[0].mxu0
    %3659 = vmatprep.mubr.f32.mxu0 %v3098
    %3660 = vmatmul.mubr.f32.gmra.mrb[0].mxu0 %v3096
    %v3661 = vpop.f32.mrb[0].mxu0
    %v3662 = vadd.f32 %v3517, %v3661
    %v3663 = vpop.f32.mrb[0].mxu0
    %3664 = vmatprep.mubr.f32.mxu0 %v3176
    %3665 = vmatmul.mubr.f32.gmra.mrb[0].mxu0 %v3175
    %v3666 = vpop.f32.mrb[0].mxu0
    %v3667 = vadd.f32 %v3522, %v3666
    %v3668 = vpop.f32.mrb[0].mxu0
    %3669 = vmatprep.mubr.f32.mxu0 %v3104
    %3670 = vmatmul.mubr.f32.gmra.mrb[0].mxu0 %v3102
    %v3671 = vpop.f32.mrb[0].mxu0
    %v3672 = vadd.f32 %v3527, %v3671
    %v3673 = vpop.f32.mrb[0].mxu0
    %3674 = vmatprep.mubr.f32.mxu0 %v3178
    %3675 = vmatmul.mubr.f32.gmra.mrb[0].mxu0 %v3177
    %v3676 = vpop.f32.mrb[0].mxu0
    %v3677 = vadd.f32 %v3532, %v3676
    %v3678 = vpop.f32.mrb[0].mxu0
    %3679 = vmatprep.mubr.f32.mxu0 %v3110
    %3680 = vmatmul.mubr.f32.gmra.mrb[0].mxu0 %v3108
    %v3681 = vpop.f32.mrb[0].mxu0
    %v3682 = vadd.f32 %v3537, %v3681
    %v3683 = vpop.f32.mrb[0].mxu0
    %3684 = vmatprep.mubr.f32.mxu0 %v3180
    %3685 = vmatmul.mubr.f32.gmra.mrb[0].mxu0 %v3179
    %v3686 = vpop.f32.mrb[0].mxu0
    %v3687 = vadd.f32 %v3542, %v3686
    %v3688 = vpop.f32.mrb[0].mxu0
    %3689 = vmatprep.mubr.f32.mxu0 %v3116
    %3690 = vmatmul.mubr.f32.gmra.mrb[0].mxu0 %v3114
    %v3691 = vpop.f32.mrb[0].mxu0
    %v3692 = vadd.f32 %v3547, %v3691
    %v3693 = vpop.f32.mrb[0].mxu0
    %3694 = vdwg.mxu0
    %v3695 = vrot.slane %v3165, 2
    %v3696 = vrot.slane %v3072, 2
    %v3697 = vsel %vm509, %v3695, %v3696
    %v3698 = vrot.slane %v3166, 2
    %v3699 = vrot.slane %v3074, 2
    %v3700 = vsel %vm509, %v3698, %v3699
    %v3701 = vrot.slane %v3181, 2
    %v3702 = vsel %vm509, %v3696, %v3701
    %v3703 = vrot.slane %v3182, 2
    %v3704 = vsel %vm509, %v3699, %v3703
    %v3705 = vrot.slane %v3167, 2
    %v3706 = vrot.slane %v3078, 2
    %v3707 = vsel %vm509, %v3705, %v3706
    %v3708 = vrot.slane %v3168, 2
    %v3709 = vrot.slane %v3080, 2
    %v3710 = vsel %vm509, %v3708, %v3709
    %v3711 = vrot.slane %v3183, 2
    %v3712 = vsel %vm509, %v3706, %v3711
    %v3713 = vrot.slane %v3184, 2
    %v3714 = vsel %vm509, %v3709, %v3713
    %v3715 = vrot.slane %v3169, 2
    %v3716 = vrot.slane %v3084, 2
    %v3717 = vsel %vm509, %v3715, %v3716
    %v3718 = vrot.slane %v3170, 2
    %v3719 = vrot.slane %v3086, 2
    %v3720 = vsel %vm509, %v3718, %v3719
    %v3721 = vrot.slane %v3185, 2
    %v3722 = vsel %vm509, %v3716, %v3721
    %v3723 = vrot.slane %v3186, 2
    %v3724 = vsel %vm509, %v3719, %v3723
    %v3725 = vrot.slane %v3171, 2
    %v3726 = vrot.slane %v3090, 2
    %v3727 = vsel %vm509, %v3725, %v3726
    %v3728 = vrot.slane %v3172, 2
    %v3729 = vrot.slane %v3092, 2
    %v3730 = vsel %vm509, %v3728, %v3729
    %v3731 = vrot.slane %v3187, 2
    %v3732 = vsel %vm509, %v3726, %v3731
    %v3733 = vrot.slane %v3188, 2
    %v3734 = vsel %vm509, %v3729, %v3733
    %v3735 = vrot.slane %v3173, 2
    %v3736 = vrot.slane %v3096, 2
    %v3737 = vsel %vm509, %v3735, %v3736
    %v3738 = vrot.slane %v3174, 2
    %v3739 = vrot.slane %v3098, 2
    %v3740 = vsel %vm509, %v3738, %v3739
    %v3741 = vrot.slane %v3189, 2
    %v3742 = vsel %vm509, %v3736, %v3741
    %v3743 = vrot.slane %v3190, 2
    %v3744 = vsel %vm509, %v3739, %v3743
    %v3745 = vrot.slane %v3175, 2
    %v3746 = vrot.slane %v3102, 2
    %v3747 = vsel %vm509, %v3745, %v3746
    %v3748 = vrot.slane %v3176, 2
    %v3749 = vrot.slane %v3104, 2
    %v3750 = vsel %vm509, %v3748, %v3749
    %v3751 = vrot.slane %v3191, 2
    %v3752 = vsel %vm509, %v3746, %v3751
    %v3753 = vrot.slane %v3192, 2
    %v3754 = vsel %vm509, %v3749, %v3753
    %v3755 = vrot.slane %v3177, 2
    %v3756 = vrot.slane %v3108, 2
    %v3757 = vsel %vm509, %v3755, %v3756
    %v3758 = vrot.slane %v3178, 2
    %v3759 = vrot.slane %v3110, 2
    %v3760 = vsel %vm509, %v3758, %v3759
    %v3761 = vrot.slane %v3193, 2
    %v3762 = vsel %vm509, %v3756, %v3761
    %v3763 = vrot.slane %v3194, 2
    %v3764 = vsel %vm509, %v3759, %v3763
    %v3765 = vrot.slane %v3179, 2
    %v3766 = vrot.slane %v3114, 2
    %v3767 = vsel %vm509, %v3765, %v3766
    %v3768 = vrot.slane %v3180, 2
    %v3769 = vrot.slane %v3116, 2
    %v3770 = vsel %vm509, %v3768, %v3769
    %v3771 = vrot.slane %v3195, 2
    %v3772 = vsel %vm509, %v3766, %v3771
    %v3773 = vrot.slane %v3196, 2
    %v3774 = vsel %vm509, %v3769, %v3773
    %v3807 = vld [vmem:[#allocation8 + $0x200] sm:$0xff]
    %v3808 = vld [vmem:[#allocation8 + $0x208] sm:$0xff]
    %v3809 = vld [vmem:[#allocation8 + $0x210] sm:$0xff]
    %v3810 = vld [vmem:[#allocation8 + $0x218] sm:$0xff]
    %v3811 = vld [vmem:[#allocation8 + $0x220] sm:$0xff]
    %v3812 = vld [vmem:[#allocation8 + $0x228] sm:$0xff]
    %v3813 = vld [vmem:[#allocation8 + $0x230] sm:$0xff]
    %v3814 = vld [vmem:[#allocation8 + $0x238] sm:$0xff]
    %v3815 = vld [vmem:[#allocation8 + $0x240] sm:$0xff]
    %v3816 = vld [vmem:[#allocation8 + $0x248] sm:$0xff]
    %v3817 = vld [vmem:[#allocation8 + $0x250] sm:$0xff]
    %v3818 = vld [vmem:[#allocation8 + $0x258] sm:$0xff]
    %v3819 = vld [vmem:[#allocation8 + $0x260] sm:$0xff]
    %v3820 = vld [vmem:[#allocation8 + $0x268] sm:$0xff]
    %v3821 = vld [vmem:[#allocation8 + $0x270] sm:$0xff]
    %v3822 = vld [vmem:[#allocation8 + $0x278] sm:$0xff]
    %v3823 = vld [vmem:[#allocation8 + $0x280] sm:$0xff]
    %v3824 = vld [vmem:[#allocation8 + $0x288] sm:$0xff]
    %v3825 = vld [vmem:[#allocation8 + $0x290] sm:$0xff]
    %v3826 = vld [vmem:[#allocation8 + $0x298] sm:$0xff]
    %v3827 = vld [vmem:[#allocation8 + $0x2a0] sm:$0xff]
    %v3828 = vld [vmem:[#allocation8 + $0x2a8] sm:$0xff]
    %v3829 = vld [vmem:[#allocation8 + $0x2b0] sm:$0xff]
    %v3830 = vld [vmem:[#allocation8 + $0x2b8] sm:$0xff]
    %v3831 = vld [vmem:[#allocation8 + $0x2c0] sm:$0xff]
    %v3832 = vld [vmem:[#allocation8 + $0x2c8] sm:$0xff]
    %v3833 = vld [vmem:[#allocation8 + $0x2d0] sm:$0xff]
    %v3834 = vld [vmem:[#allocation8 + $0x2d8] sm:$0xff]
    %v3835 = vld [vmem:[#allocation8 + $0x2e0] sm:$0xff]
    %v3836 = vld [vmem:[#allocation8 + $0x2e8] sm:$0xff]
    %v3837 = vld [vmem:[#allocation8 + $0x2f0] sm:$0xff]
    %v3838 = vld [vmem:[#allocation8 + $0x2f8] sm:$0xff]
    %3839 = vmatprep.subr.mxu0 0.0
    %3840 = vmatpush1.msra.mxu0 %v3807
    %3841 = vmatprep.subr.mxu0 0.0
    %3842 = vmatpush1.msra.mxu0 %v3808
    %3843 = vmatprep.subr.mxu0 0.0
    %3844 = vmatpush1.msra.mxu0 %v3809
    %3845 = vmatprep.subr.mxu0 0.0
    %3846 = vmatpush1.msra.mxu0 %v3810
    %3847 = vmatprep.subr.mxu0 0.0
    %3848 = vmatpush1.msra.mxu0 %v3811
    %3849 = vmatprep.subr.mxu0 0.0
    %3850 = vmatpush1.msra.mxu0 %v3812
    %3851 = vmatprep.subr.mxu0 0.0
    %3852 = vmatpush1.msra.mxu0 %v3813
    %3853 = vmatprep.subr.mxu0 0.0
    %3854 = vmatpush1.msra.mxu0 %v3814
    %3855 = vmatprep.subr.mxu0 0.0
    %3856 = vmatpush1.msra.mxu0 %v3815
    %3857 = vmatprep.subr.mxu0 0.0
    %3858 = vmatpush1.msra.mxu0 %v3816
    %3859 = vmatprep.subr.mxu0 0.0
    %3860 = vmatpush1.msra.mxu0 %v3817
    %3861 = vmatprep.subr.mxu0 0.0
    %3862 = vmatpush1.msra.mxu0 %v3818
    %3863 = vmatprep.subr.mxu0 0.0
    %3864 = vmatpush1.msra.mxu0 %v3819
    %3865 = vmatprep.subr.mxu0 0.0
    %3866 = vmatpush1.msra.mxu0 %v3820
    %3867 = vmatprep.subr.mxu0 0.0
    %3868 = vmatpush1.msra.mxu0 %v3821
    %3869 = vmatprep.subr.mxu0 0.0
    %3870 = vmatpush1.msra.mxu0 %v3822
    %3871 = vmatprep.subr.mxu0 0.0
    %3872 = vmatpush1.msra.mxu0 %v3823
    %3873 = vmatprep.subr.mxu0 0.0
    %3874 = vmatpush1.msra.mxu0 %v3824
    %3875 = vmatprep.subr.mxu0 0.0
    %3876 = vmatpush1.msra.mxu0 %v3825
    %3877 = vmatprep.subr.mxu0 0.0
    %3878 = vmatpush1.msra.mxu0 %v3826
    %3879 = vmatprep.subr.mxu0 0.0
    %3880 = vmatpush1.msra.mxu0 %v3827
    %3881 = vmatprep.subr.mxu0 0.0
    %3882 = vmatpush1.msra.mxu0 %v3828
    %3883 = vmatprep.subr.mxu0 0.0
    %3884 = vmatpush1.msra.mxu0 %v3829
    %3885 = vmatprep.subr.mxu0 0.0
    %3886 = vmatpush1.msra.mxu0 %v3830
    %3887 = vmatprep.subr.mxu0 0.0
    %3888 = vmatpush1.msra.mxu0 %v3831
    %3889 = vmatprep.subr.mxu0 0.0
    %3890 = vmatpush1.msra.mxu0 %v3832
    %3891 = vmatprep.subr.mxu0 0.0
    %3892 = vmatpush1.msra.mxu0 %v3833
    %3893 = vmatprep.subr.mxu0 0.0
    %3894 = vmatpush1.msra.mxu0 %v3834
    %3895 = vmatprep.subr.mxu0 0.0
    %3896 = vmatpush1.msra.mxu0 %v3835
    %3897 = vmatprep.subr.mxu0 0.0
    %3898 = vmatpush1.msra.mxu0 %v3836
    %3899 = vmatprep.subr.mxu0 0.0
    %3900 = vmatpush1.msra.mxu0 %v3837
    %3901 = vmatprep.subr.mxu0 0.0
    %3902 = vmatpush1.msra.mxu0 %v3838
    %3903 = vmatprep.mubr.f32.mxu0 %v3700
    %3904 = vmatmul.mubr.f32.gmra.mrb[0].mxu0 %v3697
    %v3905 = vpop.f32.mrb[0].mxu0
    %v3906 = vadd.f32 0.0, %v3905
    %v3907 = vpop.f32.mrb[0].mxu0
    %3908 = vmatprep.mubr.f32.mxu0 %v3704
    %3909 = vmatmul.mubr.f32.gmra.mrb[0].mxu0 %v3702
    %v3910 = vpop.f32.mrb[0].mxu0
    %v3911 = vadd.f32 0.0, %v3910
    %v3912 = vpop.f32.mrb[0].mxu0
    %3913 = vmatprep.mubr.f32.mxu0 %v3710
    %3914 = vmatmul.mubr.f32.gmra.mrb[0].mxu0 %v3707
    %v3915 = vpop.f32.mrb[0].mxu0
    %v3916 = vadd.f32 0.0, %v3915
    %v3917 = vpop.f32.mrb[0].mxu0
    %3918 = vmatprep.mubr.f32.mxu0 %v3714
    %3919 = vmatmul.mubr.f32.gmra.mrb[0].mxu0 %v3712
    %v3920 = vpop.f32.mrb[0].mxu0
    %v3921 = vadd.f32 0.0, %v3920
    %v3922 = vpop.f32.mrb[0].mxu0
    %3923 = vmatprep.mubr.f32.mxu0 %v3720
    %3924 = vmatmul.mubr.f32.gmra.mrb[0].mxu0 %v3717
    %v3925 = vpop.f32.mrb[0].mxu0
    %v3926 = vadd.f32 0.0, %v3925
    %v3927 = vpop.f32.mrb[0].mxu0
    %3928 = vmatprep.mubr.f32.mxu0 %v3724
    %3929 = vmatmul.mubr.f32.gmra.mrb[0].mxu0 %v3722
    %v3930 = vpop.f32.mrb[0].mxu0
    %v3931 = vadd.f32 0.0, %v3930
    %v3932 = vpop.f32.mrb[0].mxu0
    %3933 = vmatprep.mubr.f32.mxu0 %v3730
    %3934 = vmatmul.mubr.f32.gmra.mrb[0].mxu0 %v3727
    %v3935 = vpop.f32.mrb[0].mxu0
    %v3936 = vadd.f32 0.0, %v3935
    %v3937 = vpop.f32.mrb[0].mxu0
    %3938 = vmatprep.mubr.f32.mxu0 %v3734
    %3939 = vmatmul.mubr.f32.gmra.mrb[0].mxu0 %v3732
    %v3940 = vpop.f32.mrb[0].mxu0
    %v3941 = vadd.f32 0.0, %v3940
    %v3942 = vpop.f32.mrb[0].mxu0
    %3943 = vmatprep.mubr.f32.mxu0 %v3740
    %3944 = vmatmul.mubr.f32.gmra.mrb[0].mxu0 %v3737
    %v3945 = vpop.f32.mrb[0].mxu0
    %v3946 = vadd.f32 0.0, %v3945
    %v3947 = vpop.f32.mrb[0].mxu0
    %3948 = vmatprep.mubr.f32.mxu0 %v3744
    %3949 = vmatmul.mubr.f32.gmra.mrb[0].mxu0 %v3742
    %v3950 = vpop.f32.mrb[0].mxu0
    %v3951 = vadd.f32 0.0, %v3950
    %v3952 = vpop.f32.mrb[0].mxu0
    %3953 = vmatprep.mubr.f32.mxu0 %v3750
    %3954 = vmatmul.mubr.f32.gmra.mrb[0].mxu0 %v3747
    %v3955 = vpop.f32.mrb[0].mxu0
    %v3956 = vadd.f32 0.0, %v3955
    %v3957 = vpop.f32.mrb[0].mxu0
    %3958 = vmatprep.mubr.f32.mxu0 %v3754
    %3959 = vmatmul.mubr.f32.gmra.mrb[0].mxu0 %v3752
    %v3960 = vpop.f32.mrb[0].mxu0
    %v3961 = vadd.f32 0.0, %v3960
    %v3962 = vpop.f32.mrb[0].mxu0
    %3963 = vmatprep.mubr.f32.mxu0 %v3760
    %3964 = vmatmul.mubr.f32.gmra.mrb[0].mxu0 %v3757
    %v3965 = vpop.f32.mrb[0].mxu0
    %v3966 = vadd.f32 0.0, %v3965
    %v3967 = vpop.f32.mrb[0].mxu0
    %3968 = vmatprep.mubr.f32.mxu0 %v3764
    %3969 = vmatmul.mubr.f32.gmra.mrb[0].mxu0 %v3762
    %v3970 = vpop.f32.mrb[0].mxu0
    %v3971 = vadd.f32 0.0, %v3970
    %v3972 = vpop.f32.mrb[0].mxu0
    %3973 = vmatprep.mubr.f32.mxu0 %v3770
    %3974 = vmatmul.mubr.f32.gmra.mrb[0].mxu0 %v3767
    %v3975 = vpop.f32.mrb[0].mxu0
    %v3976 = vadd.f32 0.0, %v3975
    %v3977 = vpop.f32.mrb[0].mxu0
    %3978 = vmatprep.mubr.f32.mxu0 %v3774
    %3979 = vmatmul.mubr.f32.gmra.mrb[0].mxu0 %v3772
    %v3980 = vpop.f32.mrb[0].mxu0
    %v3981 = vadd.f32 0.0, %v3980
    %v3982 = vpop.f32.mrb[0].mxu0
    %3983 = vdwg.mxu0
    %v3984 = vadd.f32 %v3617, %v3906
    %v3985 = vadd.f32 %v3622, %v3911
    %v3986 = vadd.f32 %v3627, %v3916
    %v3987 = vadd.f32 %v3632, %v3921
    %v3988 = vadd.f32 %v3637, %v3926
    %v3989 = vadd.f32 %v3642, %v3931
    %v3990 = vadd.f32 %v3647, %v3936
    %v3991 = vadd.f32 %v3652, %v3941
    %v3992 = vadd.f32 %v3657, %v3946
    %v3993 = vadd.f32 %v3662, %v3951
    %v3994 = vadd.f32 %v3667, %v3956
    %v3995 = vadd.f32 %v3672, %v3961
    %v3996 = vadd.f32 %v3677, %v3966
    %v3997 = vadd.f32 %v3682, %v3971
    %v3998 = vadd.f32 %v3687, %v3976
    %v3999 = vadd.f32 %v3692, %v3981
    %v4000 = vld [vmem:[%s5 + $0x5] sm:$0x1]
    %v4002 = vlaneseq
    %v4003 = vshrl.u32 %v4002, 7
    %v4004 = vsub.s32 0, %v4003
    %v4005 = vrot.slane %v4000, %v4004
    %v4007 = vadd.f32 %v3984, %v4005
    %v4008 = vadd.f32 %v3985, %v4005
    %v4009 = vadd.f32 %v3986, %v4005
    %v4010 = vadd.f32 %v3987, %v4005
    %v4011 = vadd.f32 %v3988, %v4005
    %v4012 = vadd.f32 %v3989, %v4005
    %v4013 = vadd.f32 %v3990, %v4005
    %v4014 = vadd.f32 %v3991, %v4005
    %v4015 = vadd.f32 %v3992, %v4005
    %v4016 = vadd.f32 %v3993, %v4005
    %v4017 = vadd.f32 %v3994, %v4005
    %v4018 = vadd.f32 %v3995, %v4005
    %v4019 = vadd.f32 %v3996, %v4005
    %v4020 = vadd.f32 %v3997, %v4005
    %v4021 = vadd.f32 %v3998, %v4005
    %v4022 = vadd.f32 %v3999, %v4005
    %vm4023 = vcmp.gt.f32.partialorder %v4007, 0.0
    %vm4024 = vcmp.gt.f32.partialorder %v4008, 0.0
    %vm4025 = vcmp.gt.f32.partialorder %v4009, 0.0
    %vm4026 = vcmp.gt.f32.partialorder %v4010, 0.0
    %vm4027 = vcmp.gt.f32.partialorder %v4011, 0.0
    %vm4028 = vcmp.gt.f32.partialorder %v4012, 0.0
    %vm4029 = vcmp.gt.f32.partialorder %v4013, 0.0
    %vm4030 = vcmp.gt.f32.partialorder %v4014, 0.0
    %vm4031 = vcmp.gt.f32.partialorder %v4015, 0.0
    %vm4032 = vcmp.gt.f32.partialorder %v4016, 0.0
    %vm4033 = vcmp.gt.f32.partialorder %v4017, 0.0
    %vm4034 = vcmp.gt.f32.partialorder %v4018, 0.0
    %vm4035 = vcmp.gt.f32.partialorder %v4019, 0.0
    %vm4036 = vcmp.gt.f32.partialorder %v4020, 0.0
    %vm4037 = vcmp.gt.f32.partialorder %v4021, 0.0
    %vm4038 = vcmp.gt.f32.partialorder %v4022, 0.0
    %v4039 = vmul.f32 %v4007, 0.01
    %v4040 = vmul.f32 %v4008, 0.01
    %v4041 = vmul.f32 %v4009, 0.01
    %v4042 = vmul.f32 %v4010, 0.01
    %v4043 = vmul.f32 %v4011, 0.01
    %v4044 = vmul.f32 %v4012, 0.01
    %v4045 = vmul.f32 %v4013, 0.01
    %v4046 = vmul.f32 %v4014, 0.01
    %v4047 = vmul.f32 %v4015, 0.01
    %v4048 = vmul.f32 %v4016, 0.01
    %v4049 = vmul.f32 %v4017, 0.01
    %v4050 = vmul.f32 %v4018, 0.01
    %v4051 = vmul.f32 %v4019, 0.01
    %v4052 = vmul.f32 %v4020, 0.01
    %v4053 = vmul.f32 %v4021, 0.01
    %v4054 = vmul.f32 %v4022, 0.01
    %v4055 = vsel %vm4023, %v4007, %v4039
    %v4056 = vsel %vm4024, %v4008, %v4040
    %v4057 = vsel %vm4025, %v4009, %v4041
    %v4058 = vsel %vm4026, %v4010, %v4042
    %v4059 = vsel %vm4027, %v4011, %v4043
    %v4060 = vsel %vm4028, %v4012, %v4044
    %v4061 = vsel %vm4029, %v4013, %v4045
    %v4062 = vsel %vm4030, %v4014, %v4046
    %v4063 = vsel %vm4031, %v4015, %v4047
    %v4064 = vsel %vm4032, %v4016, %v4048
    %v4065 = vsel %vm4033, %v4017, %v4049
    %v4066 = vsel %vm4034, %v4018, %v4050
    %v4067 = vsel %vm4035, %v4019, %v4051
    %v4068 = vsel %vm4036, %v4020, %v4052
    %v4069 = vsel %vm4037, %v4021, %v4053
    %v4070 = vsel %vm4038, %v4022, %v4054
    %v4071 = vld [vmem:[%s6] sm:$0xff]
    %v4072 = vld [vmem:[%s6 + $0x8] sm:$0xff]
    %v4073 = vld [vmem:[%s6 + $0x10] sm:$0xff]
    %v4074 = vld [vmem:[%s6 + $0x18] sm:$0xff]
    %v4075 = vld [vmem:[%s6 + $0x20] sm:$0xff]
    %v4076 = vld [vmem:[%s6 + $0x28] sm:$0xff]
    %v4077 = vld [vmem:[%s6 + $0x30] sm:$0xff]
    %v4078 = vld [vmem:[%s6 + $0x38] sm:$0xff]
    %v4079 = vld [vmem:[%s6 + $0x40] sm:$0xff]
    %v4080 = vld [vmem:[%s6 + $0x48] sm:$0xff]
    %v4081 = vld [vmem:[%s6 + $0x50] sm:$0xff]
    %v4082 = vld [vmem:[%s6 + $0x58] sm:$0xff]
    %v4083 = vld [vmem:[%s6 + $0x60] sm:$0xff]
    %v4084 = vld [vmem:[%s6 + $0x68] sm:$0xff]
    %v4085 = vld [vmem:[%s6 + $0x70] sm:$0xff]
    %v4086 = vld [vmem:[%s6 + $0x78] sm:$0xff]
    %v4087 = vadd.f32 %v4055, %v4071
    %v4088 = vadd.f32 %v4056, %v4072
    %v4089 = vadd.f32 %v4057, %v4073
    %v4090 = vadd.f32 %v4058, %v4074
    %v4091 = vadd.f32 %v4059, %v4075
    %v4092 = vadd.f32 %v4060, %v4076
    %v4093 = vadd.f32 %v4061, %v4077
    %v4094 = vadd.f32 %v4062, %v4078
    %v4095 = vadd.f32 %v4063, %v4079
    %v4096 = vadd.f32 %v4064, %v4080
    %v4097 = vadd.f32 %v4065, %v4081
    %v4098 = vadd.f32 %v4066, %v4082
    %v4099 = vadd.f32 %v4067, %v4083
    %v4100 = vadd.f32 %v4068, %v4084
    %v4101 = vadd.f32 %v4069, %v4085
    %v4102 = vadd.f32 %v4070, %v4086
    %4103 = vst [vmem:[#allocation10] sm:$0xff] %v4087
    %4104 = vst [vmem:[#allocation10 + $0x8] sm:$0xff] %v4088
    %4105 = vst [vmem:[#allocation10 + $0x10] sm:$0xff] %v4089
    %4106 = vst [vmem:[#allocation10 + $0x18] sm:$0xff] %v4090
    %4107 = vst [vmem:[#allocation10 + $0x20] sm:$0xff] %v4091
    %4108 = vst [vmem:[#allocation10 + $0x28] sm:$0xff] %v4092
    %4109 = vst [vmem:[#allocation10 + $0x30] sm:$0xff] %v4093
    %4110 = vst [vmem:[#allocation10 + $0x38] sm:$0xff] %v4094
    %4111 = vst [vmem:[#allocation10 + $0x40] sm:$0xff] %v4095
    %4112 = vst [vmem:[#allocation10 + $0x48] sm:$0xff] %v4096
    %4113 = vst [vmem:[#allocation10 + $0x50] sm:$0xff] %v4097
    %4114 = vst [vmem:[#allocation10 + $0x58] sm:$0xff] %v4098
    %4115 = vst [vmem:[#allocation10 + $0x60] sm:$0xff] %v4099
    %4116 = vst [vmem:[#allocation10 + $0x68] sm:$0xff] %v4100
    %4117 = vst [vmem:[#allocation10 + $0x70] sm:$0xff] %v4101
    %4118 = vst [vmem:[#allocation10 + $0x78] sm:$0xff] %v4102
    // Predicated region
    $region46: #{tpu_custom_call.1} parent=1 // pred_check
      _
    $region47: #{tpu_custom_call.1} parent=1 // pred_check_branch
      %4120 = sbr.rel (0) target = $region49
    $region48: #{tpu_custom_call.1} parent=1 // pred_region
      %s4122 = ssub.s32 2048, 2048
      %4123 = vsyncadd [#allocation4], %s4122
      %s4124 = sshll.u32 [#allocation10], 4
      %s4125 = int_to_ptr.vmem [resolvable:$true] %s4124
      %4130 = dma.vmem_to_hbm [thread:$0]  %s4125, 2048, %s7, [#allocation4], 128, 128, 8
    $region49: #{tpu_custom_call.1} parent=1 // pred_fallthru
      _
    // Predicated region
    $region50: #{tpu_custom_call.1} parent=1 // pred_check
      _
    $region51: #{tpu_custom_call.1} parent=1 // pred_check_branch
      %4132 = sbr.rel (0) target = $region53
    $region52: #{tpu_custom_call.1} parent=1 // pred_region
      %4133 = dma.done [#allocation4], 2048
    $region53: #{tpu_custom_call.1} parent=1 // pred_fallthru
      _
    %4134 = vsyncpa [#allocation3], 1
    %4135 = vsyncpa [#allocation6], 1
    %4136 = vsyncpa [#allocation9], 1
    %4137 = vsyncpa [#allocation4], 1

</llo_original>
